<compile_context>
chip_gen: v7x
topology: tpu7x:2x2x1
jax: 0.10.0
libtpu: 0.0.40
codegen_flags: <defaults>
</compile_context>

<pallas_src>
import functools

import jax
import jax.numpy as jnp
from jax.experimental import pallas as pl
from jax.experimental.pallas import tpu as pltpu

LANE = 128  # all GEMM N dims / activation slabs are 128 lanes (lane-dense stores)


def _rup(n, m=LANE):
    return ((n + m - 1) // m) * m


def _layout(input_dim):
    """Static K-packed GEMM layout shared by weight prep and the kernel."""
    ks = {
        "c1": _rup(9 * input_dim),   # conv1: 3x3 taps x input_dim channels
        "c2": _rup(16 * 32),         # conv2: 4x4 x 32  = 512
        "f1": LANE,                  # fc1  : latent padded to 128
        "t1": _rup(16 * 64),         # ct1  : 4x4 x 64  = 1024
        "t2": _rup(9 * 64),          # ct2  : 3x3 x 64  (576 -> 640)
        "t3": _rup(9 * 32),          # ct3  : 3x3 x 32  (288 -> 384)
    }
    offs, o = {}, 0
    for name in ("c1", "c2", "f1", "t1", "t2", "t3"):
        offs[name] = o
        o += ks[name]
    return {"K": ks, "off": offs, "total": o,
            "K_real": {"t2": 9 * 64, "t3": 9 * 32}}


# ----------------------------------------------------------------------------
# In-kernel helpers (all loops unrolled at trace time; shapes are tiny/static)
# ----------------------------------------------------------------------------

def _scatter(pad_ref, src, *, B, H, W, Hp, Wp, pad):
    """Write src ((B*H*W, LANE) value, rows (b,y,x)) into the zero-padded buffer."""
    for b in range(B):
        for y in range(H):
            s = b * H * W + y * W
            d = b * Hp * Wp + (y + pad) * Wp + pad
            pad_ref[d:d + W, :] = src[s:s + W, :]


def _scatter_dilated2(pad_ref, src, *, B, H, W, Hp, Wp, pad):
    """Stride-2 zero-dilated scatter; builds each dilated row block in registers
    and issues one (2W-1)-row store per (b, y) instead of W single-row stores."""
    zrow = jnp.zeros((1, src.shape[1]), src.dtype)
    for b in range(B):
        for y in range(H):
            s = b * H * W + y * W
            pieces = []
            for x in range(W):
                if x:
                    pieces.append(zrow)
                pieces.append(src[s + x:s + x + 1, :])
            d = b * Hp * Wp + (2 * y + pad) * Wp + pad
            pad_ref[d:d + 2 * W - 1, :] = jnp.concatenate(pieces, axis=0)


def _gather(patch_ref, pad_ref, *, B, OH, OW, kH, kW, Hp, Wp, C):
    """K-packed in-kernel im2col: tap (i,j)'s column block starts at (i*kW+j)*C
    (real channels only), matching the packed GEMM weight layout."""
    for b in range(B):
        for oy in range(OH):
            d = b * OH * OW + oy * OW
            for i in range(kH):
                for j in range(kW):
                    s = b * Hp * Wp + (oy + i) * Wp + j
                    c = (i * kW + j) * C
                    patch_ref[d:d + OW, c:c + C] = pad_ref[s:s + OW, 0:C]


def _gemm(lhs, w_ref, off, k, b_ref, brow, *, relu):
    """bf16 x bf16 -> f32 GEMM against a row slice of the packed weight slab."""
    y = jnp.dot(lhs.astype(jnp.bfloat16), w_ref[off:off + k, :],
                preferred_element_type=jnp.float32) + b_ref[brow:brow + 1, :]
    return jnp.maximum(y, 0.0) if relu else y


# ----------------------------------------------------------------------------
# The fused VAE kernel
# ----------------------------------------------------------------------------

def _vae_kernel(act_ref, w_ref, wmv_ref, b_ref, out_ref,
                pad_s, patch_c2, pad_l, patch_t1, patch_t2, patch_t3,
                *, B, L):
    K, off = L["K"], L["off"]

    # ---------------- Encoder ----------------
    # conv1 (input im2col done as boundary plumbing): (B*4, K_c1) @ (K_c1, 128)
    e1 = _gemm(act_ref[0:4 * B, :], w_ref, off["c1"], K["c1"], b_ref, 0, relu=True)

    # conv2: Conv2d(32, 64, k=4, p=1): 2x2 -> 1x1
    pad_s[...] = jnp.zeros_like(pad_s)
    _scatter(pad_s, e1, B=B, H=2, W=2, Hp=4, Wp=4, pad=1)
    _gather(patch_c2, pad_s, B=B, OH=1, OW=1, kH=4, kW=4, Hp=4, Wp=4, C=32)
    e2 = _gemm(patch_c2[...], w_ref, off["c2"], K["c2"], b_ref, 1, relu=True)  # == Flatten

    # fc_mean | fc_var fused as ONE N=256 GEMM (256-wide MXU on v6e/v7x)
    mv = jnp.dot(e2.astype(jnp.bfloat16), wmv_ref[...],
                 preferred_element_type=jnp.float32)
    mean = mv[:, 0:LANE] + b_ref[2:3, :]
    logvar = mv[:, LANE:2 * LANE] + b_ref[3:4, :]
    out_ref[0:B, :] = mean
    out_ref[B:2 * B, :] = logvar

    # ---------- Reparameterize (fused; exp goes to the EUP slot) ----------
    # Padded lanes stay exactly 0: weight cols / bias / eps pads are 0, and fc1's
    # weight rows >= latent are 0, so lane padding cannot leak into the decoder.
    eps = act_ref[4 * B:5 * B, :]
    z = mean + eps * jnp.exp(0.5 * logvar)

    # ---------------- Decoder ----------------
    hdn = _gemm(z, w_ref, off["f1"], K["f1"], b_ref, 4, relu=True)   # fc1 + ReLU

    # ct1: ConvTranspose2d(64,64,k=4,s=2,p=1): 1x1 -> 2x2 == pad-2 stride-1 conv
    pad_l[...] = jnp.zeros_like(pad_l)            # zero-filled ONCE; later layers
    for b in range(B):                            # only re-zero stale rows
        pad_l[b * 25 + 12:b * 25 + 13, :] = hdn[b:b + 1, :]
    _gather(patch_t1, pad_l, B=B, OH=2, OW=2, kH=4, kW=4, Hp=5, Wp=5, C=64)
    d1 = _gemm(patch_t1[...], w_ref, off["t1"], K["t1"], b_ref, 5, relu=True)

    # ct2: ConvTranspose2d(64,32,k=3,s=2,p=1): 2x2 -> 3x3 == dilate-2 + pad-1 conv
    # shared pad_l: only ct1's center row (12 per image) is stale-nonzero.
    for b in range(B):
        pad_l[b * 25 + 12:b * 25 + 13, :] = jnp.zeros((1, LANE), jnp.float32)
    _scatter_dilated2(pad_l, d1, B=B, H=2, W=2, Hp=5, Wp=5, pad=1)
    patch_t2[:, L["K_real"]["t2"]:K["t2"]] = jnp.zeros(
        (9 * B, K["t2"] - L["K_real"]["t2"]), jnp.float32)        # zero K tail once
    _gather(patch_t2, pad_l, B=B, OH=3, OW=3, kH=3, kW=3, Hp=5, Wp=5, C=64)
    d2 = _gemm(patch_t2[...], w_ref, off["t2"], K["t2"], b_ref, 6, relu=True)

    # ct3: ConvTranspose2d(32,C,k=3,s=1,p=1): 3x3 -> 3x3.  Every stale-nonzero row
    # of pad_l (6,7,8,16,17,18 per image) is overwritten by this scatter -> no zero.
    _scatter(pad_l, d2, B=B, H=3, W=3, Hp=5, Wp=5, pad=1)
    patch_t3[:, L["K_real"]["t3"]:K["t3"]] = jnp.zeros(
        (9 * B, K["t3"] - L["K_real"]["t3"]), jnp.float32)
    _gather(patch_t3, pad_l, B=B, OH=3, OW=3, kH=3, kW=3, Hp=5, Wp=5, C=32)
    out_ref[2 * B:11 * B, :] = _gemm(patch_t3[...], w_ref, off["t3"], K["t3"],
                                     b_ref, 7, relu=False)


# ----------------------------------------------------------------------------
# One-time (init) weight preparation: K-packed bf16 GEMM slabs
# ----------------------------------------------------------------------------

def _conv_w_packed(w, k_rows):
    """Conv2d weight (O, C, kH, kW) -> K-packed (k_rows, 128) GEMM matrix,
    row (i*kW+j)*C + c, col o; tail rows / cols zero-padded."""
    O, C, kH, kW = w.shape
    g = jnp.transpose(w, (2, 3, 1, 0)).reshape(kH * kW * C, O)
    return jnp.pad(g, ((0, k_rows - kH * kW * C), (0, LANE - O))).astype(jnp.bfloat16)


def _convT_w_packed(wt, k_rows):
    """ConvTranspose2d weight (Cin, Cout, kH, kW) -> packed GEMM matrix of the
    equivalent stride-1 conv (spatial flip + channel swap)."""
    wc = jnp.transpose(jnp.flip(wt, axis=(2, 3)), (1, 0, 2, 3))
    return _conv_w_packed(wc, k_rows)


def _fc_w_packed(w):
    i, o = w.shape
    return jnp.pad(w, ((0, LANE - i), (0, LANE - o))).astype(jnp.bfloat16)


def _bias_row(b):
    return jnp.pad(b, (0, LANE - b.shape[0])).astype(jnp.float32)


def init_params(key, *, w, h, input_dim, latent_dim):
    hidden = w * h * 64
    ks = jax.random.split(key, 16)

    def p(k, shape, scale=0.05):
        return (scale * jax.random.normal(k, shape)).astype(jnp.float32)

    return {
        # Encoder (PyTorch layouts)
        "e_conv1_w": p(ks[0], (32, input_dim, 3, 3)),
        "e_conv1_b": p(ks[1], (32,)),
        "e_conv2_w": p(ks[2], (64, 32, 4, 4)),
        "e_conv2_b": p(ks[3], (64,)),
        "e_fcm_w":   p(ks[4], (hidden, latent_dim)),   # stored (in, out)
        "e_fcm_b":   p(ks[5], (latent_dim,)),
        "e_fcv_w":   p(ks[6], (hidden, latent_dim)),
        "e_fcv_b":   p(ks[7], (latent_dim,)),
        # Decoder
        "d_fc1_w":   p(ks[8], (latent_dim, hidden)),
        "d_fc1_b":   p(ks[9], (hidden,)),
        "d_ct1_w":   p(ks[10], (hidden, 64, 4, 4)),    # ConvTranspose (Cin, Cout, kH, kW)
        "d_ct1_b":   p(ks[11], (64,)),
        "d_ct2_w":   p(ks[12], (64, 32, 3, 3)),
        "d_ct2_b":   p(ks[13], (32,)),
        "d_ct3_w":   p(ks[14], (32, input_dim, 3, 3)),
        "d_ct3_b":   p(ks[15], (input_dim,)),
    }


def prepare_params(p, *, input_dim):
    """One-time weight prep: one bf16 packed weight slab, one fused fc_mean|fc_var
    (128, 256) matrix, one f32 bias slab -> only 3 weight DMAs per forward."""
    L = _layout(input_dim)
    K = L["K"]
    w_slab = jnp.concatenate([
        _conv_w_packed(p["e_conv1_w"], K["c1"]),
        _conv_w_packed(p["e_conv2_w"], K["c2"]),
        _fc_w_packed(p["d_fc1_w"]),
        _convT_w_packed(p["d_ct1_w"], K["t1"]),
        _convT_w_packed(p["d_ct2_w"], K["t2"]),
        _convT_w_packed(p["d_ct3_w"], K["t3"]),
    ], axis=0)
    assert w_slab.shape == (L["total"], LANE)
    wmv = jnp.concatenate([_fc_w_packed(p["e_fcm_w"]),
                           _fc_w_packed(p["e_fcv_w"])], axis=1)      # (128, 256)
    b_slab = jnp.stack([
        _bias_row(p["e_conv1_b"]), _bias_row(p["e_conv2_b"]),
        _bias_row(p["e_fcm_b"]),  _bias_row(p["e_fcv_b"]),
        _bias_row(p["d_fc1_b"]),  _bias_row(p["d_ct1_b"]),
        _bias_row(p["d_ct2_b"]),  _bias_row(p["d_ct3_b"]),
    ], axis=0)
    return (w_slab, wmv, b_slab)


# ----------------------------------------------------------------------------
# Forward wrapper: one pallas_call, boundary layout transforms only
# ----------------------------------------------------------------------------

def _conv1_patches(x):
    """(B, C, 2, 2) NCHW -> (B*4, 9*C) im2col rows for the k=3 p=1 conv
    (boundary layout plumbing; the GEMM itself runs inside the kernel)."""
    B, C, H, W = x.shape
    xp = jnp.pad(jnp.transpose(x, (0, 2, 3, 1)), ((0, 0), (1, 1), (1, 1), (0, 0)))
    rows = [xp[:, oy:oy + 3, ox:ox + 3, :].reshape(B, 9 * C)
            for oy in range(H) for ox in range(W)]
    return jnp.stack(rows, axis=1).reshape(B * H * W, 9 * C)


def vae_forward(prep, x, eps, *, latent_dim):
    B, C, H, W = x.shape
    assert (H, W) == (2, 2), "module only type-checks for w=h=1 -> encoder input 2x2"
    w_slab, wmv, b_slab = prep
    L = _layout(C)
    assert w_slab.shape == (L["total"], LANE)

    # Single lane-dense input slab: conv1 im2col patches (B*4 rows) + eps (B rows).
    patches = jnp.pad(_conv1_patches(x).astype(jnp.float32),
                      ((0, 0), (0, L["K"]["c1"] - 9 * C)))
    eps_rows = jnp.pad(eps.astype(jnp.float32),
                       ((0, 0), (0, LANE - eps.shape[1])))
    act_in = jnp.concatenate([patches, eps_rows], axis=0)            # (5B, 128)

    gemms = [(4 * B, L["K"]["c1"], LANE), (B, L["K"]["c2"], LANE),
             (B, LANE, 2 * LANE), (B, L["K"]["f1"], LANE),
             (4 * B, L["K"]["t1"], LANE), (9 * B, L["K"]["t2"], LANE),
             (9 * B, L["K"]["t3"], LANE)]
    cost = pl.CostEstimate(
        flops=2 * sum(m * k * n for m, k, n in gemms),
        transcendentals=B * LANE,
        bytes_accessed=(act_in.size * 4 + w_slab.size * 2 + wmv.size * 2
                        + b_slab.size * 4 + 11 * B * LANE * 4))

    vmem = pl.BlockSpec(memory_space=pltpu.MemorySpace.VMEM)
    # TODO(synk): at real batch sizes (rows >> 128) add a grid over row tiles with
    # dimension_semantics=("parallel",) (weights pinned via constant index_maps) so
    # v7x's 2nd TensorCore is used, and re-derive tile sizes for its 64 MiB VMEM
    # (512-1024 rows); at B=2 a grid only adds per-step overhead.
    out = pl.pallas_call(
        functools.partial(_vae_kernel, B=B, L=L),
        out_shape=jax.ShapeDtypeStruct((11 * B, LANE), jnp.float32),
        in_specs=[vmem] * 4,
        out_specs=vmem,
        scratch_shapes=[
            pltpu.VMEM((16 * B, LANE), jnp.float32),         # pad_s   (B,4,4)
            pltpu.VMEM((B, L["K"]["c2"]), jnp.float32),      # patch_c2
            pltpu.VMEM((25 * B, LANE), jnp.float32),         # pad_l   (B,5,5) shared
            pltpu.VMEM((4 * B, L["K"]["t1"]), jnp.float32),  # patch_t1
            pltpu.VMEM((9 * B, L["K"]["t2"]), jnp.float32),  # patch_t2
            pltpu.VMEM((9 * B, L["K"]["t3"]), jnp.float32),  # patch_t3
        ],
        cost_estimate=cost,
    )(act_in, w_slab, wmv, b_slab)

    mean = out[0:B, :latent_dim]
    logvar = out[B:2 * B, :latent_dim]
    recon = jnp.transpose(out[2 * B:11 * B, :C].reshape(B, 3, 3, C), (0, 3, 1, 2))
    return mean, logvar, recon


if __name__ == "__main__":
    # Module only self-consistent for w = h = 1 (see note at top).
    W_, H_ = 1, 1
    INPUT_DIM = 4          # channels
    LATENT_DIM = 8
    BATCH = 2
    # Encoder conv2 (k=4, p=1) shrinks spatial by 1, so input spatial must be
    # (W_+1, H_+1) = (2, 2) for the flatten to produce w*h*64 = 64 features.
    IN_H, IN_W = W_ + 1, H_ + 1

    root = jax.random.PRNGKey(0)
    k_param, k_x, k_eps = jax.random.split(root, 3)

    params = init_params(k_param, w=W_, h=H_, input_dim=INPUT_DIM,
                         latent_dim=LATENT_DIM)
    prep = prepare_params(params, input_dim=INPUT_DIM)   # one-time layout prep

    x = jax.random.normal(k_x, (BATCH, INPUT_DIM, IN_H, IN_W), dtype=jnp.float32)
    # TODO(synk): torch.randn_like uses PyTorch's global RNG; here eps is drawn
    # deterministically from a fixed JAX key (same N(0,1) distribution).
    eps = jax.random.normal(k_eps, (BATCH, LATENT_DIM), dtype=jnp.float32)

    fwd = jax.jit(functools.partial(vae_forward, latent_dim=LATENT_DIM))
    mean, logvar, recon = fwd(prep, x, eps)
    jax.block_until_ready((mean, logvar, recon))

    assert mean.shape == (BATCH, LATENT_DIM)
    assert logvar.shape == (BATCH, LATENT_DIM)
    assert recon.shape == (BATCH, INPUT_DIM, 3, 3)   # (w,h)=1 -> decoder emits 3x3
    assert bool(jnp.all(jnp.isfinite(recon)))
    print("KERNEL_OK")
</pallas_src>

<mosaic_0001>
module attributes {stable_mosaic.version = 11 : i64} {
  func.func @_vae_kernel(%arg0: memref<10x128xf32, #tpu.memory_space<vmem>>, %arg1: memref<2816x128xbf16, #tpu.memory_space<vmem>>, %arg2: memref<128x256xbf16, #tpu.memory_space<vmem>>, %arg3: memref<8x128xf32, #tpu.memory_space<vmem>>, %arg4: memref<22x128xf32, #tpu.memory_space<vmem>>, %arg5: memref<32x128xf32, #tpu.memory_space<vmem>>, %arg6: memref<2x512xf32, #tpu.memory_space<vmem>>, %arg7: memref<50x128xf32, #tpu.memory_space<vmem>>, %arg8: memref<8x1024xf32, #tpu.memory_space<vmem>>, %arg9: memref<18x640xf32, #tpu.memory_space<vmem>>, %arg10: memref<18x384xf32, #tpu.memory_space<vmem>>) attributes {dimension_semantics = [], scalar_prefetch = 0 : i64, scratch_operands = 6 : i64, tpu.core_type = #tpu.core_type<tc>} {
    %c0 = arith.constant 0 : index
    %c0_0 = arith.constant 0 : index
    %0 = vector.load %arg0[%c0, %c0_0] : memref<10x128xf32, #tpu.memory_space<vmem>>, vector<8x128xf32>
    %1 = arith.truncf %0 : vector<8x128xf32> to vector<8x128xbf16>
    %c0_1 = arith.constant 0 : index
    %c0_2 = arith.constant 0 : index
    %2 = vector.load %arg1[%c0_1, %c0_2] : memref<2816x128xbf16, #tpu.memory_space<vmem>>, vector<128x128xbf16>
    %cst = arith.constant dense<0.000000e+00> : vector<8x128xf32>
    %3 = tpu.matmul %1, %2, %cst {dimension_numbers = #tpu.dot_dimension_numbers<[1], [0], [0], [1], [0, 0, 1, 1], [], []>} : vector<8x128xbf16>, vector<128x128xbf16>, vector<8x128xf32> -> vector<8x128xf32>
    %c0_3 = arith.constant 0 : index
    %c0_4 = arith.constant 0 : index
    %4 = vector.load %arg3[%c0_3, %c0_4] : memref<8x128xf32, #tpu.memory_space<vmem>>, vector<1x128xf32>
    %5 = vector.broadcast %4 : vector<1x128xf32> to vector<8x128xf32>
    %6 = arith.addf %3, %5 : vector<8x128xf32>
    %cst_5 = arith.constant 0.000000e+00 : f32
    %7 = vector.broadcast %cst_5 : f32 to vector<8x128xf32>
    %8 = arith.maximumf %6, %7 : vector<8x128xf32>
    %cst_6 = arith.constant 0.000000e+00 : f32
    %9 = vector.broadcast %cst_6 : f32 to vector<32x128xf32>
    %c0_7 = arith.constant 0 : index
    %c0_8 = arith.constant 0 : index
    %10 = vector.load %arg5[%c0_7, %c0_8] : memref<32x128xf32, #tpu.memory_space<vmem>>, vector<32x128xf32>
    tpu.vector_store %arg5[%c0_7, %c0_8], %9 {strides = array<i32>} : memref<32x128xf32, #tpu.memory_space<vmem>>, vector<32x128xf32>,
    %11 = vector.extract_strided_slice %8 {offsets = [0, 0], sizes = [2, 128], strides = [1, 1]} : vector<8x128xf32> to vector<2x128xf32>
    %c5 = arith.constant 5 : index
    %c0_9 = arith.constant 0 : index
    %12 = vector.load %arg5[%c5, %c0_9] : memref<32x128xf32, #tpu.memory_space<vmem>>, vector<2x128xf32>
    tpu.vector_store %arg5[%c5, %c0_9], %11 {strides = array<i32>} : memref<32x128xf32, #tpu.memory_space<vmem>>, vector<2x128xf32>,
    %13 = vector.extract_strided_slice %8 {offsets = [2, 0], sizes = [2, 128], strides = [1, 1]} : vector<8x128xf32> to vector<2x128xf32>
    %c9 = arith.constant 9 : index
    %c0_10 = arith.constant 0 : index
    %14 = vector.load %arg5[%c9, %c0_10] : memref<32x128xf32, #tpu.memory_space<vmem>>, vector<2x128xf32>
    tpu.vector_store %arg5[%c9, %c0_10], %13 {strides = array<i32>} : memref<32x128xf32, #tpu.memory_space<vmem>>, vector<2x128xf32>,
    %15 = vector.extract_strided_slice %8 {offsets = [4, 0], sizes = [2, 128], strides = [1, 1]} : vector<8x128xf32> to vector<2x128xf32>
    %c21 = arith.constant 21 : index
    %c0_11 = arith.constant 0 : index
    %16 = vector.load %arg5[%c21, %c0_11] : memref<32x128xf32, #tpu.memory_space<vmem>>, vector<2x128xf32>
    tpu.vector_store %arg5[%c21, %c0_11], %15 {strides = array<i32>} : memref<32x128xf32, #tpu.memory_space<vmem>>, vector<2x128xf32>,
    %17 = vector.extract_strided_slice %8 {offsets = [6, 0], sizes = [2, 128], strides = [1, 1]} : vector<8x128xf32> to vector<2x128xf32>
    %c25 = arith.constant 25 : index
    %c0_12 = arith.constant 0 : index
    %18 = vector.load %arg5[%c25, %c0_12] : memref<32x128xf32, #tpu.memory_space<vmem>>, vector<2x128xf32>
    tpu.vector_store %arg5[%c25, %c0_12], %17 {strides = array<i32>} : memref<32x128xf32, #tpu.memory_space<vmem>>, vector<2x128xf32>,
    %c0_13 = arith.constant 0 : index
    %c0_14 = arith.constant 0 : index
    %19 = vector.load %arg5[%c0_13, %c0_14] : memref<32x128xf32, #tpu.memory_space<vmem>>, vector<1x32xf32>
    %c0_15 = arith.constant 0 : index
    %c0_16 = arith.constant 0 : index
    %20 = vector.load %arg6[%c0_15, %c0_16] : memref<2x512xf32, #tpu.memory_space<vmem>>, vector<1x32xf32>
    tpu.vector_store %arg6[%c0_15, %c0_16], %19 {strides = array<i32>} : memref<2x512xf32, #tpu.memory_space<vmem>>, vector<1x32xf32>,
    %c1 = arith.constant 1 : index
    %c0_17 = arith.constant 0 : index
    %21 = vector.load %arg5[%c1, %c0_17] : memref<32x128xf32, #tpu.memory_space<vmem>>, vector<1x32xf32>
    %c0_18 = arith.constant 0 : index
    %c32 = arith.constant 32 : index
    %22 = vector.load %arg6[%c0_18, %c32] : memref<2x512xf32, #tpu.memory_space<vmem>>, vector<1x32xf32>
    tpu.vector_store %arg6[%c0_18, %c32], %21 {strides = array<i32>} : memref<2x512xf32, #tpu.memory_space<vmem>>, vector<1x32xf32>,
    %c2 = arith.constant 2 : index
    %c0_19 = arith.constant 0 : index
    %23 = vector.load %arg5[%c2, %c0_19] : memref<32x128xf32, #tpu.memory_space<vmem>>, vector<1x32xf32>
    %c0_20 = arith.constant 0 : index
    %c64 = arith.constant 64 : index
    %24 = vector.load %arg6[%c0_20, %c64] : memref<2x512xf32, #tpu.memory_space<vmem>>, vector<1x32xf32>
    tpu.vector_store %arg6[%c0_20, %c64], %23 {strides = array<i32>} : memref<2x512xf32, #tpu.memory_space<vmem>>, vector<1x32xf32>,
    %c3 = arith.constant 3 : index
    %c0_21 = arith.constant 0 : index
    %25 = vector.load %arg5[%c3, %c0_21] : memref<32x128xf32, #tpu.memory_space<vmem>>, vector<1x32xf32>
    %c0_22 = arith.constant 0 : index
    %c96 = arith.constant 96 : index
    %26 = vector.load %arg6[%c0_22, %c96] : memref<2x512xf32, #tpu.memory_space<vmem>>, vector<1x32xf32>
    tpu.vector_store %arg6[%c0_22, %c96], %25 {strides = array<i32>} : memref<2x512xf32, #tpu.memory_space<vmem>>, vector<1x32xf32>,
    %c4 = arith.constant 4 : index
    %c0_23 = arith.constant 0 : index
    %27 = vector.load %arg5[%c4, %c0_23] : memref<32x128xf32, #tpu.memory_space<vmem>>, vector<1x32xf32>
    %c0_24 = arith.constant 0 : index
    %c128 = arith.constant 128 : index
    %28 = vector.load %arg6[%c0_24, %c128] : memref<2x512xf32, #tpu.memory_space<vmem>>, vector<1x32xf32>
    tpu.vector_store %arg6[%c0_24, %c128], %27 {strides = array<i32>} : memref<2x512xf32, #tpu.memory_space<vmem>>, vector<1x32xf32>,
    %c5_25 = arith.constant 5 : index
    %c0_26 = arith.constant 0 : index
    %29 = vector.load %arg5[%c5_25, %c0_26] : memref<32x128xf32, #tpu.memory_space<vmem>>, vector<1x32xf32>
    %c0_27 = arith.constant 0 : index
    %c160 = arith.constant 160 : index
    %30 = vector.load %arg6[%c0_27, %c160] : memref<2x512xf32, #tpu.memory_space<vmem>>, vector<1x32xf32>
    tpu.vector_store %arg6[%c0_27, %c160], %29 {strides = array<i32>} : memref<2x512xf32, #tpu.memory_space<vmem>>, vector<1x32xf32>,
    %c6 = arith.constant 6 : index
    %c0_28 = arith.constant 0 : index
    %31 = vector.load %arg5[%c6, %c0_28] : memref<32x128xf32, #tpu.memory_space<vmem>>, vector<1x32xf32>
    %c0_29 = arith.constant 0 : index
    %c192 = arith.constant 192 : index
    %32 = vector.load %arg6[%c0_29, %c192] : memref<2x512xf32, #tpu.memory_space<vmem>>, vector<1x32xf32>
    tpu.vector_store %arg6[%c0_29, %c192], %31 {strides = array<i32>} : memref<2x512xf32, #tpu.memory_space<vmem>>, vector<1x32xf32>,
    %c7 = arith.constant 7 : index
    %c0_30 = arith.constant 0 : index
    %33 = vector.load %arg5[%c7, %c0_30] : memref<32x128xf32, #tpu.memory_space<vmem>>, vector<1x32xf32>
    %c0_31 = arith.constant 0 : index
    %c224 = arith.constant 224 : index
    %34 = vector.load %arg6[%c0_31, %c224] : memref<2x512xf32, #tpu.memory_space<vmem>>, vector<1x32xf32>
    tpu.vector_store %arg6[%c0_31, %c224], %33 {strides = array<i32>} : memref<2x512xf32, #tpu.memory_space<vmem>>, vector<1x32xf32>,
    %c8 = arith.constant 8 : index
    %c0_32 = arith.constant 0 : index
    %35 = vector.load %arg5[%c8, %c0_32] : memref<32x128xf32, #tpu.memory_space<vmem>>, vector<1x32xf32>
    %c0_33 = arith.constant 0 : index
    %c256 = arith.constant 256 : index
    %36 = vector.load %arg6[%c0_33, %c256] : memref<2x512xf32, #tpu.memory_space<vmem>>, vector<1x32xf32>
    tpu.vector_store %arg6[%c0_33, %c256], %35 {strides = array<i32>} : memref<2x512xf32, #tpu.memory_space<vmem>>, vector<1x32xf32>,
    %c9_34 = arith.constant 9 : index
    %c0_35 = arith.constant 0 : index
    %37 = vector.load %arg5[%c9_34, %c0_35] : memref<32x128xf32, #tpu.memory_space<vmem>>, vector<1x32xf32>
    %c0_36 = arith.constant 0 : index
    %c288 = arith.constant 288 : index
    %38 = vector.load %arg6[%c0_36, %c288] : memref<2x512xf32, #tpu.memory_space<vmem>>, vector<1x32xf32>
    tpu.vector_store %arg6[%c0_36, %c288], %37 {strides = array<i32>} : memref<2x512xf32, #tpu.memory_space<vmem>>, vector<1x32xf32>,
    %c10 = arith.constant 10 : index
    %c0_37 = arith.constant 0 : index
    %39 = vector.load %arg5[%c10, %c0_37] : memref<32x128xf32, #tpu.memory_space<vmem>>, vector<1x32xf32>
    %c0_38 = arith.constant 0 : index
    %c320 = arith.constant 320 : index
    %40 = vector.load %arg6[%c0_38, %c320] : memref<2x512xf32, #tpu.memory_space<vmem>>, vector<1x32xf32>
    tpu.vector_store %arg6[%c0_38, %c320], %39 {strides = array<i32>} : memref<2x512xf32, #tpu.memory_space<vmem>>, vector<1x32xf32>,
    %c11 = arith.constant 11 : index
    %c0_39 = arith.constant 0 : index
    %41 = vector.load %arg5[%c11, %c0_39] : memref<32x128xf32, #tpu.memory_space<vmem>>, vector<1x32xf32>
    %c0_40 = arith.constant 0 : index
    %c352 = arith.constant 352 : index
    %42 = vector.load %arg6[%c0_40, %c352] : memref<2x512xf32, #tpu.memory_space<vmem>>, vector<1x32xf32>
    tpu.vector_store %arg6[%c0_40, %c352], %41 {strides = array<i32>} : memref<2x512xf32, #tpu.memory_space<vmem>>, vector<1x32xf32>,
    %c12 = arith.constant 12 : index
    %c0_41 = arith.constant 0 : index
    %43 = vector.load %arg5[%c12, %c0_41] : memref<32x128xf32, #tpu.memory_space<vmem>>, vector<1x32xf32>
    %c0_42 = arith.constant 0 : index
    %c384 = arith.constant 384 : index
    %44 = vector.load %arg6[%c0_42, %c384] : memref<2x512xf32, #tpu.memory_space<vmem>>, vector<1x32xf32>
    tpu.vector_store %arg6[%c0_42, %c384], %43 {strides = array<i32>} : memref<2x512xf32, #tpu.memory_space<vmem>>, vector<1x32xf32>,
    %c13 = arith.constant 13 : index
    %c0_43 = arith.constant 0 : index
    %45 = vector.load %arg5[%c13, %c0_43] : memref<32x128xf32, #tpu.memory_space<vmem>>, vector<1x32xf32>
    %c0_44 = arith.constant 0 : index
    %c416 = arith.constant 416 : index
    %46 = vector.load %arg6[%c0_44, %c416] : memref<2x512xf32, #tpu.memory_space<vmem>>, vector<1x32xf32>
    tpu.vector_store %arg6[%c0_44, %c416], %45 {strides = array<i32>} : memref<2x512xf32, #tpu.memory_space<vmem>>, vector<1x32xf32>,
    %c14 = arith.constant 14 : index
    %c0_45 = arith.constant 0 : index
    %47 = vector.load %arg5[%c14, %c0_45] : memref<32x128xf32, #tpu.memory_space<vmem>>, vector<1x32xf32>
    %c0_46 = arith.constant 0 : index
    %c448 = arith.constant 448 : index
    %48 = vector.load %arg6[%c0_46, %c448] : memref<2x512xf32, #tpu.memory_space<vmem>>, vector<1x32xf32>
    tpu.vector_store %arg6[%c0_46, %c448], %47 {strides = array<i32>} : memref<2x512xf32, #tpu.memory_space<vmem>>, vector<1x32xf32>,
    %c15 = arith.constant 15 : index
    %c0_47 = arith.constant 0 : index
    %49 = vector.load %arg5[%c15, %c0_47] : memref<32x128xf32, #tpu.memory_space<vmem>>, vector<1x32xf32>
    %c0_48 = arith.constant 0 : index
    %c480 = arith.constant 480 : index
    %50 = vector.load %arg6[%c0_48, %c480] : memref<2x512xf32, #tpu.memory_space<vmem>>, vector<1x32xf32>
    tpu.vector_store %arg6[%c0_48, %c480], %49 {strides = array<i32>} : memref<2x512xf32, #tpu.memory_space<vmem>>, vector<1x32xf32>,
    %c16 = arith.constant 16 : index
    %c0_49 = arith.constant 0 : index
    %51 = vector.load %arg5[%c16, %c0_49] : memref<32x128xf32, #tpu.memory_space<vmem>>, vector<1x32xf32>
    %c1_50 = arith.constant 1 : index
    %c0_51 = arith.constant 0 : index
    %52 = vector.load %arg6[%c1_50, %c0_51] : memref<2x512xf32, #tpu.memory_space<vmem>>, vector<1x32xf32>
    tpu.vector_store %arg6[%c1_50, %c0_51], %51 {strides = array<i32>} : memref<2x512xf32, #tpu.memory_space<vmem>>, vector<1x32xf32>,
    %c17 = arith.constant 17 : index
    %c0_52 = arith.constant 0 : index
    %53 = vector.load %arg5[%c17, %c0_52] : memref<32x128xf32, #tpu.memory_space<vmem>>, vector<1x32xf32>
    %c1_53 = arith.constant 1 : index
    %c32_54 = arith.constant 32 : index
    %54 = vector.load %arg6[%c1_53, %c32_54] : memref<2x512xf32, #tpu.memory_space<vmem>>, vector<1x32xf32>
    tpu.vector_store %arg6[%c1_53, %c32_54], %53 {strides = array<i32>} : memref<2x512xf32, #tpu.memory_space<vmem>>, vector<1x32xf32>,
    %c18 = arith.constant 18 : index
    %c0_55 = arith.constant 0 : index
    %55 = vector.load %arg5[%c18, %c0_55] : memref<32x128xf32, #tpu.memory_space<vmem>>, vector<1x32xf32>
    %c1_56 = arith.constant 1 : index
    %c64_57 = arith.constant 64 : index
    %56 = vector.load %arg6[%c1_56, %c64_57] : memref<2x512xf32, #tpu.memory_space<vmem>>, vector<1x32xf32>
    tpu.vector_store %arg6[%c1_56, %c64_57], %55 {strides = array<i32>} : memref<2x512xf32, #tpu.memory_space<vmem>>, vector<1x32xf32>,
    %c19 = arith.constant 19 : index
    %c0_58 = arith.constant 0 : index
    %57 = vector.load %arg5[%c19, %c0_58] : memref<32x128xf32, #tpu.memory_space<vmem>>, vector<1x32xf32>
    %c1_59 = arith.constant 1 : index
    %c96_60 = arith.constant 96 : index
    %58 = vector.load %arg6[%c1_59, %c96_60] : memref<2x512xf32, #tpu.memory_space<vmem>>, vector<1x32xf32>
    tpu.vector_store %arg6[%c1_59, %c96_60], %57 {strides = array<i32>} : memref<2x512xf32, #tpu.memory_space<vmem>>, vector<1x32xf32>,
    %c20 = arith.constant 20 : index
    %c0_61 = arith.constant 0 : index
    %59 = vector.load %arg5[%c20, %c0_61] : memref<32x128xf32, #tpu.memory_space<vmem>>, vector<1x32xf32>
    %c1_62 = arith.constant 1 : index
    %c128_63 = arith.constant 128 : index
    %60 = vector.load %arg6[%c1_62, %c128_63] : memref<2x512xf32, #tpu.memory_space<vmem>>, vector<1x32xf32>
    tpu.vector_store %arg6[%c1_62, %c128_63], %59 {strides = array<i32>} : memref<2x512xf32, #tpu.memory_space<vmem>>, vector<1x32xf32>,
    %c21_64 = arith.constant 21 : index
    %c0_65 = arith.constant 0 : index
    %61 = vector.load %arg5[%c21_64, %c0_65] : memref<32x128xf32, #tpu.memory_space<vmem>>, vector<1x32xf32>
    %c1_66 = arith.constant 1 : index
    %c160_67 = arith.constant 160 : index
    %62 = vector.load %arg6[%c1_66, %c160_67] : memref<2x512xf32, #tpu.memory_space<vmem>>, vector<1x32xf32>
    tpu.vector_store %arg6[%c1_66, %c160_67], %61 {strides = array<i32>} : memref<2x512xf32, #tpu.memory_space<vmem>>, vector<1x32xf32>,
    %c22 = arith.constant 22 : index
    %c0_68 = arith.constant 0 : index
    %63 = vector.load %arg5[%c22, %c0_68] : memref<32x128xf32, #tpu.memory_space<vmem>>, vector<1x32xf32>
    %c1_69 = arith.constant 1 : index
    %c192_70 = arith.constant 192 : index
    %64 = vector.load %arg6[%c1_69, %c192_70] : memref<2x512xf32, #tpu.memory_space<vmem>>, vector<1x32xf32>
    tpu.vector_store %arg6[%c1_69, %c192_70], %63 {strides = array<i32>} : memref<2x512xf32, #tpu.memory_space<vmem>>, vector<1x32xf32>,
    %c23 = arith.constant 23 : index
    %c0_71 = arith.constant 0 : index
    %65 = vector.load %arg5[%c23, %c0_71] : memref<32x128xf32, #tpu.memory_space<vmem>>, vector<1x32xf32>
    %c1_72 = arith.constant 1 : index
    %c224_73 = arith.constant 224 : index
    %66 = vector.load %arg6[%c1_72, %c224_73] : memref<2x512xf32, #tpu.memory_space<vmem>>, vector<1x32xf32>
    tpu.vector_store %arg6[%c1_72, %c224_73], %65 {strides = array<i32>} : memref<2x512xf32, #tpu.memory_space<vmem>>, vector<1x32xf32>,
    %c24 = arith.constant 24 : index
    %c0_74 = arith.constant 0 : index
    %67 = vector.load %arg5[%c24, %c0_74] : memref<32x128xf32, #tpu.memory_space<vmem>>, vector<1x32xf32>
    %c1_75 = arith.constant 1 : index
    %c256_76 = arith.constant 256 : index
    %68 = vector.load %arg6[%c1_75, %c256_76] : memref<2x512xf32, #tpu.memory_space<vmem>>, vector<1x32xf32>
    tpu.vector_store %arg6[%c1_75, %c256_76], %67 {strides = array<i32>} : memref<2x512xf32, #tpu.memory_space<vmem>>, vector<1x32xf32>,
    %c25_77 = arith.constant 25 : index
    %c0_78 = arith.constant 0 : index
    %69 = vector.load %arg5[%c25_77, %c0_78] : memref<32x128xf32, #tpu.memory_space<vmem>>, vector<1x32xf32>
    %c1_79 = arith.constant 1 : index
    %c288_80 = arith.constant 288 : index
    %70 = vector.load %arg6[%c1_79, %c288_80] : memref<2x512xf32, #tpu.memory_space<vmem>>, vector<1x32xf32>
    tpu.vector_store %arg6[%c1_79, %c288_80], %69 {strides = array<i32>} : memref<2x512xf32, #tpu.memory_space<vmem>>, vector<1x32xf32>,
    %c26 = arith.constant 26 : index
    %c0_81 = arith.constant 0 : index
    %71 = vector.load %arg5[%c26, %c0_81] : memref<32x128xf32, #tpu.memory_space<vmem>>, vector<1x32xf32>
    %c1_82 = arith.constant 1 : index
    %c320_83 = arith.constant 320 : index
    %72 = vector.load %arg6[%c1_82, %c320_83] : memref<2x512xf32, #tpu.memory_space<vmem>>, vector<1x32xf32>
    tpu.vector_store %arg6[%c1_82, %c320_83], %71 {strides = array<i32>} : memref<2x512xf32, #tpu.memory_space<vmem>>, vector<1x32xf32>,
    %c27 = arith.constant 27 : index
    %c0_84 = arith.constant 0 : index
    %73 = vector.load %arg5[%c27, %c0_84] : memref<32x128xf32, #tpu.memory_space<vmem>>, vector<1x32xf32>
    %c1_85 = arith.constant 1 : index
    %c352_86 = arith.constant 352 : index
    %74 = vector.load %arg6[%c1_85, %c352_86] : memref<2x512xf32, #tpu.memory_space<vmem>>, vector<1x32xf32>
    tpu.vector_store %arg6[%c1_85, %c352_86], %73 {strides = array<i32>} : memref<2x512xf32, #tpu.memory_space<vmem>>, vector<1x32xf32>,
    %c28 = arith.constant 28 : index
    %c0_87 = arith.constant 0 : index
    %75 = vector.load %arg5[%c28, %c0_87] : memref<32x128xf32, #tpu.memory_space<vmem>>, vector<1x32xf32>
    %c1_88 = arith.constant 1 : index
    %c384_89 = arith.constant 384 : index
    %76 = vector.load %arg6[%c1_88, %c384_89] : memref<2x512xf32, #tpu.memory_space<vmem>>, vector<1x32xf32>
    tpu.vector_store %arg6[%c1_88, %c384_89], %75 {strides = array<i32>} : memref<2x512xf32, #tpu.memory_space<vmem>>, vector<1x32xf32>,
    %c29 = arith.constant 29 : index
    %c0_90 = arith.constant 0 : index
    %77 = vector.load %arg5[%c29, %c0_90] : memref<32x128xf32, #tpu.memory_space<vmem>>, vector<1x32xf32>
    %c1_91 = arith.constant 1 : index
    %c416_92 = arith.constant 416 : index
    %78 = vector.load %arg6[%c1_91, %c416_92] : memref<2x512xf32, #tpu.memory_space<vmem>>, vector<1x32xf32>
    tpu.vector_store %arg6[%c1_91, %c416_92], %77 {strides = array<i32>} : memref<2x512xf32, #tpu.memory_space<vmem>>, vector<1x32xf32>,
    %c30 = arith.constant 30 : index
    %c0_93 = arith.constant 0 : index
    %79 = vector.load %arg5[%c30, %c0_93] : memref<32x128xf32, #tpu.memory_space<vmem>>, vector<1x32xf32>
    %c1_94 = arith.constant 1 : index
    %c448_95 = arith.constant 448 : index
    %80 = vector.load %arg6[%c1_94, %c448_95] : memref<2x512xf32, #tpu.memory_space<vmem>>, vector<1x32xf32>
    tpu.vector_store %arg6[%c1_94, %c448_95], %79 {strides = array<i32>} : memref<2x512xf32, #tpu.memory_space<vmem>>, vector<1x32xf32>,
    %c31 = arith.constant 31 : index
    %c0_96 = arith.constant 0 : index
    %81 = vector.load %arg5[%c31, %c0_96] : memref<32x128xf32, #tpu.memory_space<vmem>>, vector<1x32xf32>
    %c1_97 = arith.constant 1 : index
    %c480_98 = arith.constant 480 : index
    %82 = vector.load %arg6[%c1_97, %c480_98] : memref<2x512xf32, #tpu.memory_space<vmem>>, vector<1x32xf32>
    tpu.vector_store %arg6[%c1_97, %c480_98], %81 {strides = array<i32>} : memref<2x512xf32, #tpu.memory_space<vmem>>, vector<1x32xf32>,
    %c0_99 = arith.constant 0 : index
    %c0_100 = arith.constant 0 : index
    %83 = vector.load %arg6[%c0_99, %c0_100] : memref<2x512xf32, #tpu.memory_space<vmem>>, vector<2x512xf32>
    %84 = arith.truncf %83 : vector<2x512xf32> to vector<2x512xbf16>
    %c128_101 = arith.constant 128 : index
    %c0_102 = arith.constant 0 : index
    %85 = vector.load %arg1[%c128_101, %c0_102] : memref<2816x128xbf16, #tpu.memory_space<vmem>>, vector<512x128xbf16>
    %cst_103 = arith.constant dense<0.000000e+00> : vector<2x128xf32>
    %86 = tpu.matmul %84, %85, %cst_103 {dimension_numbers = #tpu.dot_dimension_numbers<[1], [0], [0], [1], [0, 0, 1, 1], [], []>} : vector<2x512xbf16>, vector<512x128xbf16>, vector<2x128xf32> -> vector<2x128xf32>
    %c1_104 = arith.constant 1 : index
    %c0_105 = arith.constant 0 : index
    %87 = vector.load %arg3[%c1_104, %c0_105] : memref<8x128xf32, #tpu.memory_space<vmem>>, vector<1x128xf32>
    %88 = vector.broadcast %87 : vector<1x128xf32> to vector<2x128xf32>
    %89 = arith.addf %86, %88 : vector<2x128xf32>
    %cst_106 = arith.constant 0.000000e+00 : f32
    %90 = vector.broadcast %cst_106 : f32 to vector<2x128xf32>
    %91 = arith.maximumf %89, %90 : vector<2x128xf32>
    %92 = arith.truncf %91 : vector<2x128xf32> to vector<2x128xbf16>
    %c0_107 = arith.constant 0 : index
    %c0_108 = arith.constant 0 : index
    %93 = vector.load %arg2[%c0_107, %c0_108] : memref<128x256xbf16, #tpu.memory_space<vmem>>, vector<128x256xbf16>
    %cst_109 = arith.constant dense<0.000000e+00> : vector<2x256xf32>
    %94 = tpu.matmul %92, %93, %cst_109 {dimension_numbers = #tpu.dot_dimension_numbers<[1], [0], [0], [1], [0, 0, 1, 1], [], []>} : vector<2x128xbf16>, vector<128x256xbf16>, vector<2x256xf32> -> vector<2x256xf32>
    %95 = vector.extract_strided_slice %94 {offsets = [0, 0], sizes = [2, 128], strides = [1, 1]} : vector<2x256xf32> to vector<2x128xf32>
    %c2_110 = arith.constant 2 : index
    %c0_111 = arith.constant 0 : index
    %96 = vector.load %arg3[%c2_110, %c0_111] : memref<8x128xf32, #tpu.memory_space<vmem>>, vector<1x128xf32>
    %97 = vector.broadcast %96 : vector<1x128xf32> to vector<2x128xf32>
    %98 = arith.addf %95, %97 : vector<2x128xf32>
    %99 = vector.extract_strided_slice %94 {offsets = [0, 128], sizes = [2, 128], strides = [1, 1]} : vector<2x256xf32> to vector<2x128xf32>
    %c3_112 = arith.constant 3 : index
    %c0_113 = arith.constant 0 : index
    %100 = vector.load %arg3[%c3_112, %c0_113] : memref<8x128xf32, #tpu.memory_space<vmem>>, vector<1x128xf32>
    %101 = vector.broadcast %100 : vector<1x128xf32> to vector<2x128xf32>
    %102 = arith.addf %99, %101 : vector<2x128xf32>
    %c0_114 = arith.constant 0 : index
    %c0_115 = arith.constant 0 : index
    %103 = vector.load %arg4[%c0_114, %c0_115] : memref<22x128xf32, #tpu.memory_space<vmem>>, vector<2x128xf32>
    tpu.vector_store %arg4[%c0_114, %c0_115], %98 {strides = array<i32>} : memref<22x128xf32, #tpu.memory_space<vmem>>, vector<2x128xf32>,
    %c2_116 = arith.constant 2 : index
    %c0_117 = arith.constant 0 : index
    %104 = vector.load %arg4[%c2_116, %c0_117] : memref<22x128xf32, #tpu.memory_space<vmem>>, vector<2x128xf32>
    tpu.vector_store %arg4[%c2_116, %c0_117], %102 {strides = array<i32>} : memref<22x128xf32, #tpu.memory_space<vmem>>, vector<2x128xf32>,
    %c8_118 = arith.constant 8 : index
    %c0_119 = arith.constant 0 : index
    %105 = vector.load %arg0[%c8_118, %c0_119] : memref<10x128xf32, #tpu.memory_space<vmem>>, vector<2x128xf32>
    %cst_120 = arith.constant 5.000000e-01 : f32
    %106 = vector.broadcast %cst_120 : f32 to vector<2x128xf32>
    %107 = arith.mulf %106, %102 : vector<2x128xf32>
    %108 = math.exp %107 : vector<2x128xf32>
    %109 = arith.mulf %105, %108 : vector<2x128xf32>
    %110 = arith.addf %98, %109 : vector<2x128xf32>
    %111 = arith.truncf %110 : vector<2x128xf32> to vector<2x128xbf16>
    %c640 = arith.constant 640 : index
    %c0_121 = arith.constant 0 : index
    %112 = vector.load %arg1[%c640, %c0_121] : memref<2816x128xbf16, #tpu.memory_space<vmem>>, vector<128x128xbf16>
    %cst_122 = arith.constant dense<0.000000e+00> : vector<2x128xf32>
    %113 = tpu.matmul %111, %112, %cst_122 {dimension_numbers = #tpu.dot_dimension_numbers<[1], [0], [0], [1], [0, 0, 1, 1], [], []>} : vector<2x128xbf16>, vector<128x128xbf16>, vector<2x128xf32> -> vector<2x128xf32>
    %c4_123 = arith.constant 4 : index
    %c0_124 = arith.constant 0 : index
    %114 = vector.load %arg3[%c4_123, %c0_124] : memref<8x128xf32, #tpu.memory_space<vmem>>, vector<1x128xf32>
    %115 = vector.broadcast %114 : vector<1x128xf32> to vector<2x128xf32>
    %116 = arith.addf %113, %115 : vector<2x128xf32>
    %cst_125 = arith.constant 0.000000e+00 : f32
    %117 = vector.broadcast %cst_125 : f32 to vector<2x128xf32>
    %118 = arith.maximumf %116, %117 : vector<2x128xf32>
    %cst_126 = arith.constant 0.000000e+00 : f32
    %119 = vector.broadcast %cst_126 : f32 to vector<50x128xf32>
    %c0_127 = arith.constant 0 : index
    %c0_128 = arith.constant 0 : index
    %120 = vector.load %arg7[%c0_127, %c0_128] : memref<50x128xf32, #tpu.memory_space<vmem>>, vector<50x128xf32>
    tpu.vector_store %arg7[%c0_127, %c0_128], %119 {strides = array<i32>} : memref<50x128xf32, #tpu.memory_space<vmem>>, vector<50x128xf32>,
    %121 = vector.extract_strided_slice %118 {offsets = [0, 0], sizes = [1, 128], strides = [1, 1]} : vector<2x128xf32> to vector<1x128xf32>
    %c12_129 = arith.constant 12 : index
    %c0_130 = arith.constant 0 : index
    %122 = vector.load %arg7[%c12_129, %c0_130] : memref<50x128xf32, #tpu.memory_space<vmem>>, vector<1x128xf32>
    tpu.vector_store %arg7[%c12_129, %c0_130], %121 {strides = array<i32>} : memref<50x128xf32, #tpu.memory_space<vmem>>, vector<1x128xf32>,
    %123 = vector.extract_strided_slice %118 {offsets = [1, 0], sizes = [1, 128], strides = [1, 1]} : vector<2x128xf32> to vector<1x128xf32>
    %c37 = arith.constant 37 : index
    %c0_131 = arith.constant 0 : index
    %124 = vector.load %arg7[%c37, %c0_131] : memref<50x128xf32, #tpu.memory_space<vmem>>, vector<1x128xf32>
    tpu.vector_store %arg7[%c37, %c0_131], %123 {strides = array<i32>} : memref<50x128xf32, #tpu.memory_space<vmem>>, vector<1x128xf32>,
    %c0_132 = arith.constant 0 : index
    %c0_133 = arith.constant 0 : index
    %125 = vector.load %arg7[%c0_132, %c0_133] : memref<50x128xf32, #tpu.memory_space<vmem>>, vector<2x64xf32>
    %c0_134 = arith.constant 0 : index
    %c0_135 = arith.constant 0 : index
    %126 = vector.load %arg8[%c0_134, %c0_135] : memref<8x1024xf32, #tpu.memory_space<vmem>>, vector<2x64xf32>
    tpu.vector_store %arg8[%c0_134, %c0_135], %125 {strides = array<i32>} : memref<8x1024xf32, #tpu.memory_space<vmem>>, vector<2x64xf32>,
    %c1_136 = arith.constant 1 : index
    %c0_137 = arith.constant 0 : index
    %127 = vector.load %arg7[%c1_136, %c0_137] : memref<50x128xf32, #tpu.memory_space<vmem>>, vector<2x64xf32>
    %c0_138 = arith.constant 0 : index
    %c64_139 = arith.constant 64 : index
    %128 = vector.load %arg8[%c0_138, %c64_139] : memref<8x1024xf32, #tpu.memory_space<vmem>>, vector<2x64xf32>
    tpu.vector_store %arg8[%c0_138, %c64_139], %127 {strides = array<i32>} : memref<8x1024xf32, #tpu.memory_space<vmem>>, vector<2x64xf32>,
    %c2_140 = arith.constant 2 : index
    %c0_141 = arith.constant 0 : index
    %129 = vector.load %arg7[%c2_140, %c0_141] : memref<50x128xf32, #tpu.memory_space<vmem>>, vector<2x64xf32>
    %c0_142 = arith.constant 0 : index
    %c128_143 = arith.constant 128 : index
    %130 = vector.load %arg8[%c0_142, %c128_143] : memref<8x1024xf32, #tpu.memory_space<vmem>>, vector<2x64xf32>
    tpu.vector_store %arg8[%c0_142, %c128_143], %129 {strides = array<i32>} : memref<8x1024xf32, #tpu.memory_space<vmem>>, vector<2x64xf32>,
    %c3_144 = arith.constant 3 : index
    %c0_145 = arith.constant 0 : index
    %131 = vector.load %arg7[%c3_144, %c0_145] : memref<50x128xf32, #tpu.memory_space<vmem>>, vector<2x64xf32>
    %c0_146 = arith.constant 0 : index
    %c192_147 = arith.constant 192 : index
    %132 = vector.load %arg8[%c0_146, %c192_147] : memref<8x1024xf32, #tpu.memory_space<vmem>>, vector<2x64xf32>
    tpu.vector_store %arg8[%c0_146, %c192_147], %131 {strides = array<i32>} : memref<8x1024xf32, #tpu.memory_space<vmem>>, vector<2x64xf32>,
    %c5_148 = arith.constant 5 : index
    %c0_149 = arith.constant 0 : index
    %133 = vector.load %arg7[%c5_148, %c0_149] : memref<50x128xf32, #tpu.memory_space<vmem>>, vector<2x64xf32>
    %c0_150 = arith.constant 0 : index
    %c256_151 = arith.constant 256 : index
    %134 = vector.load %arg8[%c0_150, %c256_151] : memref<8x1024xf32, #tpu.memory_space<vmem>>, vector<2x64xf32>
    tpu.vector_store %arg8[%c0_150, %c256_151], %133 {strides = array<i32>} : memref<8x1024xf32, #tpu.memory_space<vmem>>, vector<2x64xf32>,
    %c6_152 = arith.constant 6 : index
    %c0_153 = arith.constant 0 : index
    %135 = vector.load %arg7[%c6_152, %c0_153] : memref<50x128xf32, #tpu.memory_space<vmem>>, vector<2x64xf32>
    %c0_154 = arith.constant 0 : index
    %c320_155 = arith.constant 320 : index
    %136 = vector.load %arg8[%c0_154, %c320_155] : memref<8x1024xf32, #tpu.memory_space<vmem>>, vector<2x64xf32>
    tpu.vector_store %arg8[%c0_154, %c320_155], %135 {strides = array<i32>} : memref<8x1024xf32, #tpu.memory_space<vmem>>, vector<2x64xf32>,
    %c7_156 = arith.constant 7 : index
    %c0_157 = arith.constant 0 : index
    %137 = vector.load %arg7[%c7_156, %c0_157] : memref<50x128xf32, #tpu.memory_space<vmem>>, vector<2x64xf32>
    %c0_158 = arith.constant 0 : index
    %c384_159 = arith.constant 384 : index
    %138 = vector.load %arg8[%c0_158, %c384_159] : memref<8x1024xf32, #tpu.memory_space<vmem>>, vector<2x64xf32>
    tpu.vector_store %arg8[%c0_158, %c384_159], %137 {strides = array<i32>} : memref<8x1024xf32, #tpu.memory_space<vmem>>, vector<2x64xf32>,
    %c8_160 = arith.constant 8 : index
    %c0_161 = arith.constant 0 : index
    %139 = vector.load %arg7[%c8_160, %c0_161] : memref<50x128xf32, #tpu.memory_space<vmem>>, vector<2x64xf32>
    %c0_162 = arith.constant 0 : index
    %c448_163 = arith.constant 448 : index
    %140 = vector.load %arg8[%c0_162, %c448_163] : memref<8x1024xf32, #tpu.memory_space<vmem>>, vector<2x64xf32>
    tpu.vector_store %arg8[%c0_162, %c448_163], %139 {strides = array<i32>} : memref<8x1024xf32, #tpu.memory_space<vmem>>, vector<2x64xf32>,
    %c10_164 = arith.constant 10 : index
    %c0_165 = arith.constant 0 : index
    %141 = vector.load %arg7[%c10_164, %c0_165] : memref<50x128xf32, #tpu.memory_space<vmem>>, vector<2x64xf32>
    %c0_166 = arith.constant 0 : index
    %c512 = arith.constant 512 : index
    %142 = vector.load %arg8[%c0_166, %c512] : memref<8x1024xf32, #tpu.memory_space<vmem>>, vector<2x64xf32>
    tpu.vector_store %arg8[%c0_166, %c512], %141 {strides = array<i32>} : memref<8x1024xf32, #tpu.memory_space<vmem>>, vector<2x64xf32>,
    %c11_167 = arith.constant 11 : index
    %c0_168 = arith.constant 0 : index
    %143 = vector.load %arg7[%c11_167, %c0_168] : memref<50x128xf32, #tpu.memory_space<vmem>>, vector<2x64xf32>
    %c0_169 = arith.constant 0 : index
    %c576 = arith.constant 576 : index
    %144 = vector.load %arg8[%c0_169, %c576] : memref<8x1024xf32, #tpu.memory_space<vmem>>, vector<2x64xf32>
    tpu.vector_store %arg8[%c0_169, %c576], %143 {strides = array<i32>} : memref<8x1024xf32, #tpu.memory_space<vmem>>, vector<2x64xf32>,
    %c12_170 = arith.constant 12 : index
    %c0_171 = arith.constant 0 : index
    %145 = vector.load %arg7[%c12_170, %c0_171] : memref<50x128xf32, #tpu.memory_space<vmem>>, vector<2x64xf32>
    %c0_172 = arith.constant 0 : index
    %c640_173 = arith.constant 640 : index
    %146 = vector.load %arg8[%c0_172, %c640_173] : memref<8x1024xf32, #tpu.memory_space<vmem>>, vector<2x64xf32>
    tpu.vector_store %arg8[%c0_172, %c640_173], %145 {strides = array<i32>} : memref<8x1024xf32, #tpu.memory_space<vmem>>, vector<2x64xf32>,
    %c13_174 = arith.constant 13 : index
    %c0_175 = arith.constant 0 : index
    %147 = vector.load %arg7[%c13_174, %c0_175] : memref<50x128xf32, #tpu.memory_space<vmem>>, vector<2x64xf32>
    %c0_176 = arith.constant 0 : index
    %c704 = arith.constant 704 : index
    %148 = vector.load %arg8[%c0_176, %c704] : memref<8x1024xf32, #tpu.memory_space<vmem>>, vector<2x64xf32>
    tpu.vector_store %arg8[%c0_176, %c704], %147 {strides = array<i32>} : memref<8x1024xf32, #tpu.memory_space<vmem>>, vector<2x64xf32>,
    %c15_177 = arith.constant 15 : index
    %c0_178 = arith.constant 0 : index
    %149 = vector.load %arg7[%c15_177, %c0_178] : memref<50x128xf32, #tpu.memory_space<vmem>>, vector<2x64xf32>
    %c0_179 = arith.constant 0 : index
    %c768 = arith.constant 768 : index
    %150 = vector.load %arg8[%c0_179, %c768] : memref<8x1024xf32, #tpu.memory_space<vmem>>, vector<2x64xf32>
    tpu.vector_store %arg8[%c0_179, %c768], %149 {strides = array<i32>} : memref<8x1024xf32, #tpu.memory_space<vmem>>, vector<2x64xf32>,
    %c16_180 = arith.constant 16 : index
    %c0_181 = arith.constant 0 : index
    %151 = vector.load %arg7[%c16_180, %c0_181] : memref<50x128xf32, #tpu.memory_space<vmem>>, vector<2x64xf32>
    %c0_182 = arith.constant 0 : index
    %c832 = arith.constant 832 : index
    %152 = vector.load %arg8[%c0_182, %c832] : memref<8x1024xf32, #tpu.memory_space<vmem>>, vector<2x64xf32>
    tpu.vector_store %arg8[%c0_182, %c832], %151 {strides = array<i32>} : memref<8x1024xf32, #tpu.memory_space<vmem>>, vector<2x64xf32>,
    %c17_183 = arith.constant 17 : index
    %c0_184 = arith.constant 0 : index
    %153 = vector.load %arg7[%c17_183, %c0_184] : memref<50x128xf32, #tpu.memory_space<vmem>>, vector<2x64xf32>
    %c0_185 = arith.constant 0 : index
    %c896 = arith.constant 896 : index
    %154 = vector.load %arg8[%c0_185, %c896] : memref<8x1024xf32, #tpu.memory_space<vmem>>, vector<2x64xf32>
    tpu.vector_store %arg8[%c0_185, %c896], %153 {strides = array<i32>} : memref<8x1024xf32, #tpu.memory_space<vmem>>, vector<2x64xf32>,
    %c18_186 = arith.constant 18 : index
    %c0_187 = arith.constant 0 : index
    %155 = vector.load %arg7[%c18_186, %c0_187] : memref<50x128xf32, #tpu.memory_space<vmem>>, vector<2x64xf32>
    %c0_188 = arith.constant 0 : index
    %c960 = arith.constant 960 : index
    %156 = vector.load %arg8[%c0_188, %c960] : memref<8x1024xf32, #tpu.memory_space<vmem>>, vector<2x64xf32>
    tpu.vector_store %arg8[%c0_188, %c960], %155 {strides = array<i32>} : memref<8x1024xf32, #tpu.memory_space<vmem>>, vector<2x64xf32>,
    %c5_189 = arith.constant 5 : index
    %c0_190 = arith.constant 0 : index
    %157 = vector.load %arg7[%c5_189, %c0_190] : memref<50x128xf32, #tpu.memory_space<vmem>>, vector<2x64xf32>
    %c2_191 = arith.constant 2 : index
    %c0_192 = arith.constant 0 : index
    %158 = vector.load %arg8[%c2_191, %c0_192] : memref<8x1024xf32, #tpu.memory_space<vmem>>, vector<2x64xf32>
    tpu.vector_store %arg8[%c2_191, %c0_192], %157 {strides = array<i32>} : memref<8x1024xf32, #tpu.memory_space<vmem>>, vector<2x64xf32>,
    %c6_193 = arith.constant 6 : index
    %c0_194 = arith.constant 0 : index
    %159 = vector.load %arg7[%c6_193, %c0_194] : memref<50x128xf32, #tpu.memory_space<vmem>>, vector<2x64xf32>
    %c2_195 = arith.constant 2 : index
    %c64_196 = arith.constant 64 : index
    %160 = vector.load %arg8[%c2_195, %c64_196] : memref<8x1024xf32, #tpu.memory_space<vmem>>, vector<2x64xf32>
    tpu.vector_store %arg8[%c2_195, %c64_196], %159 {strides = array<i32>} : memref<8x1024xf32, #tpu.memory_space<vmem>>, vector<2x64xf32>,
    %c7_197 = arith.constant 7 : index
    %c0_198 = arith.constant 0 : index
    %161 = vector.load %arg7[%c7_197, %c0_198] : memref<50x128xf32, #tpu.memory_space<vmem>>, vector<2x64xf32>
    %c2_199 = arith.constant 2 : index
    %c128_200 = arith.constant 128 : index
    %162 = vector.load %arg8[%c2_199, %c128_200] : memref<8x1024xf32, #tpu.memory_space<vmem>>, vector<2x64xf32>
    tpu.vector_store %arg8[%c2_199, %c128_200], %161 {strides = array<i32>} : memref<8x1024xf32, #tpu.memory_space<vmem>>, vector<2x64xf32>,
    %c8_201 = arith.constant 8 : index
    %c0_202 = arith.constant 0 : index
    %163 = vector.load %arg7[%c8_201, %c0_202] : memref<50x128xf32, #tpu.memory_space<vmem>>, vector<2x64xf32>
    %c2_203 = arith.constant 2 : index
    %c192_204 = arith.constant 192 : index
    %164 = vector.load %arg8[%c2_203, %c192_204] : memref<8x1024xf32, #tpu.memory_space<vmem>>, vector<2x64xf32>
    tpu.vector_store %arg8[%c2_203, %c192_204], %163 {strides = array<i32>} : memref<8x1024xf32, #tpu.memory_space<vmem>>, vector<2x64xf32>,
    %c10_205 = arith.constant 10 : index
    %c0_206 = arith.constant 0 : index
    %165 = vector.load %arg7[%c10_205, %c0_206] : memref<50x128xf32, #tpu.memory_space<vmem>>, vector<2x64xf32>
    %c2_207 = arith.constant 2 : index
    %c256_208 = arith.constant 256 : index
    %166 = vector.load %arg8[%c2_207, %c256_208] : memref<8x1024xf32, #tpu.memory_space<vmem>>, vector<2x64xf32>
    tpu.vector_store %arg8[%c2_207, %c256_208], %165 {strides = array<i32>} : memref<8x1024xf32, #tpu.memory_space<vmem>>, vector<2x64xf32>,
    %c11_209 = arith.constant 11 : index
    %c0_210 = arith.constant 0 : index
    %167 = vector.load %arg7[%c11_209, %c0_210] : memref<50x128xf32, #tpu.memory_space<vmem>>, vector<2x64xf32>
    %c2_211 = arith.constant 2 : index
    %c320_212 = arith.constant 320 : index
    %168 = vector.load %arg8[%c2_211, %c320_212] : memref<8x1024xf32, #tpu.memory_space<vmem>>, vector<2x64xf32>
    tpu.vector_store %arg8[%c2_211, %c320_212], %167 {strides = array<i32>} : memref<8x1024xf32, #tpu.memory_space<vmem>>, vector<2x64xf32>,
    %c12_213 = arith.constant 12 : index
    %c0_214 = arith.constant 0 : index
    %169 = vector.load %arg7[%c12_213, %c0_214] : memref<50x128xf32, #tpu.memory_space<vmem>>, vector<2x64xf32>
    %c2_215 = arith.constant 2 : index
    %c384_216 = arith.constant 384 : index
    %170 = vector.load %arg8[%c2_215, %c384_216] : memref<8x1024xf32, #tpu.memory_space<vmem>>, vector<2x64xf32>
    tpu.vector_store %arg8[%c2_215, %c384_216], %169 {strides = array<i32>} : memref<8x1024xf32, #tpu.memory_space<vmem>>, vector<2x64xf32>,
    %c13_217 = arith.constant 13 : index
    %c0_218 = arith.constant 0 : index
    %171 = vector.load %arg7[%c13_217, %c0_218] : memref<50x128xf32, #tpu.memory_space<vmem>>, vector<2x64xf32>
    %c2_219 = arith.constant 2 : index
    %c448_220 = arith.constant 448 : index
    %172 = vector.load %arg8[%c2_219, %c448_220] : memref<8x1024xf32, #tpu.memory_space<vmem>>, vector<2x64xf32>
    tpu.vector_store %arg8[%c2_219, %c448_220], %171 {strides = array<i32>} : memref<8x1024xf32, #tpu.memory_space<vmem>>, vector<2x64xf32>,
    %c15_221 = arith.constant 15 : index
    %c0_222 = arith.constant 0 : index
    %173 = vector.load %arg7[%c15_221, %c0_222] : memref<50x128xf32, #tpu.memory_space<vmem>>, vector<2x64xf32>
    %c2_223 = arith.constant 2 : index
    %c512_224 = arith.constant 512 : index
    %174 = vector.load %arg8[%c2_223, %c512_224] : memref<8x1024xf32, #tpu.memory_space<vmem>>, vector<2x64xf32>
    tpu.vector_store %arg8[%c2_223, %c512_224], %173 {strides = array<i32>} : memref<8x1024xf32, #tpu.memory_space<vmem>>, vector<2x64xf32>,
    %c16_225 = arith.constant 16 : index
    %c0_226 = arith.constant 0 : index
    %175 = vector.load %arg7[%c16_225, %c0_226] : memref<50x128xf32, #tpu.memory_space<vmem>>, vector<2x64xf32>
    %c2_227 = arith.constant 2 : index
    %c576_228 = arith.constant 576 : index
    %176 = vector.load %arg8[%c2_227, %c576_228] : memref<8x1024xf32, #tpu.memory_space<vmem>>, vector<2x64xf32>
    tpu.vector_store %arg8[%c2_227, %c576_228], %175 {strides = array<i32>} : memref<8x1024xf32, #tpu.memory_space<vmem>>, vector<2x64xf32>,
    %c17_229 = arith.constant 17 : index
    %c0_230 = arith.constant 0 : index
    %177 = vector.load %arg7[%c17_229, %c0_230] : memref<50x128xf32, #tpu.memory_space<vmem>>, vector<2x64xf32>
    %c2_231 = arith.constant 2 : index
    %c640_232 = arith.constant 640 : index
    %178 = vector.load %arg8[%c2_231, %c640_232] : memref<8x1024xf32, #tpu.memory_space<vmem>>, vector<2x64xf32>
    tpu.vector_store %arg8[%c2_231, %c640_232], %177 {strides = array<i32>} : memref<8x1024xf32, #tpu.memory_space<vmem>>, vector<2x64xf32>,
    %c18_233 = arith.constant 18 : index
    %c0_234 = arith.constant 0 : index
    %179 = vector.load %arg7[%c18_233, %c0_234] : memref<50x128xf32, #tpu.memory_space<vmem>>, vector<2x64xf32>
    %c2_235 = arith.constant 2 : index
    %c704_236 = arith.constant 704 : index
    %180 = vector.load %arg8[%c2_235, %c704_236] : memref<8x1024xf32, #tpu.memory_space<vmem>>, vector<2x64xf32>
    tpu.vector_store %arg8[%c2_235, %c704_236], %179 {strides = array<i32>} : memref<8x1024xf32, #tpu.memory_space<vmem>>, vector<2x64xf32>,
    %c20_237 = arith.constant 20 : index
    %c0_238 = arith.constant 0 : index
    %181 = vector.load %arg7[%c20_237, %c0_238] : memref<50x128xf32, #tpu.memory_space<vmem>>, vector<2x64xf32>
    %c2_239 = arith.constant 2 : index
    %c768_240 = arith.constant 768 : index
    %182 = vector.load %arg8[%c2_239, %c768_240] : memref<8x1024xf32, #tpu.memory_space<vmem>>, vector<2x64xf32>
    tpu.vector_store %arg8[%c2_239, %c768_240], %181 {strides = array<i32>} : memref<8x1024xf32, #tpu.memory_space<vmem>>, vector<2x64xf32>,
    %c21_241 = arith.constant 21 : index
    %c0_242 = arith.constant 0 : index
    %183 = vector.load %arg7[%c21_241, %c0_242] : memref<50x128xf32, #tpu.memory_space<vmem>>, vector<2x64xf32>
    %c2_243 = arith.constant 2 : index
    %c832_244 = arith.constant 832 : index
    %184 = vector.load %arg8[%c2_243, %c832_244] : memref<8x1024xf32, #tpu.memory_space<vmem>>, vector<2x64xf32>
    tpu.vector_store %arg8[%c2_243, %c832_244], %183 {strides = array<i32>} : memref<8x1024xf32, #tpu.memory_space<vmem>>, vector<2x64xf32>,
    %c22_245 = arith.constant 22 : index
    %c0_246 = arith.constant 0 : index
    %185 = vector.load %arg7[%c22_245, %c0_246] : memref<50x128xf32, #tpu.memory_space<vmem>>, vector<2x64xf32>
    %c2_247 = arith.constant 2 : index
    %c896_248 = arith.constant 896 : index
    %186 = vector.load %arg8[%c2_247, %c896_248] : memref<8x1024xf32, #tpu.memory_space<vmem>>, vector<2x64xf32>
    tpu.vector_store %arg8[%c2_247, %c896_248], %185 {strides = array<i32>} : memref<8x1024xf32, #tpu.memory_space<vmem>>, vector<2x64xf32>,
    %c23_249 = arith.constant 23 : index
    %c0_250 = arith.constant 0 : index
    %187 = vector.load %arg7[%c23_249, %c0_250] : memref<50x128xf32, #tpu.memory_space<vmem>>, vector<2x64xf32>
    %c2_251 = arith.constant 2 : index
    %c960_252 = arith.constant 960 : index
    %188 = vector.load %arg8[%c2_251, %c960_252] : memref<8x1024xf32, #tpu.memory_space<vmem>>, vector<2x64xf32>
    tpu.vector_store %arg8[%c2_251, %c960_252], %187 {strides = array<i32>} : memref<8x1024xf32, #tpu.memory_space<vmem>>, vector<2x64xf32>,
    %c25_253 = arith.constant 25 : index
    %c0_254 = arith.constant 0 : index
    %189 = vector.load %arg7[%c25_253, %c0_254] : memref<50x128xf32, #tpu.memory_space<vmem>>, vector<2x64xf32>
    %c4_255 = arith.constant 4 : index
    %c0_256 = arith.constant 0 : index
    %190 = vector.load %arg8[%c4_255, %c0_256] : memref<8x1024xf32, #tpu.memory_space<vmem>>, vector<2x64xf32>
    tpu.vector_store %arg8[%c4_255, %c0_256], %189 {strides = array<i32>} : memref<8x1024xf32, #tpu.memory_space<vmem>>, vector<2x64xf32>,
    %c26_257 = arith.constant 26 : index
    %c0_258 = arith.constant 0 : index
    %191 = vector.load %arg7[%c26_257, %c0_258] : memref<50x128xf32, #tpu.memory_space<vmem>>, vector<2x64xf32>
    %c4_259 = arith.constant 4 : index
    %c64_260 = arith.constant 64 : index
    %192 = vector.load %arg8[%c4_259, %c64_260] : memref<8x1024xf32, #tpu.memory_space<vmem>>, vector<2x64xf32>
    tpu.vector_store %arg8[%c4_259, %c64_260], %191 {strides = array<i32>} : memref<8x1024xf32, #tpu.memory_space<vmem>>, vector<2x64xf32>,
    %c27_261 = arith.constant 27 : index
    %c0_262 = arith.constant 0 : index
    %193 = vector.load %arg7[%c27_261, %c0_262] : memref<50x128xf32, #tpu.memory_space<vmem>>, vector<2x64xf32>
    %c4_263 = arith.constant 4 : index
    %c128_264 = arith.constant 128 : index
    %194 = vector.load %arg8[%c4_263, %c128_264] : memref<8x1024xf32, #tpu.memory_space<vmem>>, vector<2x64xf32>
    tpu.vector_store %arg8[%c4_263, %c128_264], %193 {strides = array<i32>} : memref<8x1024xf32, #tpu.memory_space<vmem>>, vector<2x64xf32>,
    %c28_265 = arith.constant 28 : index
    %c0_266 = arith.constant 0 : index
    %195 = vector.load %arg7[%c28_265, %c0_266] : memref<50x128xf32, #tpu.memory_space<vmem>>, vector<2x64xf32>
    %c4_267 = arith.constant 4 : index
    %c192_268 = arith.constant 192 : index
    %196 = vector.load %arg8[%c4_267, %c192_268] : memref<8x1024xf32, #tpu.memory_space<vmem>>, vector<2x64xf32>
    tpu.vector_store %arg8[%c4_267, %c192_268], %195 {strides = array<i32>} : memref<8x1024xf32, #tpu.memory_space<vmem>>, vector<2x64xf32>,
    %c30_269 = arith.constant 30 : index
    %c0_270 = arith.constant 0 : index
    %197 = vector.load %arg7[%c30_269, %c0_270] : memref<50x128xf32, #tpu.memory_space<vmem>>, vector<2x64xf32>
    %c4_271 = arith.constant 4 : index
    %c256_272 = arith.constant 256 : index
    %198 = vector.load %arg8[%c4_271, %c256_272] : memref<8x1024xf32, #tpu.memory_space<vmem>>, vector<2x64xf32>
    tpu.vector_store %arg8[%c4_271, %c256_272], %197 {strides = array<i32>} : memref<8x1024xf32, #tpu.memory_space<vmem>>, vector<2x64xf32>,
    %c31_273 = arith.constant 31 : index
    %c0_274 = arith.constant 0 : index
    %199 = vector.load %arg7[%c31_273, %c0_274] : memref<50x128xf32, #tpu.memory_space<vmem>>, vector<2x64xf32>
    %c4_275 = arith.constant 4 : index
    %c320_276 = arith.constant 320 : index
    %200 = vector.load %arg8[%c4_275, %c320_276] : memref<8x1024xf32, #tpu.memory_space<vmem>>, vector<2x64xf32>
    tpu.vector_store %arg8[%c4_275, %c320_276], %199 {strides = array<i32>} : memref<8x1024xf32, #tpu.memory_space<vmem>>, vector<2x64xf32>,
    %c32_277 = arith.constant 32 : index
    %c0_278 = arith.constant 0 : index
    %201 = vector.load %arg7[%c32_277, %c0_278] : memref<50x128xf32, #tpu.memory_space<vmem>>, vector<2x64xf32>
    %c4_279 = arith.constant 4 : index
    %c384_280 = arith.constant 384 : index
    %202 = vector.load %arg8[%c4_279, %c384_280] : memref<8x1024xf32, #tpu.memory_space<vmem>>, vector<2x64xf32>
    tpu.vector_store %arg8[%c4_279, %c384_280], %201 {strides = array<i32>} : memref<8x1024xf32, #tpu.memory_space<vmem>>, vector<2x64xf32>,
    %c33 = arith.constant 33 : index
    %c0_281 = arith.constant 0 : index
    %203 = vector.load %arg7[%c33, %c0_281] : memref<50x128xf32, #tpu.memory_space<vmem>>, vector<2x64xf32>
    %c4_282 = arith.constant 4 : index
    %c448_283 = arith.constant 448 : index
    %204 = vector.load %arg8[%c4_282, %c448_283] : memref<8x1024xf32, #tpu.memory_space<vmem>>, vector<2x64xf32>
    tpu.vector_store %arg8[%c4_282, %c448_283], %203 {strides = array<i32>} : memref<8x1024xf32, #tpu.memory_space<vmem>>, vector<2x64xf32>,
    %c35 = arith.constant 35 : index
    %c0_284 = arith.constant 0 : index
    %205 = vector.load %arg7[%c35, %c0_284] : memref<50x128xf32, #tpu.memory_space<vmem>>, vector<2x64xf32>
    %c4_285 = arith.constant 4 : index
    %c512_286 = arith.constant 512 : index
    %206 = vector.load %arg8[%c4_285, %c512_286] : memref<8x1024xf32, #tpu.memory_space<vmem>>, vector<2x64xf32>
    tpu.vector_store %arg8[%c4_285, %c512_286], %205 {strides = array<i32>} : memref<8x1024xf32, #tpu.memory_space<vmem>>, vector<2x64xf32>,
    %c36 = arith.constant 36 : index
    %c0_287 = arith.constant 0 : index
    %207 = vector.load %arg7[%c36, %c0_287] : memref<50x128xf32, #tpu.memory_space<vmem>>, vector<2x64xf32>
    %c4_288 = arith.constant 4 : index
    %c576_289 = arith.constant 576 : index
    %208 = vector.load %arg8[%c4_288, %c576_289] : memref<8x1024xf32, #tpu.memory_space<vmem>>, vector<2x64xf32>
    tpu.vector_store %arg8[%c4_288, %c576_289], %207 {strides = array<i32>} : memref<8x1024xf32, #tpu.memory_space<vmem>>, vector<2x64xf32>,
    %c37_290 = arith.constant 37 : index
    %c0_291 = arith.constant 0 : index
    %209 = vector.load %arg7[%c37_290, %c0_291] : memref<50x128xf32, #tpu.memory_space<vmem>>, vector<2x64xf32>
    %c4_292 = arith.constant 4 : index
    %c640_293 = arith.constant 640 : index
    %210 = vector.load %arg8[%c4_292, %c640_293] : memref<8x1024xf32, #tpu.memory_space<vmem>>, vector<2x64xf32>
    tpu.vector_store %arg8[%c4_292, %c640_293], %209 {strides = array<i32>} : memref<8x1024xf32, #tpu.memory_space<vmem>>, vector<2x64xf32>,
    %c38 = arith.constant 38 : index
    %c0_294 = arith.constant 0 : index
    %211 = vector.load %arg7[%c38, %c0_294] : memref<50x128xf32, #tpu.memory_space<vmem>>, vector<2x64xf32>
    %c4_295 = arith.constant 4 : index
    %c704_296 = arith.constant 704 : index
    %212 = vector.load %arg8[%c4_295, %c704_296] : memref<8x1024xf32, #tpu.memory_space<vmem>>, vector<2x64xf32>
    tpu.vector_store %arg8[%c4_295, %c704_296], %211 {strides = array<i32>} : memref<8x1024xf32, #tpu.memory_space<vmem>>, vector<2x64xf32>,
    %c40 = arith.constant 40 : index
    %c0_297 = arith.constant 0 : index
    %213 = vector.load %arg7[%c40, %c0_297] : memref<50x128xf32, #tpu.memory_space<vmem>>, vector<2x64xf32>
    %c4_298 = arith.constant 4 : index
    %c768_299 = arith.constant 768 : index
    %214 = vector.load %arg8[%c4_298, %c768_299] : memref<8x1024xf32, #tpu.memory_space<vmem>>, vector<2x64xf32>
    tpu.vector_store %arg8[%c4_298, %c768_299], %213 {strides = array<i32>} : memref<8x1024xf32, #tpu.memory_space<vmem>>, vector<2x64xf32>,
    %c41 = arith.constant 41 : index
    %c0_300 = arith.constant 0 : index
    %215 = vector.load %arg7[%c41, %c0_300] : memref<50x128xf32, #tpu.memory_space<vmem>>, vector<2x64xf32>
    %c4_301 = arith.constant 4 : index
    %c832_302 = arith.constant 832 : index
    %216 = vector.load %arg8[%c4_301, %c832_302] : memref<8x1024xf32, #tpu.memory_space<vmem>>, vector<2x64xf32>
    tpu.vector_store %arg8[%c4_301, %c832_302], %215 {strides = array<i32>} : memref<8x1024xf32, #tpu.memory_space<vmem>>, vector<2x64xf32>,
    %c42 = arith.constant 42 : index
    %c0_303 = arith.constant 0 : index
    %217 = vector.load %arg7[%c42, %c0_303] : memref<50x128xf32, #tpu.memory_space<vmem>>, vector<2x64xf32>
    %c4_304 = arith.constant 4 : index
    %c896_305 = arith.constant 896 : index
    %218 = vector.load %arg8[%c4_304, %c896_305] : memref<8x1024xf32, #tpu.memory_space<vmem>>, vector<2x64xf32>
    tpu.vector_store %arg8[%c4_304, %c896_305], %217 {strides = array<i32>} : memref<8x1024xf32, #tpu.memory_space<vmem>>, vector<2x64xf32>,
    %c43 = arith.constant 43 : index
    %c0_306 = arith.constant 0 : index
    %219 = vector.load %arg7[%c43, %c0_306] : memref<50x128xf32, #tpu.memory_space<vmem>>, vector<2x64xf32>
    %c4_307 = arith.constant 4 : index
    %c960_308 = arith.constant 960 : index
    %220 = vector.load %arg8[%c4_307, %c960_308] : memref<8x1024xf32, #tpu.memory_space<vmem>>, vector<2x64xf32>
    tpu.vector_store %arg8[%c4_307, %c960_308], %219 {strides = array<i32>} : memref<8x1024xf32, #tpu.memory_space<vmem>>, vector<2x64xf32>,
    %c30_309 = arith.constant 30 : index
    %c0_310 = arith.constant 0 : index
    %221 = vector.load %arg7[%c30_309, %c0_310] : memref<50x128xf32, #tpu.memory_space<vmem>>, vector<2x64xf32>
    %c6_311 = arith.constant 6 : index
    %c0_312 = arith.constant 0 : index
    %222 = vector.load %arg8[%c6_311, %c0_312] : memref<8x1024xf32, #tpu.memory_space<vmem>>, vector<2x64xf32>
    tpu.vector_store %arg8[%c6_311, %c0_312], %221 {strides = array<i32>} : memref<8x1024xf32, #tpu.memory_space<vmem>>, vector<2x64xf32>,
    %c31_313 = arith.constant 31 : index
    %c0_314 = arith.constant 0 : index
    %223 = vector.load %arg7[%c31_313, %c0_314] : memref<50x128xf32, #tpu.memory_space<vmem>>, vector<2x64xf32>
    %c6_315 = arith.constant 6 : index
    %c64_316 = arith.constant 64 : index
    %224 = vector.load %arg8[%c6_315, %c64_316] : memref<8x1024xf32, #tpu.memory_space<vmem>>, vector<2x64xf32>
    tpu.vector_store %arg8[%c6_315, %c64_316], %223 {strides = array<i32>} : memref<8x1024xf32, #tpu.memory_space<vmem>>, vector<2x64xf32>,
    %c32_317 = arith.constant 32 : index
    %c0_318 = arith.constant 0 : index
    %225 = vector.load %arg7[%c32_317, %c0_318] : memref<50x128xf32, #tpu.memory_space<vmem>>, vector<2x64xf32>
    %c6_319 = arith.constant 6 : index
    %c128_320 = arith.constant 128 : index
    %226 = vector.load %arg8[%c6_319, %c128_320] : memref<8x1024xf32, #tpu.memory_space<vmem>>, vector<2x64xf32>
    tpu.vector_store %arg8[%c6_319, %c128_320], %225 {strides = array<i32>} : memref<8x1024xf32, #tpu.memory_space<vmem>>, vector<2x64xf32>,
    %c33_321 = arith.constant 33 : index
    %c0_322 = arith.constant 0 : index
    %227 = vector.load %arg7[%c33_321, %c0_322] : memref<50x128xf32, #tpu.memory_space<vmem>>, vector<2x64xf32>
    %c6_323 = arith.constant 6 : index
    %c192_324 = arith.constant 192 : index
    %228 = vector.load %arg8[%c6_323, %c192_324] : memref<8x1024xf32, #tpu.memory_space<vmem>>, vector<2x64xf32>
    tpu.vector_store %arg8[%c6_323, %c192_324], %227 {strides = array<i32>} : memref<8x1024xf32, #tpu.memory_space<vmem>>, vector<2x64xf32>,
    %c35_325 = arith.constant 35 : index
    %c0_326 = arith.constant 0 : index
    %229 = vector.load %arg7[%c35_325, %c0_326] : memref<50x128xf32, #tpu.memory_space<vmem>>, vector<2x64xf32>
    %c6_327 = arith.constant 6 : index
    %c256_328 = arith.constant 256 : index
    %230 = vector.load %arg8[%c6_327, %c256_328] : memref<8x1024xf32, #tpu.memory_space<vmem>>, vector<2x64xf32>
    tpu.vector_store %arg8[%c6_327, %c256_328], %229 {strides = array<i32>} : memref<8x1024xf32, #tpu.memory_space<vmem>>, vector<2x64xf32>,
    %c36_329 = arith.constant 36 : index
    %c0_330 = arith.constant 0 : index
    %231 = vector.load %arg7[%c36_329, %c0_330] : memref<50x128xf32, #tpu.memory_space<vmem>>, vector<2x64xf32>
    %c6_331 = arith.constant 6 : index
    %c320_332 = arith.constant 320 : index
    %232 = vector.load %arg8[%c6_331, %c320_332] : memref<8x1024xf32, #tpu.memory_space<vmem>>, vector<2x64xf32>
    tpu.vector_store %arg8[%c6_331, %c320_332], %231 {strides = array<i32>} : memref<8x1024xf32, #tpu.memory_space<vmem>>, vector<2x64xf32>,
    %c37_333 = arith.constant 37 : index
    %c0_334 = arith.constant 0 : index
    %233 = vector.load %arg7[%c37_333, %c0_334] : memref<50x128xf32, #tpu.memory_space<vmem>>, vector<2x64xf32>
    %c6_335 = arith.constant 6 : index
    %c384_336 = arith.constant 384 : index
    %234 = vector.load %arg8[%c6_335, %c384_336] : memref<8x1024xf32, #tpu.memory_space<vmem>>, vector<2x64xf32>
    tpu.vector_store %arg8[%c6_335, %c384_336], %233 {strides = array<i32>} : memref<8x1024xf32, #tpu.memory_space<vmem>>, vector<2x64xf32>,
    %c38_337 = arith.constant 38 : index
    %c0_338 = arith.constant 0 : index
    %235 = vector.load %arg7[%c38_337, %c0_338] : memref<50x128xf32, #tpu.memory_space<vmem>>, vector<2x64xf32>
    %c6_339 = arith.constant 6 : index
    %c448_340 = arith.constant 448 : index
    %236 = vector.load %arg8[%c6_339, %c448_340] : memref<8x1024xf32, #tpu.memory_space<vmem>>, vector<2x64xf32>
    tpu.vector_store %arg8[%c6_339, %c448_340], %235 {strides = array<i32>} : memref<8x1024xf32, #tpu.memory_space<vmem>>, vector<2x64xf32>,
    %c40_341 = arith.constant 40 : index
    %c0_342 = arith.constant 0 : index
    %237 = vector.load %arg7[%c40_341, %c0_342] : memref<50x128xf32, #tpu.memory_space<vmem>>, vector<2x64xf32>
    %c6_343 = arith.constant 6 : index
    %c512_344 = arith.constant 512 : index
    %238 = vector.load %arg8[%c6_343, %c512_344] : memref<8x1024xf32, #tpu.memory_space<vmem>>, vector<2x64xf32>
    tpu.vector_store %arg8[%c6_343, %c512_344], %237 {strides = array<i32>} : memref<8x1024xf32, #tpu.memory_space<vmem>>, vector<2x64xf32>,
    %c41_345 = arith.constant 41 : index
    %c0_346 = arith.constant 0 : index
    %239 = vector.load %arg7[%c41_345, %c0_346] : memref<50x128xf32, #tpu.memory_space<vmem>>, vector<2x64xf32>
    %c6_347 = arith.constant 6 : index
    %c576_348 = arith.constant 576 : index
    %240 = vector.load %arg8[%c6_347, %c576_348] : memref<8x1024xf32, #tpu.memory_space<vmem>>, vector<2x64xf32>
    tpu.vector_store %arg8[%c6_347, %c576_348], %239 {strides = array<i32>} : memref<8x1024xf32, #tpu.memory_space<vmem>>, vector<2x64xf32>,
    %c42_349 = arith.constant 42 : index
    %c0_350 = arith.constant 0 : index
    %241 = vector.load %arg7[%c42_349, %c0_350] : memref<50x128xf32, #tpu.memory_space<vmem>>, vector<2x64xf32>
    %c6_351 = arith.constant 6 : index
    %c640_352 = arith.constant 640 : index
    %242 = vector.load %arg8[%c6_351, %c640_352] : memref<8x1024xf32, #tpu.memory_space<vmem>>, vector<2x64xf32>
    tpu.vector_store %arg8[%c6_351, %c640_352], %241 {strides = array<i32>} : memref<8x1024xf32, #tpu.memory_space<vmem>>, vector<2x64xf32>,
    %c43_353 = arith.constant 43 : index
    %c0_354 = arith.constant 0 : index
    %243 = vector.load %arg7[%c43_353, %c0_354] : memref<50x128xf32, #tpu.memory_space<vmem>>, vector<2x64xf32>
    %c6_355 = arith.constant 6 : index
    %c704_356 = arith.constant 704 : index
    %244 = vector.load %arg8[%c6_355, %c704_356] : memref<8x1024xf32, #tpu.memory_space<vmem>>, vector<2x64xf32>
    tpu.vector_store %arg8[%c6_355, %c704_356], %243 {strides = array<i32>} : memref<8x1024xf32, #tpu.memory_space<vmem>>, vector<2x64xf32>,
    %c45 = arith.constant 45 : index
    %c0_357 = arith.constant 0 : index
    %245 = vector.load %arg7[%c45, %c0_357] : memref<50x128xf32, #tpu.memory_space<vmem>>, vector<2x64xf32>
    %c6_358 = arith.constant 6 : index
    %c768_359 = arith.constant 768 : index
    %246 = vector.load %arg8[%c6_358, %c768_359] : memref<8x1024xf32, #tpu.memory_space<vmem>>, vector<2x64xf32>
    tpu.vector_store %arg8[%c6_358, %c768_359], %245 {strides = array<i32>} : memref<8x1024xf32, #tpu.memory_space<vmem>>, vector<2x64xf32>,
    %c46 = arith.constant 46 : index
    %c0_360 = arith.constant 0 : index
    %247 = vector.load %arg7[%c46, %c0_360] : memref<50x128xf32, #tpu.memory_space<vmem>>, vector<2x64xf32>
    %c6_361 = arith.constant 6 : index
    %c832_362 = arith.constant 832 : index
    %248 = vector.load %arg8[%c6_361, %c832_362] : memref<8x1024xf32, #tpu.memory_space<vmem>>, vector<2x64xf32>
    tpu.vector_store %arg8[%c6_361, %c832_362], %247 {strides = array<i32>} : memref<8x1024xf32, #tpu.memory_space<vmem>>, vector<2x64xf32>,
    %c47 = arith.constant 47 : index
    %c0_363 = arith.constant 0 : index
    %249 = vector.load %arg7[%c47, %c0_363] : memref<50x128xf32, #tpu.memory_space<vmem>>, vector<2x64xf32>
    %c6_364 = arith.constant 6 : index
    %c896_365 = arith.constant 896 : index
    %250 = vector.load %arg8[%c6_364, %c896_365] : memref<8x1024xf32, #tpu.memory_space<vmem>>, vector<2x64xf32>
    tpu.vector_store %arg8[%c6_364, %c896_365], %249 {strides = array<i32>} : memref<8x1024xf32, #tpu.memory_space<vmem>>, vector<2x64xf32>,
    %c48 = arith.constant 48 : index
    %c0_366 = arith.constant 0 : index
    %251 = vector.load %arg7[%c48, %c0_366] : memref<50x128xf32, #tpu.memory_space<vmem>>, vector<2x64xf32>
    %c6_367 = arith.constant 6 : index
    %c960_368 = arith.constant 960 : index
    %252 = vector.load %arg8[%c6_367, %c960_368] : memref<8x1024xf32, #tpu.memory_space<vmem>>, vector<2x64xf32>
    tpu.vector_store %arg8[%c6_367, %c960_368], %251 {strides = array<i32>} : memref<8x1024xf32, #tpu.memory_space<vmem>>, vector<2x64xf32>,
    %c0_369 = arith.constant 0 : index
    %c0_370 = arith.constant 0 : index
    %253 = vector.load %arg8[%c0_369, %c0_370] : memref<8x1024xf32, #tpu.memory_space<vmem>>, vector<8x1024xf32>
    %254 = arith.truncf %253 : vector<8x1024xf32> to vector<8x1024xbf16>
    %c768_371 = arith.constant 768 : index
    %c0_372 = arith.constant 0 : index
    %255 = vector.load %arg1[%c768_371, %c0_372] : memref<2816x128xbf16, #tpu.memory_space<vmem>>, vector<1024x128xbf16>
    %cst_373 = arith.constant dense<0.000000e+00> : vector<8x128xf32>
    %256 = tpu.matmul %254, %255, %cst_373 {dimension_numbers = #tpu.dot_dimension_numbers<[1], [0], [0], [1], [0, 0, 1, 1], [], []>} : vector<8x1024xbf16>, vector<1024x128xbf16>, vector<8x128xf32> -> vector<8x128xf32>
    %c5_374 = arith.constant 5 : index
    %c0_375 = arith.constant 0 : index
    %257 = vector.load %arg3[%c5_374, %c0_375] : memref<8x128xf32, #tpu.memory_space<vmem>>, vector<1x128xf32>
    %258 = vector.broadcast %257 : vector<1x128xf32> to vector<8x128xf32>
    %259 = arith.addf %256, %258 : vector<8x128xf32>
    %cst_376 = arith.constant 0.000000e+00 : f32
    %260 = vector.broadcast %cst_376 : f32 to vector<8x128xf32>
    %261 = arith.maximumf %259, %260 : vector<8x128xf32>
    %cst_377 = arith.constant 0.000000e+00 : f32
    %262 = vector.broadcast %cst_377 : f32 to vector<1x128xf32>
    %c12_378 = arith.constant 12 : index
    %c0_379 = arith.constant 0 : index
    %263 = vector.load %arg7[%c12_378, %c0_379] : memref<50x128xf32, #tpu.memory_space<vmem>>, vector<1x128xf32>
    tpu.vector_store %arg7[%c12_378, %c0_379], %262 {strides = array<i32>} : memref<50x128xf32, #tpu.memory_space<vmem>>, vector<1x128xf32>,
    %cst_380 = arith.constant 0.000000e+00 : f32
    %264 = vector.broadcast %cst_380 : f32 to vector<1x128xf32>
    %c37_381 = arith.constant 37 : index
    %c0_382 = arith.constant 0 : index
    %265 = vector.load %arg7[%c37_381, %c0_382] : memref<50x128xf32, #tpu.memory_space<vmem>>, vector<1x128xf32>
    tpu.vector_store %arg7[%c37_381, %c0_382], %264 {strides = array<i32>} : memref<50x128xf32, #tpu.memory_space<vmem>>, vector<1x128xf32>,
    %cst_383 = arith.constant 0.000000e+00 : f32
    %266 = vector.broadcast %cst_383 : f32 to vector<1x128xf32>
    %267 = vector.extract_strided_slice %261 {offsets = [0, 0], sizes = [1, 128], strides = [1, 1]} : vector<8x128xf32> to vector<1x128xf32>
    %268 = vector.extract_strided_slice %261 {offsets = [1, 0], sizes = [1, 128], strides = [1, 1]} : vector<8x128xf32> to vector<1x128xf32>
    %269 = tpu.concatenate %267, %266, %268 in 0 : vector<1x128xf32>, vector<1x128xf32>, vector<1x128xf32> -> vector<3x128xf32>
    %c6_384 = arith.constant 6 : index
    %c0_385 = arith.constant 0 : index
    %270 = vector.load %arg7[%c6_384, %c0_385] : memref<50x128xf32, #tpu.memory_space<vmem>>, vector<3x128xf32>
    tpu.vector_store %arg7[%c6_384, %c0_385], %269 {strides = array<i32>} : memref<50x128xf32, #tpu.memory_space<vmem>>, vector<3x128xf32>,
    %271 = vector.extract_strided_slice %261 {offsets = [2, 0], sizes = [1, 128], strides = [1, 1]} : vector<8x128xf32> to vector<1x128xf32>
    %272 = vector.extract_strided_slice %261 {offsets = [3, 0], sizes = [1, 128], strides = [1, 1]} : vector<8x128xf32> to vector<1x128xf32>
    %273 = tpu.concatenate %271, %266, %272 in 0 : vector<1x128xf32>, vector<1x128xf32>, vector<1x128xf32> -> vector<3x128xf32>
    %c16_386 = arith.constant 16 : index
    %c0_387 = arith.constant 0 : index
    %274 = vector.load %arg7[%c16_386, %c0_387] : memref<50x128xf32, #tpu.memory_space<vmem>>, vector<3x128xf32>
    tpu.vector_store %arg7[%c16_386, %c0_387], %273 {strides = array<i32>} : memref<50x128xf32, #tpu.memory_space<vmem>>, vector<3x128xf32>,
    %275 = vector.extract_strided_slice %261 {offsets = [4, 0], sizes = [1, 128], strides = [1, 1]} : vector<8x128xf32> to vector<1x128xf32>
    %276 = vector.extract_strided_slice %261 {offsets = [5, 0], sizes = [1, 128], strides = [1, 1]} : vector<8x128xf32> to vector<1x128xf32>
    %277 = tpu.concatenate %275, %266, %276 in 0 : vector<1x128xf32>, vector<1x128xf32>, vector<1x128xf32> -> vector<3x128xf32>
    %c31_388 = arith.constant 31 : index
    %c0_389 = arith.constant 0 : index
    %278 = vector.load %arg7[%c31_388, %c0_389] : memref<50x128xf32, #tpu.memory_space<vmem>>, vector<3x128xf32>
    tpu.vector_store %arg7[%c31_388, %c0_389], %277 {strides = array<i32>} : memref<50x128xf32, #tpu.memory_space<vmem>>, vector<3x128xf32>,
    %279 = vector.extract_strided_slice %261 {offsets = [6, 0], sizes = [1, 128], strides = [1, 1]} : vector<8x128xf32> to vector<1x128xf32>
    %280 = vector.extract_strided_slice %261 {offsets = [7, 0], sizes = [1, 128], strides = [1, 1]} : vector<8x128xf32> to vector<1x128xf32>
    %281 = tpu.concatenate %279, %266, %280 in 0 : vector<1x128xf32>, vector<1x128xf32>, vector<1x128xf32> -> vector<3x128xf32>
    %c41_390 = arith.constant 41 : index
    %c0_391 = arith.constant 0 : index
    %282 = vector.load %arg7[%c41_390, %c0_391] : memref<50x128xf32, #tpu.memory_space<vmem>>, vector<3x128xf32>
    tpu.vector_store %arg7[%c41_390, %c0_391], %281 {strides = array<i32>} : memref<50x128xf32, #tpu.memory_space<vmem>>, vector<3x128xf32>,
    %cst_392 = arith.constant 0.000000e+00 : f32
    %283 = vector.broadcast %cst_392 : f32 to vector<18x64xf32>
    %c0_393 = arith.constant 0 : index
    %c576_394 = arith.constant 576 : index
    %284 = vector.load %arg9[%c0_393, %c576_394] : memref<18x640xf32, #tpu.memory_space<vmem>>, vector<18x64xf32>
    tpu.vector_store %arg9[%c0_393, %c576_394], %283 {strides = array<i32>} : memref<18x640xf32, #tpu.memory_space<vmem>>, vector<18x64xf32>,
    %c0_395 = arith.constant 0 : index
    %c0_396 = arith.constant 0 : index
    %285 = vector.load %arg7[%c0_395, %c0_396] : memref<50x128xf32, #tpu.memory_space<vmem>>, vector<3x64xf32>
    %c0_397 = arith.constant 0 : index
    %c0_398 = arith.constant 0 : index
    %286 = vector.load %arg9[%c0_397, %c0_398] : memref<18x640xf32, #tpu.memory_space<vmem>>, vector<3x64xf32>
    tpu.vector_store %arg9[%c0_397, %c0_398], %285 {strides = array<i32>} : memref<18x640xf32, #tpu.memory_space<vmem>>, vector<3x64xf32>,
    %c1_399 = arith.constant 1 : index
    %c0_400 = arith.constant 0 : index
    %287 = vector.load %arg7[%c1_399, %c0_400] : memref<50x128xf32, #tpu.memory_space<vmem>>, vector<3x64xf32>
    %c0_401 = arith.constant 0 : index
    %c64_402 = arith.constant 64 : index
    %288 = vector.load %arg9[%c0_401, %c64_402] : memref<18x640xf32, #tpu.memory_space<vmem>>, vector<3x64xf32>
    tpu.vector_store %arg9[%c0_401, %c64_402], %287 {strides = array<i32>} : memref<18x640xf32, #tpu.memory_space<vmem>>, vector<3x64xf32>,
    %c2_403 = arith.constant 2 : index
    %c0_404 = arith.constant 0 : index
    %289 = vector.load %arg7[%c2_403, %c0_404] : memref<50x128xf32, #tpu.memory_space<vmem>>, vector<3x64xf32>
    %c0_405 = arith.constant 0 : index
    %c128_406 = arith.constant 128 : index
    %290 = vector.load %arg9[%c0_405, %c128_406] : memref<18x640xf32, #tpu.memory_space<vmem>>, vector<3x64xf32>
    tpu.vector_store %arg9[%c0_405, %c128_406], %289 {strides = array<i32>} : memref<18x640xf32, #tpu.memory_space<vmem>>, vector<3x64xf32>,
    %c5_407 = arith.constant 5 : index
    %c0_408 = arith.constant 0 : index
    %291 = vector.load %arg7[%c5_407, %c0_408] : memref<50x128xf32, #tpu.memory_space<vmem>>, vector<3x64xf32>
    %c0_409 = arith.constant 0 : index
    %c192_410 = arith.constant 192 : index
    %292 = vector.load %arg9[%c0_409, %c192_410] : memref<18x640xf32, #tpu.memory_space<vmem>>, vector<3x64xf32>
    tpu.vector_store %arg9[%c0_409, %c192_410], %291 {strides = array<i32>} : memref<18x640xf32, #tpu.memory_space<vmem>>, vector<3x64xf32>,
    %c6_411 = arith.constant 6 : index
    %c0_412 = arith.constant 0 : index
    %293 = vector.load %arg7[%c6_411, %c0_412] : memref<50x128xf32, #tpu.memory_space<vmem>>, vector<3x64xf32>
    %c0_413 = arith.constant 0 : index
    %c256_414 = arith.constant 256 : index
    %294 = vector.load %arg9[%c0_413, %c256_414] : memref<18x640xf32, #tpu.memory_space<vmem>>, vector<3x64xf32>
    tpu.vector_store %arg9[%c0_413, %c256_414], %293 {strides = array<i32>} : memref<18x640xf32, #tpu.memory_space<vmem>>, vector<3x64xf32>,
    %c7_415 = arith.constant 7 : index
    %c0_416 = arith.constant 0 : index
    %295 = vector.load %arg7[%c7_415, %c0_416] : memref<50x128xf32, #tpu.memory_space<vmem>>, vector<3x64xf32>
    %c0_417 = arith.constant 0 : index
    %c320_418 = arith.constant 320 : index
    %296 = vector.load %arg9[%c0_417, %c320_418] : memref<18x640xf32, #tpu.memory_space<vmem>>, vector<3x64xf32>
    tpu.vector_store %arg9[%c0_417, %c320_418], %295 {strides = array<i32>} : memref<18x640xf32, #tpu.memory_space<vmem>>, vector<3x64xf32>,
    %c10_419 = arith.constant 10 : index
    %c0_420 = arith.constant 0 : index
    %297 = vector.load %arg7[%c10_419, %c0_420] : memref<50x128xf32, #tpu.memory_space<vmem>>, vector<3x64xf32>
    %c0_421 = arith.constant 0 : index
    %c384_422 = arith.constant 384 : index
    %298 = vector.load %arg9[%c0_421, %c384_422] : memref<18x640xf32, #tpu.memory_space<vmem>>, vector<3x64xf32>
    tpu.vector_store %arg9[%c0_421, %c384_422], %297 {strides = array<i32>} : memref<18x640xf32, #tpu.memory_space<vmem>>, vector<3x64xf32>,
    %c11_423 = arith.constant 11 : index
    %c0_424 = arith.constant 0 : index
    %299 = vector.load %arg7[%c11_423, %c0_424] : memref<50x128xf32, #tpu.memory_space<vmem>>, vector<3x64xf32>
    %c0_425 = arith.constant 0 : index
    %c448_426 = arith.constant 448 : index
    %300 = vector.load %arg9[%c0_425, %c448_426] : memref<18x640xf32, #tpu.memory_space<vmem>>, vector<3x64xf32>
    tpu.vector_store %arg9[%c0_425, %c448_426], %299 {strides = array<i32>} : memref<18x640xf32, #tpu.memory_space<vmem>>, vector<3x64xf32>,
    %c12_427 = arith.constant 12 : index
    %c0_428 = arith.constant 0 : index
    %301 = vector.load %arg7[%c12_427, %c0_428] : memref<50x128xf32, #tpu.memory_space<vmem>>, vector<3x64xf32>
    %c0_429 = arith.constant 0 : index
    %c512_430 = arith.constant 512 : index
    %302 = vector.load %arg9[%c0_429, %c512_430] : memref<18x640xf32, #tpu.memory_space<vmem>>, vector<3x64xf32>
    tpu.vector_store %arg9[%c0_429, %c512_430], %301 {strides = array<i32>} : memref<18x640xf32, #tpu.memory_space<vmem>>, vector<3x64xf32>,
    %c5_431 = arith.constant 5 : index
    %c0_432 = arith.constant 0 : index
    %303 = vector.load %arg7[%c5_431, %c0_432] : memref<50x128xf32, #tpu.memory_space<vmem>>, vector<3x64xf32>
    %c3_433 = arith.constant 3 : index
    %c0_434 = arith.constant 0 : index
    %304 = vector.load %arg9[%c3_433, %c0_434] : memref<18x640xf32, #tpu.memory_space<vmem>>, vector<3x64xf32>
    tpu.vector_store %arg9[%c3_433, %c0_434], %303 {strides = array<i32>} : memref<18x640xf32, #tpu.memory_space<vmem>>, vector<3x64xf32>,
    %c6_435 = arith.constant 6 : index
    %c0_436 = arith.constant 0 : index
    %305 = vector.load %arg7[%c6_435, %c0_436] : memref<50x128xf32, #tpu.memory_space<vmem>>, vector<3x64xf32>
    %c3_437 = arith.constant 3 : index
    %c64_438 = arith.constant 64 : index
    %306 = vector.load %arg9[%c3_437, %c64_438] : memref<18x640xf32, #tpu.memory_space<vmem>>, vector<3x64xf32>
    tpu.vector_store %arg9[%c3_437, %c64_438], %305 {strides = array<i32>} : memref<18x640xf32, #tpu.memory_space<vmem>>, vector<3x64xf32>,
    %c7_439 = arith.constant 7 : index
    %c0_440 = arith.constant 0 : index
    %307 = vector.load %arg7[%c7_439, %c0_440] : memref<50x128xf32, #tpu.memory_space<vmem>>, vector<3x64xf32>
    %c3_441 = arith.constant 3 : index
    %c128_442 = arith.constant 128 : index
    %308 = vector.load %arg9[%c3_441, %c128_442] : memref<18x640xf32, #tpu.memory_space<vmem>>, vector<3x64xf32>
    tpu.vector_store %arg9[%c3_441, %c128_442], %307 {strides = array<i32>} : memref<18x640xf32, #tpu.memory_space<vmem>>, vector<3x64xf32>,
    %c10_443 = arith.constant 10 : index
    %c0_444 = arith.constant 0 : index
    %309 = vector.load %arg7[%c10_443, %c0_444] : memref<50x128xf32, #tpu.memory_space<vmem>>, vector<3x64xf32>
    %c3_445 = arith.constant 3 : index
    %c192_446 = arith.constant 192 : index
    %310 = vector.load %arg9[%c3_445, %c192_446] : memref<18x640xf32, #tpu.memory_space<vmem>>, vector<3x64xf32>
    tpu.vector_store %arg9[%c3_445, %c192_446], %309 {strides = array<i32>} : memref<18x640xf32, #tpu.memory_space<vmem>>, vector<3x64xf32>,
    %c11_447 = arith.constant 11 : index
    %c0_448 = arith.constant 0 : index
    %311 = vector.load %arg7[%c11_447, %c0_448] : memref<50x128xf32, #tpu.memory_space<vmem>>, vector<3x64xf32>
    %c3_449 = arith.constant 3 : index
    %c256_450 = arith.constant 256 : index
    %312 = vector.load %arg9[%c3_449, %c256_450] : memref<18x640xf32, #tpu.memory_space<vmem>>, vector<3x64xf32>
    tpu.vector_store %arg9[%c3_449, %c256_450], %311 {strides = array<i32>} : memref<18x640xf32, #tpu.memory_space<vmem>>, vector<3x64xf32>,
    %c12_451 = arith.constant 12 : index
    %c0_452 = arith.constant 0 : index
    %313 = vector.load %arg7[%c12_451, %c0_452] : memref<50x128xf32, #tpu.memory_space<vmem>>, vector<3x64xf32>
    %c3_453 = arith.constant 3 : index
    %c320_454 = arith.constant 320 : index
    %314 = vector.load %arg9[%c3_453, %c320_454] : memref<18x640xf32, #tpu.memory_space<vmem>>, vector<3x64xf32>
    tpu.vector_store %arg9[%c3_453, %c320_454], %313 {strides = array<i32>} : memref<18x640xf32, #tpu.memory_space<vmem>>, vector<3x64xf32>,
    %c15_455 = arith.constant 15 : index
    %c0_456 = arith.constant 0 : index
    %315 = vector.load %arg7[%c15_455, %c0_456] : memref<50x128xf32, #tpu.memory_space<vmem>>, vector<3x64xf32>
    %c3_457 = arith.constant 3 : index
    %c384_458 = arith.constant 384 : index
    %316 = vector.load %arg9[%c3_457, %c384_458] : memref<18x640xf32, #tpu.memory_space<vmem>>, vector<3x64xf32>
    tpu.vector_store %arg9[%c3_457, %c384_458], %315 {strides = array<i32>} : memref<18x640xf32, #tpu.memory_space<vmem>>, vector<3x64xf32>,
    %c16_459 = arith.constant 16 : index
    %c0_460 = arith.constant 0 : index
    %317 = vector.load %arg7[%c16_459, %c0_460] : memref<50x128xf32, #tpu.memory_space<vmem>>, vector<3x64xf32>
    %c3_461 = arith.constant 3 : index
    %c448_462 = arith.constant 448 : index
    %318 = vector.load %arg9[%c3_461, %c448_462] : memref<18x640xf32, #tpu.memory_space<vmem>>, vector<3x64xf32>
    tpu.vector_store %arg9[%c3_461, %c448_462], %317 {strides = array<i32>} : memref<18x640xf32, #tpu.memory_space<vmem>>, vector<3x64xf32>,
    %c17_463 = arith.constant 17 : index
    %c0_464 = arith.constant 0 : index
    %319 = vector.load %arg7[%c17_463, %c0_464] : memref<50x128xf32, #tpu.memory_space<vmem>>, vector<3x64xf32>
    %c3_465 = arith.constant 3 : index
    %c512_466 = arith.constant 512 : index
    %320 = vector.load %arg9[%c3_465, %c512_466] : memref<18x640xf32, #tpu.memory_space<vmem>>, vector<3x64xf32>
    tpu.vector_store %arg9[%c3_465, %c512_466], %319 {strides = array<i32>} : memref<18x640xf32, #tpu.memory_space<vmem>>, vector<3x64xf32>,
    %c10_467 = arith.constant 10 : index
    %c0_468 = arith.constant 0 : index
    %321 = vector.load %arg7[%c10_467, %c0_468] : memref<50x128xf32, #tpu.memory_space<vmem>>, vector<3x64xf32>
    %c6_469 = arith.constant 6 : index
    %c0_470 = arith.constant 0 : index
    %322 = vector.load %arg9[%c6_469, %c0_470] : memref<18x640xf32, #tpu.memory_space<vmem>>, vector<3x64xf32>
    tpu.vector_store %arg9[%c6_469, %c0_470], %321 {strides = array<i32>} : memref<18x640xf32, #tpu.memory_space<vmem>>, vector<3x64xf32>,
    %c11_471 = arith.constant 11 : index
    %c0_472 = arith.constant 0 : index
    %323 = vector.load %arg7[%c11_471, %c0_472] : memref<50x128xf32, #tpu.memory_space<vmem>>, vector<3x64xf32>
    %c6_473 = arith.constant 6 : index
    %c64_474 = arith.constant 64 : index
    %324 = vector.load %arg9[%c6_473, %c64_474] : memref<18x640xf32, #tpu.memory_space<vmem>>, vector<3x64xf32>
    tpu.vector_store %arg9[%c6_473, %c64_474], %323 {strides = array<i32>} : memref<18x640xf32, #tpu.memory_space<vmem>>, vector<3x64xf32>,
    %c12_475 = arith.constant 12 : index
    %c0_476 = arith.constant 0 : index
    %325 = vector.load %arg7[%c12_475, %c0_476] : memref<50x128xf32, #tpu.memory_space<vmem>>, vector<3x64xf32>
    %c6_477 = arith.constant 6 : index
    %c128_478 = arith.constant 128 : index
    %326 = vector.load %arg9[%c6_477, %c128_478] : memref<18x640xf32, #tpu.memory_space<vmem>>, vector<3x64xf32>
    tpu.vector_store %arg9[%c6_477, %c128_478], %325 {strides = array<i32>} : memref<18x640xf32, #tpu.memory_space<vmem>>, vector<3x64xf32>,
    %c15_479 = arith.constant 15 : index
    %c0_480 = arith.constant 0 : index
    %327 = vector.load %arg7[%c15_479, %c0_480] : memref<50x128xf32, #tpu.memory_space<vmem>>, vector<3x64xf32>
    %c6_481 = arith.constant 6 : index
    %c192_482 = arith.constant 192 : index
    %328 = vector.load %arg9[%c6_481, %c192_482] : memref<18x640xf32, #tpu.memory_space<vmem>>, vector<3x64xf32>
    tpu.vector_store %arg9[%c6_481, %c192_482], %327 {strides = array<i32>} : memref<18x640xf32, #tpu.memory_space<vmem>>, vector<3x64xf32>,
    %c16_483 = arith.constant 16 : index
    %c0_484 = arith.constant 0 : index
    %329 = vector.load %arg7[%c16_483, %c0_484] : memref<50x128xf32, #tpu.memory_space<vmem>>, vector<3x64xf32>
    %c6_485 = arith.constant 6 : index
    %c256_486 = arith.constant 256 : index
    %330 = vector.load %arg9[%c6_485, %c256_486] : memref<18x640xf32, #tpu.memory_space<vmem>>, vector<3x64xf32>
    tpu.vector_store %arg9[%c6_485, %c256_486], %329 {strides = array<i32>} : memref<18x640xf32, #tpu.memory_space<vmem>>, vector<3x64xf32>,
    %c17_487 = arith.constant 17 : index
    %c0_488 = arith.constant 0 : index
    %331 = vector.load %arg7[%c17_487, %c0_488] : memref<50x128xf32, #tpu.memory_space<vmem>>, vector<3x64xf32>
    %c6_489 = arith.constant 6 : index
    %c320_490 = arith.constant 320 : index
    %332 = vector.load %arg9[%c6_489, %c320_490] : memref<18x640xf32, #tpu.memory_space<vmem>>, vector<3x64xf32>
    tpu.vector_store %arg9[%c6_489, %c320_490], %331 {strides = array<i32>} : memref<18x640xf32, #tpu.memory_space<vmem>>, vector<3x64xf32>,
    %c20_491 = arith.constant 20 : index
    %c0_492 = arith.constant 0 : index
    %333 = vector.load %arg7[%c20_491, %c0_492] : memref<50x128xf32, #tpu.memory_space<vmem>>, vector<3x64xf32>
    %c6_493 = arith.constant 6 : index
    %c384_494 = arith.constant 384 : index
    %334 = vector.load %arg9[%c6_493, %c384_494] : memref<18x640xf32, #tpu.memory_space<vmem>>, vector<3x64xf32>
    tpu.vector_store %arg9[%c6_493, %c384_494], %333 {strides = array<i32>} : memref<18x640xf32, #tpu.memory_space<vmem>>, vector<3x64xf32>,
    %c21_495 = arith.constant 21 : index
    %c0_496 = arith.constant 0 : index
    %335 = vector.load %arg7[%c21_495, %c0_496] : memref<50x128xf32, #tpu.memory_space<vmem>>, vector<3x64xf32>
    %c6_497 = arith.constant 6 : index
    %c448_498 = arith.constant 448 : index
    %336 = vector.load %arg9[%c6_497, %c448_498] : memref<18x640xf32, #tpu.memory_space<vmem>>, vector<3x64xf32>
    tpu.vector_store %arg9[%c6_497, %c448_498], %335 {strides = array<i32>} : memref<18x640xf32, #tpu.memory_space<vmem>>, vector<3x64xf32>,
    %c22_499 = arith.constant 22 : index
    %c0_500 = arith.constant 0 : index
    %337 = vector.load %arg7[%c22_499, %c0_500] : memref<50x128xf32, #tpu.memory_space<vmem>>, vector<3x64xf32>
    %c6_501 = arith.constant 6 : index
    %c512_502 = arith.constant 512 : index
    %338 = vector.load %arg9[%c6_501, %c512_502] : memref<18x640xf32, #tpu.memory_space<vmem>>, vector<3x64xf32>
    tpu.vector_store %arg9[%c6_501, %c512_502], %337 {strides = array<i32>} : memref<18x640xf32, #tpu.memory_space<vmem>>, vector<3x64xf32>,
    %c25_503 = arith.constant 25 : index
    %c0_504 = arith.constant 0 : index
    %339 = vector.load %arg7[%c25_503, %c0_504] : memref<50x128xf32, #tpu.memory_space<vmem>>, vector<3x64xf32>
    %c9_505 = arith.constant 9 : index
    %c0_506 = arith.constant 0 : index
    %340 = vector.load %arg9[%c9_505, %c0_506] : memref<18x640xf32, #tpu.memory_space<vmem>>, vector<3x64xf32>
    tpu.vector_store %arg9[%c9_505, %c0_506], %339 {strides = array<i32>} : memref<18x640xf32, #tpu.memory_space<vmem>>, vector<3x64xf32>,
    %c26_507 = arith.constant 26 : index
    %c0_508 = arith.constant 0 : index
    %341 = vector.load %arg7[%c26_507, %c0_508] : memref<50x128xf32, #tpu.memory_space<vmem>>, vector<3x64xf32>
    %c9_509 = arith.constant 9 : index
    %c64_510 = arith.constant 64 : index
    %342 = vector.load %arg9[%c9_509, %c64_510] : memref<18x640xf32, #tpu.memory_space<vmem>>, vector<3x64xf32>
    tpu.vector_store %arg9[%c9_509, %c64_510], %341 {strides = array<i32>} : memref<18x640xf32, #tpu.memory_space<vmem>>, vector<3x64xf32>,
    %c27_511 = arith.constant 27 : index
    %c0_512 = arith.constant 0 : index
    %343 = vector.load %arg7[%c27_511, %c0_512] : memref<50x128xf32, #tpu.memory_space<vmem>>, vector<3x64xf32>
    %c9_513 = arith.constant 9 : index
    %c128_514 = arith.constant 128 : index
    %344 = vector.load %arg9[%c9_513, %c128_514] : memref<18x640xf32, #tpu.memory_space<vmem>>, vector<3x64xf32>
    tpu.vector_store %arg9[%c9_513, %c128_514], %343 {strides = array<i32>} : memref<18x640xf32, #tpu.memory_space<vmem>>, vector<3x64xf32>,
    %c30_515 = arith.constant 30 : index
    %c0_516 = arith.constant 0 : index
    %345 = vector.load %arg7[%c30_515, %c0_516] : memref<50x128xf32, #tpu.memory_space<vmem>>, vector<3x64xf32>
    %c9_517 = arith.constant 9 : index
    %c192_518 = arith.constant 192 : index
    %346 = vector.load %arg9[%c9_517, %c192_518] : memref<18x640xf32, #tpu.memory_space<vmem>>, vector<3x64xf32>
    tpu.vector_store %arg9[%c9_517, %c192_518], %345 {strides = array<i32>} : memref<18x640xf32, #tpu.memory_space<vmem>>, vector<3x64xf32>,
    %c31_519 = arith.constant 31 : index
    %c0_520 = arith.constant 0 : index
    %347 = vector.load %arg7[%c31_519, %c0_520] : memref<50x128xf32, #tpu.memory_space<vmem>>, vector<3x64xf32>
    %c9_521 = arith.constant 9 : index
    %c256_522 = arith.constant 256 : index
    %348 = vector.load %arg9[%c9_521, %c256_522] : memref<18x640xf32, #tpu.memory_space<vmem>>, vector<3x64xf32>
    tpu.vector_store %arg9[%c9_521, %c256_522], %347 {strides = array<i32>} : memref<18x640xf32, #tpu.memory_space<vmem>>, vector<3x64xf32>,
    %c32_523 = arith.constant 32 : index
    %c0_524 = arith.constant 0 : index
    %349 = vector.load %arg7[%c32_523, %c0_524] : memref<50x128xf32, #tpu.memory_space<vmem>>, vector<3x64xf32>
    %c9_525 = arith.constant 9 : index
    %c320_526 = arith.constant 320 : index
    %350 = vector.load %arg9[%c9_525, %c320_526] : memref<18x640xf32, #tpu.memory_space<vmem>>, vector<3x64xf32>
    tpu.vector_store %arg9[%c9_525, %c320_526], %349 {strides = array<i32>} : memref<18x640xf32, #tpu.memory_space<vmem>>, vector<3x64xf32>,
    %c35_527 = arith.constant 35 : index
    %c0_528 = arith.constant 0 : index
    %351 = vector.load %arg7[%c35_527, %c0_528] : memref<50x128xf32, #tpu.memory_space<vmem>>, vector<3x64xf32>
    %c9_529 = arith.constant 9 : index
    %c384_530 = arith.constant 384 : index
    %352 = vector.load %arg9[%c9_529, %c384_530] : memref<18x640xf32, #tpu.memory_space<vmem>>, vector<3x64xf32>
    tpu.vector_store %arg9[%c9_529, %c384_530], %351 {strides = array<i32>} : memref<18x640xf32, #tpu.memory_space<vmem>>, vector<3x64xf32>,
    %c36_531 = arith.constant 36 : index
    %c0_532 = arith.constant 0 : index
    %353 = vector.load %arg7[%c36_531, %c0_532] : memref<50x128xf32, #tpu.memory_space<vmem>>, vector<3x64xf32>
    %c9_533 = arith.constant 9 : index
    %c448_534 = arith.constant 448 : index
    %354 = vector.load %arg9[%c9_533, %c448_534] : memref<18x640xf32, #tpu.memory_space<vmem>>, vector<3x64xf32>
    tpu.vector_store %arg9[%c9_533, %c448_534], %353 {strides = array<i32>} : memref<18x640xf32, #tpu.memory_space<vmem>>, vector<3x64xf32>,
    %c37_535 = arith.constant 37 : index
    %c0_536 = arith.constant 0 : index
    %355 = vector.load %arg7[%c37_535, %c0_536] : memref<50x128xf32, #tpu.memory_space<vmem>>, vector<3x64xf32>
    %c9_537 = arith.constant 9 : index
    %c512_538 = arith.constant 512 : index
    %356 = vector.load %arg9[%c9_537, %c512_538] : memref<18x640xf32, #tpu.memory_space<vmem>>, vector<3x64xf32>
    tpu.vector_store %arg9[%c9_537, %c512_538], %355 {strides = array<i32>} : memref<18x640xf32, #tpu.memory_space<vmem>>, vector<3x64xf32>,
    %c30_539 = arith.constant 30 : index
    %c0_540 = arith.constant 0 : index
    %357 = vector.load %arg7[%c30_539, %c0_540] : memref<50x128xf32, #tpu.memory_space<vmem>>, vector<3x64xf32>
    %c12_541 = arith.constant 12 : index
    %c0_542 = arith.constant 0 : index
    %358 = vector.load %arg9[%c12_541, %c0_542] : memref<18x640xf32, #tpu.memory_space<vmem>>, vector<3x64xf32>
    tpu.vector_store %arg9[%c12_541, %c0_542], %357 {strides = array<i32>} : memref<18x640xf32, #tpu.memory_space<vmem>>, vector<3x64xf32>,
    %c31_543 = arith.constant 31 : index
    %c0_544 = arith.constant 0 : index
    %359 = vector.load %arg7[%c31_543, %c0_544] : memref<50x128xf32, #tpu.memory_space<vmem>>, vector<3x64xf32>
    %c12_545 = arith.constant 12 : index
    %c64_546 = arith.constant 64 : index
    %360 = vector.load %arg9[%c12_545, %c64_546] : memref<18x640xf32, #tpu.memory_space<vmem>>, vector<3x64xf32>
    tpu.vector_store %arg9[%c12_545, %c64_546], %359 {strides = array<i32>} : memref<18x640xf32, #tpu.memory_space<vmem>>, vector<3x64xf32>,
    %c32_547 = arith.constant 32 : index
    %c0_548 = arith.constant 0 : index
    %361 = vector.load %arg7[%c32_547, %c0_548] : memref<50x128xf32, #tpu.memory_space<vmem>>, vector<3x64xf32>
    %c12_549 = arith.constant 12 : index
    %c128_550 = arith.constant 128 : index
    %362 = vector.load %arg9[%c12_549, %c128_550] : memref<18x640xf32, #tpu.memory_space<vmem>>, vector<3x64xf32>
    tpu.vector_store %arg9[%c12_549, %c128_550], %361 {strides = array<i32>} : memref<18x640xf32, #tpu.memory_space<vmem>>, vector<3x64xf32>,
    %c35_551 = arith.constant 35 : index
    %c0_552 = arith.constant 0 : index
    %363 = vector.load %arg7[%c35_551, %c0_552] : memref<50x128xf32, #tpu.memory_space<vmem>>, vector<3x64xf32>
    %c12_553 = arith.constant 12 : index
    %c192_554 = arith.constant 192 : index
    %364 = vector.load %arg9[%c12_553, %c192_554] : memref<18x640xf32, #tpu.memory_space<vmem>>, vector<3x64xf32>
    tpu.vector_store %arg9[%c12_553, %c192_554], %363 {strides = array<i32>} : memref<18x640xf32, #tpu.memory_space<vmem>>, vector<3x64xf32>,
    %c36_555 = arith.constant 36 : index
    %c0_556 = arith.constant 0 : index
    %365 = vector.load %arg7[%c36_555, %c0_556] : memref<50x128xf32, #tpu.memory_space<vmem>>, vector<3x64xf32>
    %c12_557 = arith.constant 12 : index
    %c256_558 = arith.constant 256 : index
    %366 = vector.load %arg9[%c12_557, %c256_558] : memref<18x640xf32, #tpu.memory_space<vmem>>, vector<3x64xf32>
    tpu.vector_store %arg9[%c12_557, %c256_558], %365 {strides = array<i32>} : memref<18x640xf32, #tpu.memory_space<vmem>>, vector<3x64xf32>,
    %c37_559 = arith.constant 37 : index
    %c0_560 = arith.constant 0 : index
    %367 = vector.load %arg7[%c37_559, %c0_560] : memref<50x128xf32, #tpu.memory_space<vmem>>, vector<3x64xf32>
    %c12_561 = arith.constant 12 : index
    %c320_562 = arith.constant 320 : index
    %368 = vector.load %arg9[%c12_561, %c320_562] : memref<18x640xf32, #tpu.memory_space<vmem>>, vector<3x64xf32>
    tpu.vector_store %arg9[%c12_561, %c320_562], %367 {strides = array<i32>} : memref<18x640xf32, #tpu.memory_space<vmem>>, vector<3x64xf32>,
    %c40_563 = arith.constant 40 : index
    %c0_564 = arith.constant 0 : index
    %369 = vector.load %arg7[%c40_563, %c0_564] : memref<50x128xf32, #tpu.memory_space<vmem>>, vector<3x64xf32>
    %c12_565 = arith.constant 12 : index
    %c384_566 = arith.constant 384 : index
    %370 = vector.load %arg9[%c12_565, %c384_566] : memref<18x640xf32, #tpu.memory_space<vmem>>, vector<3x64xf32>
    tpu.vector_store %arg9[%c12_565, %c384_566], %369 {strides = array<i32>} : memref<18x640xf32, #tpu.memory_space<vmem>>, vector<3x64xf32>,
    %c41_567 = arith.constant 41 : index
    %c0_568 = arith.constant 0 : index
    %371 = vector.load %arg7[%c41_567, %c0_568] : memref<50x128xf32, #tpu.memory_space<vmem>>, vector<3x64xf32>
    %c12_569 = arith.constant 12 : index
    %c448_570 = arith.constant 448 : index
    %372 = vector.load %arg9[%c12_569, %c448_570] : memref<18x640xf32, #tpu.memory_space<vmem>>, vector<3x64xf32>
    tpu.vector_store %arg9[%c12_569, %c448_570], %371 {strides = array<i32>} : memref<18x640xf32, #tpu.memory_space<vmem>>, vector<3x64xf32>,
    %c42_571 = arith.constant 42 : index
    %c0_572 = arith.constant 0 : index
    %373 = vector.load %arg7[%c42_571, %c0_572] : memref<50x128xf32, #tpu.memory_space<vmem>>, vector<3x64xf32>
    %c12_573 = arith.constant 12 : index
    %c512_574 = arith.constant 512 : index
    %374 = vector.load %arg9[%c12_573, %c512_574] : memref<18x640xf32, #tpu.memory_space<vmem>>, vector<3x64xf32>
    tpu.vector_store %arg9[%c12_573, %c512_574], %373 {strides = array<i32>} : memref<18x640xf32, #tpu.memory_space<vmem>>, vector<3x64xf32>,
    %c35_575 = arith.constant 35 : index
    %c0_576 = arith.constant 0 : index
    %375 = vector.load %arg7[%c35_575, %c0_576] : memref<50x128xf32, #tpu.memory_space<vmem>>, vector<3x64xf32>
    %c15_577 = arith.constant 15 : index
    %c0_578 = arith.constant 0 : index
    %376 = vector.load %arg9[%c15_577, %c0_578] : memref<18x640xf32, #tpu.memory_space<vmem>>, vector<3x64xf32>
    tpu.vector_store %arg9[%c15_577, %c0_578], %375 {strides = array<i32>} : memref<18x640xf32, #tpu.memory_space<vmem>>, vector<3x64xf32>,
    %c36_579 = arith.constant 36 : index
    %c0_580 = arith.constant 0 : index
    %377 = vector.load %arg7[%c36_579, %c0_580] : memref<50x128xf32, #tpu.memory_space<vmem>>, vector<3x64xf32>
    %c15_581 = arith.constant 15 : index
    %c64_582 = arith.constant 64 : index
    %378 = vector.load %arg9[%c15_581, %c64_582] : memref<18x640xf32, #tpu.memory_space<vmem>>, vector<3x64xf32>
    tpu.vector_store %arg9[%c15_581, %c64_582], %377 {strides = array<i32>} : memref<18x640xf32, #tpu.memory_space<vmem>>, vector<3x64xf32>,
    %c37_583 = arith.constant 37 : index
    %c0_584 = arith.constant 0 : index
    %379 = vector.load %arg7[%c37_583, %c0_584] : memref<50x128xf32, #tpu.memory_space<vmem>>, vector<3x64xf32>
    %c15_585 = arith.constant 15 : index
    %c128_586 = arith.constant 128 : index
    %380 = vector.load %arg9[%c15_585, %c128_586] : memref<18x640xf32, #tpu.memory_space<vmem>>, vector<3x64xf32>
    tpu.vector_store %arg9[%c15_585, %c128_586], %379 {strides = array<i32>} : memref<18x640xf32, #tpu.memory_space<vmem>>, vector<3x64xf32>,
    %c40_587 = arith.constant 40 : index
    %c0_588 = arith.constant 0 : index
    %381 = vector.load %arg7[%c40_587, %c0_588] : memref<50x128xf32, #tpu.memory_space<vmem>>, vector<3x64xf32>
    %c15_589 = arith.constant 15 : index
    %c192_590 = arith.constant 192 : index
    %382 = vector.load %arg9[%c15_589, %c192_590] : memref<18x640xf32, #tpu.memory_space<vmem>>, vector<3x64xf32>
    tpu.vector_store %arg9[%c15_589, %c192_590], %381 {strides = array<i32>} : memref<18x640xf32, #tpu.memory_space<vmem>>, vector<3x64xf32>,
    %c41_591 = arith.constant 41 : index
    %c0_592 = arith.constant 0 : index
    %383 = vector.load %arg7[%c41_591, %c0_592] : memref<50x128xf32, #tpu.memory_space<vmem>>, vector<3x64xf32>
    %c15_593 = arith.constant 15 : index
    %c256_594 = arith.constant 256 : index
    %384 = vector.load %arg9[%c15_593, %c256_594] : memref<18x640xf32, #tpu.memory_space<vmem>>, vector<3x64xf32>
    tpu.vector_store %arg9[%c15_593, %c256_594], %383 {strides = array<i32>} : memref<18x640xf32, #tpu.memory_space<vmem>>, vector<3x64xf32>,
    %c42_595 = arith.constant 42 : index
    %c0_596 = arith.constant 0 : index
    %385 = vector.load %arg7[%c42_595, %c0_596] : memref<50x128xf32, #tpu.memory_space<vmem>>, vector<3x64xf32>
    %c15_597 = arith.constant 15 : index
    %c320_598 = arith.constant 320 : index
    %386 = vector.load %arg9[%c15_597, %c320_598] : memref<18x640xf32, #tpu.memory_space<vmem>>, vector<3x64xf32>
    tpu.vector_store %arg9[%c15_597, %c320_598], %385 {strides = array<i32>} : memref<18x640xf32, #tpu.memory_space<vmem>>, vector<3x64xf32>,
    %c45_599 = arith.constant 45 : index
    %c0_600 = arith.constant 0 : index
    %387 = vector.load %arg7[%c45_599, %c0_600] : memref<50x128xf32, #tpu.memory_space<vmem>>, vector<3x64xf32>
    %c15_601 = arith.constant 15 : index
    %c384_602 = arith.constant 384 : index
    %388 = vector.load %arg9[%c15_601, %c384_602] : memref<18x640xf32, #tpu.memory_space<vmem>>, vector<3x64xf32>
    tpu.vector_store %arg9[%c15_601, %c384_602], %387 {strides = array<i32>} : memref<18x640xf32, #tpu.memory_space<vmem>>, vector<3x64xf32>,
    %c46_603 = arith.constant 46 : index
    %c0_604 = arith.constant 0 : index
    %389 = vector.load %arg7[%c46_603, %c0_604] : memref<50x128xf32, #tpu.memory_space<vmem>>, vector<3x64xf32>
    %c15_605 = arith.constant 15 : index
    %c448_606 = arith.constant 448 : index
    %390 = vector.load %arg9[%c15_605, %c448_606] : memref<18x640xf32, #tpu.memory_space<vmem>>, vector<3x64xf32>
    tpu.vector_store %arg9[%c15_605, %c448_606], %389 {strides = array<i32>} : memref<18x640xf32, #tpu.memory_space<vmem>>, vector<3x64xf32>,
    %c47_607 = arith.constant 47 : index
    %c0_608 = arith.constant 0 : index
    %391 = vector.load %arg7[%c47_607, %c0_608] : memref<50x128xf32, #tpu.memory_space<vmem>>, vector<3x64xf32>
    %c15_609 = arith.constant 15 : index
    %c512_610 = arith.constant 512 : index
    %392 = vector.load %arg9[%c15_609, %c512_610] : memref<18x640xf32, #tpu.memory_space<vmem>>, vector<3x64xf32>
    tpu.vector_store %arg9[%c15_609, %c512_610], %391 {strides = array<i32>} : memref<18x640xf32, #tpu.memory_space<vmem>>, vector<3x64xf32>,
    %c0_611 = arith.constant 0 : index
    %c0_612 = arith.constant 0 : index
    %393 = vector.load %arg9[%c0_611, %c0_612] : memref<18x640xf32, #tpu.memory_space<vmem>>, vector<18x640xf32>
    %394 = arith.truncf %393 : vector<18x640xf32> to vector<18x640xbf16>
    %c1792 = arith.constant 1792 : index
    %c0_613 = arith.constant 0 : index
    %395 = vector.load %arg1[%c1792, %c0_613] : memref<2816x128xbf16, #tpu.memory_space<vmem>>, vector<640x128xbf16>
    %cst_614 = arith.constant dense<0.000000e+00> : vector<18x128xf32>
    %396 = tpu.matmul %394, %395, %cst_614 {dimension_numbers = #tpu.dot_dimension_numbers<[1], [0], [0], [1], [0, 0, 1, 1], [], []>} : vector<18x640xbf16>, vector<640x128xbf16>, vector<18x128xf32> -> vector<18x128xf32>
    %c6_615 = arith.constant 6 : index
    %c0_616 = arith.constant 0 : index
    %397 = vector.load %arg3[%c6_615, %c0_616] : memref<8x128xf32, #tpu.memory_space<vmem>>, vector<1x128xf32>
    %398 = vector.broadcast %397 : vector<1x128xf32> to vector<18x128xf32>
    %399 = arith.addf %396, %398 : vector<18x128xf32>
    %cst_617 = arith.constant 0.000000e+00 : f32
    %400 = vector.broadcast %cst_617 : f32 to vector<18x128xf32>
    %401 = arith.maximumf %399, %400 : vector<18x128xf32>
    %402 = vector.extract_strided_slice %401 {offsets = [0, 0], sizes = [3, 128], strides = [1, 1]} : vector<18x128xf32> to vector<3x128xf32>
    %c6_618 = arith.constant 6 : index
    %c0_619 = arith.constant 0 : index
    %403 = vector.load %arg7[%c6_618, %c0_619] : memref<50x128xf32, #tpu.memory_space<vmem>>, vector<3x128xf32>
    tpu.vector_store %arg7[%c6_618, %c0_619], %402 {strides = array<i32>} : memref<50x128xf32, #tpu.memory_space<vmem>>, vector<3x128xf32>,
    %404 = vector.extract_strided_slice %401 {offsets = [3, 0], sizes = [3, 128], strides = [1, 1]} : vector<18x128xf32> to vector<3x128xf32>
    %c11_620 = arith.constant 11 : index
    %c0_621 = arith.constant 0 : index
    %405 = vector.load %arg7[%c11_620, %c0_621] : memref<50x128xf32, #tpu.memory_space<vmem>>, vector<3x128xf32>
    tpu.vector_store %arg7[%c11_620, %c0_621], %404 {strides = array<i32>} : memref<50x128xf32, #tpu.memory_space<vmem>>, vector<3x128xf32>,
    %406 = vector.extract_strided_slice %401 {offsets = [6, 0], sizes = [3, 128], strides = [1, 1]} : vector<18x128xf32> to vector<3x128xf32>
    %c16_622 = arith.constant 16 : index
    %c0_623 = arith.constant 0 : index
    %407 = vector.load %arg7[%c16_622, %c0_623] : memref<50x128xf32, #tpu.memory_space<vmem>>, vector<3x128xf32>
    tpu.vector_store %arg7[%c16_622, %c0_623], %406 {strides = array<i32>} : memref<50x128xf32, #tpu.memory_space<vmem>>, vector<3x128xf32>,
    %408 = vector.extract_strided_slice %401 {offsets = [9, 0], sizes = [3, 128], strides = [1, 1]} : vector<18x128xf32> to vector<3x128xf32>
    %c31_624 = arith.constant 31 : index
    %c0_625 = arith.constant 0 : index
    %409 = vector.load %arg7[%c31_624, %c0_625] : memref<50x128xf32, #tpu.memory_space<vmem>>, vector<3x128xf32>
    tpu.vector_store %arg7[%c31_624, %c0_625], %408 {strides = array<i32>} : memref<50x128xf32, #tpu.memory_space<vmem>>, vector<3x128xf32>,
    %410 = vector.extract_strided_slice %401 {offsets = [12, 0], sizes = [3, 128], strides = [1, 1]} : vector<18x128xf32> to vector<3x128xf32>
    %c36_626 = arith.constant 36 : index
    %c0_627 = arith.constant 0 : index
    %411 = vector.load %arg7[%c36_626, %c0_627] : memref<50x128xf32, #tpu.memory_space<vmem>>, vector<3x128xf32>
    tpu.vector_store %arg7[%c36_626, %c0_627], %410 {strides = array<i32>} : memref<50x128xf32, #tpu.memory_space<vmem>>, vector<3x128xf32>,
    %412 = vector.extract_strided_slice %401 {offsets = [15, 0], sizes = [3, 128], strides = [1, 1]} : vector<18x128xf32> to vector<3x128xf32>
    %c41_628 = arith.constant 41 : index
    %c0_629 = arith.constant 0 : index
    %413 = vector.load %arg7[%c41_628, %c0_629] : memref<50x128xf32, #tpu.memory_space<vmem>>, vector<3x128xf32>
    tpu.vector_store %arg7[%c41_628, %c0_629], %412 {strides = array<i32>} : memref<50x128xf32, #tpu.memory_space<vmem>>, vector<3x128xf32>,
    %cst_630 = arith.constant 0.000000e+00 : f32
    %414 = vector.broadcast %cst_630 : f32 to vector<18x96xf32>
    %c0_631 = arith.constant 0 : index
    %c288_632 = arith.constant 288 : index
    %415 = vector.load %arg10[%c0_631, %c288_632] : memref<18x384xf32, #tpu.memory_space<vmem>>, vector<18x96xf32>
    tpu.vector_store %arg10[%c0_631, %c288_632], %414 {strides = array<i32>} : memref<18x384xf32, #tpu.memory_space<vmem>>, vector<18x96xf32>,
    %c0_633 = arith.constant 0 : index
    %c0_634 = arith.constant 0 : index
    %416 = vector.load %arg7[%c0_633, %c0_634] : memref<50x128xf32, #tpu.memory_space<vmem>>, vector<3x32xf32>
    %c0_635 = arith.constant 0 : index
    %c0_636 = arith.constant 0 : index
    %417 = vector.load %arg10[%c0_635, %c0_636] : memref<18x384xf32, #tpu.memory_space<vmem>>, vector<3x32xf32>
    tpu.vector_store %arg10[%c0_635, %c0_636], %416 {strides = array<i32>} : memref<18x384xf32, #tpu.memory_space<vmem>>, vector<3x32xf32>,
    %c1_637 = arith.constant 1 : index
    %c0_638 = arith.constant 0 : index
    %418 = vector.load %arg7[%c1_637, %c0_638] : memref<50x128xf32, #tpu.memory_space<vmem>>, vector<3x32xf32>
    %c0_639 = arith.constant 0 : index
    %c32_640 = arith.constant 32 : index
    %419 = vector.load %arg10[%c0_639, %c32_640] : memref<18x384xf32, #tpu.memory_space<vmem>>, vector<3x32xf32>
    tpu.vector_store %arg10[%c0_639, %c32_640], %418 {strides = array<i32>} : memref<18x384xf32, #tpu.memory_space<vmem>>, vector<3x32xf32>,
    %c2_641 = arith.constant 2 : index
    %c0_642 = arith.constant 0 : index
    %420 = vector.load %arg7[%c2_641, %c0_642] : memref<50x128xf32, #tpu.memory_space<vmem>>, vector<3x32xf32>
    %c0_643 = arith.constant 0 : index
    %c64_644 = arith.constant 64 : index
    %421 = vector.load %arg10[%c0_643, %c64_644] : memref<18x384xf32, #tpu.memory_space<vmem>>, vector<3x32xf32>
    tpu.vector_store %arg10[%c0_643, %c64_644], %420 {strides = array<i32>} : memref<18x384xf32, #tpu.memory_space<vmem>>, vector<3x32xf32>,
    %c5_645 = arith.constant 5 : index
    %c0_646 = arith.constant 0 : index
    %422 = vector.load %arg7[%c5_645, %c0_646] : memref<50x128xf32, #tpu.memory_space<vmem>>, vector<3x32xf32>
    %c0_647 = arith.constant 0 : index
    %c96_648 = arith.constant 96 : index
    %423 = vector.load %arg10[%c0_647, %c96_648] : memref<18x384xf32, #tpu.memory_space<vmem>>, vector<3x32xf32>
    tpu.vector_store %arg10[%c0_647, %c96_648], %422 {strides = array<i32>} : memref<18x384xf32, #tpu.memory_space<vmem>>, vector<3x32xf32>,
    %c6_649 = arith.constant 6 : index
    %c0_650 = arith.constant 0 : index
    %424 = vector.load %arg7[%c6_649, %c0_650] : memref<50x128xf32, #tpu.memory_space<vmem>>, vector<3x32xf32>
    %c0_651 = arith.constant 0 : index
    %c128_652 = arith.constant 128 : index
    %425 = vector.load %arg10[%c0_651, %c128_652] : memref<18x384xf32, #tpu.memory_space<vmem>>, vector<3x32xf32>
    tpu.vector_store %arg10[%c0_651, %c128_652], %424 {strides = array<i32>} : memref<18x384xf32, #tpu.memory_space<vmem>>, vector<3x32xf32>,
    %c7_653 = arith.constant 7 : index
    %c0_654 = arith.constant 0 : index
    %426 = vector.load %arg7[%c7_653, %c0_654] : memref<50x128xf32, #tpu.memory_space<vmem>>, vector<3x32xf32>
    %c0_655 = arith.constant 0 : index
    %c160_656 = arith.constant 160 : index
    %427 = vector.load %arg10[%c0_655, %c160_656] : memref<18x384xf32, #tpu.memory_space<vmem>>, vector<3x32xf32>
    tpu.vector_store %arg10[%c0_655, %c160_656], %426 {strides = array<i32>} : memref<18x384xf32, #tpu.memory_space<vmem>>, vector<3x32xf32>,
    %c10_657 = arith.constant 10 : index
    %c0_658 = arith.constant 0 : index
    %428 = vector.load %arg7[%c10_657, %c0_658] : memref<50x128xf32, #tpu.memory_space<vmem>>, vector<3x32xf32>
    %c0_659 = arith.constant 0 : index
    %c192_660 = arith.constant 192 : index
    %429 = vector.load %arg10[%c0_659, %c192_660] : memref<18x384xf32, #tpu.memory_space<vmem>>, vector<3x32xf32>
    tpu.vector_store %arg10[%c0_659, %c192_660], %428 {strides = array<i32>} : memref<18x384xf32, #tpu.memory_space<vmem>>, vector<3x32xf32>,
    %c11_661 = arith.constant 11 : index
    %c0_662 = arith.constant 0 : index
    %430 = vector.load %arg7[%c11_661, %c0_662] : memref<50x128xf32, #tpu.memory_space<vmem>>, vector<3x32xf32>
    %c0_663 = arith.constant 0 : index
    %c224_664 = arith.constant 224 : index
    %431 = vector.load %arg10[%c0_663, %c224_664] : memref<18x384xf32, #tpu.memory_space<vmem>>, vector<3x32xf32>
    tpu.vector_store %arg10[%c0_663, %c224_664], %430 {strides = array<i32>} : memref<18x384xf32, #tpu.memory_space<vmem>>, vector<3x32xf32>,
    %c12_665 = arith.constant 12 : index
    %c0_666 = arith.constant 0 : index
    %432 = vector.load %arg7[%c12_665, %c0_666] : memref<50x128xf32, #tpu.memory_space<vmem>>, vector<3x32xf32>
    %c0_667 = arith.constant 0 : index
    %c256_668 = arith.constant 256 : index
    %433 = vector.load %arg10[%c0_667, %c256_668] : memref<18x384xf32, #tpu.memory_space<vmem>>, vector<3x32xf32>
    tpu.vector_store %arg10[%c0_667, %c256_668], %432 {strides = array<i32>} : memref<18x384xf32, #tpu.memory_space<vmem>>, vector<3x32xf32>,
    %c5_669 = arith.constant 5 : index
    %c0_670 = arith.constant 0 : index
    %434 = vector.load %arg7[%c5_669, %c0_670] : memref<50x128xf32, #tpu.memory_space<vmem>>, vector<3x32xf32>
    %c3_671 = arith.constant 3 : index
    %c0_672 = arith.constant 0 : index
    %435 = vector.load %arg10[%c3_671, %c0_672] : memref<18x384xf32, #tpu.memory_space<vmem>>, vector<3x32xf32>
    tpu.vector_store %arg10[%c3_671, %c0_672], %434 {strides = array<i32>} : memref<18x384xf32, #tpu.memory_space<vmem>>, vector<3x32xf32>,
    %c6_673 = arith.constant 6 : index
    %c0_674 = arith.constant 0 : index
    %436 = vector.load %arg7[%c6_673, %c0_674] : memref<50x128xf32, #tpu.memory_space<vmem>>, vector<3x32xf32>
    %c3_675 = arith.constant 3 : index
    %c32_676 = arith.constant 32 : index
    %437 = vector.load %arg10[%c3_675, %c32_676] : memref<18x384xf32, #tpu.memory_space<vmem>>, vector<3x32xf32>
    tpu.vector_store %arg10[%c3_675, %c32_676], %436 {strides = array<i32>} : memref<18x384xf32, #tpu.memory_space<vmem>>, vector<3x32xf32>,
    %c7_677 = arith.constant 7 : index
    %c0_678 = arith.constant 0 : index
    %438 = vector.load %arg7[%c7_677, %c0_678] : memref<50x128xf32, #tpu.memory_space<vmem>>, vector<3x32xf32>
    %c3_679 = arith.constant 3 : index
    %c64_680 = arith.constant 64 : index
    %439 = vector.load %arg10[%c3_679, %c64_680] : memref<18x384xf32, #tpu.memory_space<vmem>>, vector<3x32xf32>
    tpu.vector_store %arg10[%c3_679, %c64_680], %438 {strides = array<i32>} : memref<18x384xf32, #tpu.memory_space<vmem>>, vector<3x32xf32>,
    %c10_681 = arith.constant 10 : index
    %c0_682 = arith.constant 0 : index
    %440 = vector.load %arg7[%c10_681, %c0_682] : memref<50x128xf32, #tpu.memory_space<vmem>>, vector<3x32xf32>
    %c3_683 = arith.constant 3 : index
    %c96_684 = arith.constant 96 : index
    %441 = vector.load %arg10[%c3_683, %c96_684] : memref<18x384xf32, #tpu.memory_space<vmem>>, vector<3x32xf32>
    tpu.vector_store %arg10[%c3_683, %c96_684], %440 {strides = array<i32>} : memref<18x384xf32, #tpu.memory_space<vmem>>, vector<3x32xf32>,
    %c11_685 = arith.constant 11 : index
    %c0_686 = arith.constant 0 : index
    %442 = vector.load %arg7[%c11_685, %c0_686] : memref<50x128xf32, #tpu.memory_space<vmem>>, vector<3x32xf32>
    %c3_687 = arith.constant 3 : index
    %c128_688 = arith.constant 128 : index
    %443 = vector.load %arg10[%c3_687, %c128_688] : memref<18x384xf32, #tpu.memory_space<vmem>>, vector<3x32xf32>
    tpu.vector_store %arg10[%c3_687, %c128_688], %442 {strides = array<i32>} : memref<18x384xf32, #tpu.memory_space<vmem>>, vector<3x32xf32>,
    %c12_689 = arith.constant 12 : index
    %c0_690 = arith.constant 0 : index
    %444 = vector.load %arg7[%c12_689, %c0_690] : memref<50x128xf32, #tpu.memory_space<vmem>>, vector<3x32xf32>
    %c3_691 = arith.constant 3 : index
    %c160_692 = arith.constant 160 : index
    %445 = vector.load %arg10[%c3_691, %c160_692] : memref<18x384xf32, #tpu.memory_space<vmem>>, vector<3x32xf32>
    tpu.vector_store %arg10[%c3_691, %c160_692], %444 {strides = array<i32>} : memref<18x384xf32, #tpu.memory_space<vmem>>, vector<3x32xf32>,
    %c15_693 = arith.constant 15 : index
    %c0_694 = arith.constant 0 : index
    %446 = vector.load %arg7[%c15_693, %c0_694] : memref<50x128xf32, #tpu.memory_space<vmem>>, vector<3x32xf32>
    %c3_695 = arith.constant 3 : index
    %c192_696 = arith.constant 192 : index
    %447 = vector.load %arg10[%c3_695, %c192_696] : memref<18x384xf32, #tpu.memory_space<vmem>>, vector<3x32xf32>
    tpu.vector_store %arg10[%c3_695, %c192_696], %446 {strides = array<i32>} : memref<18x384xf32, #tpu.memory_space<vmem>>, vector<3x32xf32>,
    %c16_697 = arith.constant 16 : index
    %c0_698 = arith.constant 0 : index
    %448 = vector.load %arg7[%c16_697, %c0_698] : memref<50x128xf32, #tpu.memory_space<vmem>>, vector<3x32xf32>
    %c3_699 = arith.constant 3 : index
    %c224_700 = arith.constant 224 : index
    %449 = vector.load %arg10[%c3_699, %c224_700] : memref<18x384xf32, #tpu.memory_space<vmem>>, vector<3x32xf32>
    tpu.vector_store %arg10[%c3_699, %c224_700], %448 {strides = array<i32>} : memref<18x384xf32, #tpu.memory_space<vmem>>, vector<3x32xf32>,
    %c17_701 = arith.constant 17 : index
    %c0_702 = arith.constant 0 : index
    %450 = vector.load %arg7[%c17_701, %c0_702] : memref<50x128xf32, #tpu.memory_space<vmem>>, vector<3x32xf32>
    %c3_703 = arith.constant 3 : index
    %c256_704 = arith.constant 256 : index
    %451 = vector.load %arg10[%c3_703, %c256_704] : memref<18x384xf32, #tpu.memory_space<vmem>>, vector<3x32xf32>
    tpu.vector_store %arg10[%c3_703, %c256_704], %450 {strides = array<i32>} : memref<18x384xf32, #tpu.memory_space<vmem>>, vector<3x32xf32>,
    %c10_705 = arith.constant 10 : index
    %c0_706 = arith.constant 0 : index
    %452 = vector.load %arg7[%c10_705, %c0_706] : memref<50x128xf32, #tpu.memory_space<vmem>>, vector<3x32xf32>
    %c6_707 = arith.constant 6 : index
    %c0_708 = arith.constant 0 : index
    %453 = vector.load %arg10[%c6_707, %c0_708] : memref<18x384xf32, #tpu.memory_space<vmem>>, vector<3x32xf32>
    tpu.vector_store %arg10[%c6_707, %c0_708], %452 {strides = array<i32>} : memref<18x384xf32, #tpu.memory_space<vmem>>, vector<3x32xf32>,
    %c11_709 = arith.constant 11 : index
    %c0_710 = arith.constant 0 : index
    %454 = vector.load %arg7[%c11_709, %c0_710] : memref<50x128xf32, #tpu.memory_space<vmem>>, vector<3x32xf32>
    %c6_711 = arith.constant 6 : index
    %c32_712 = arith.constant 32 : index
    %455 = vector.load %arg10[%c6_711, %c32_712] : memref<18x384xf32, #tpu.memory_space<vmem>>, vector<3x32xf32>
    tpu.vector_store %arg10[%c6_711, %c32_712], %454 {strides = array<i32>} : memref<18x384xf32, #tpu.memory_space<vmem>>, vector<3x32xf32>,
    %c12_713 = arith.constant 12 : index
    %c0_714 = arith.constant 0 : index
    %456 = vector.load %arg7[%c12_713, %c0_714] : memref<50x128xf32, #tpu.memory_space<vmem>>, vector<3x32xf32>
    %c6_715 = arith.constant 6 : index
    %c64_716 = arith.constant 64 : index
    %457 = vector.load %arg10[%c6_715, %c64_716] : memref<18x384xf32, #tpu.memory_space<vmem>>, vector<3x32xf32>
    tpu.vector_store %arg10[%c6_715, %c64_716], %456 {strides = array<i32>} : memref<18x384xf32, #tpu.memory_space<vmem>>, vector<3x32xf32>,
    %c15_717 = arith.constant 15 : index
    %c0_718 = arith.constant 0 : index
    %458 = vector.load %arg7[%c15_717, %c0_718] : memref<50x128xf32, #tpu.memory_space<vmem>>, vector<3x32xf32>
    %c6_719 = arith.constant 6 : index
    %c96_720 = arith.constant 96 : index
    %459 = vector.load %arg10[%c6_719, %c96_720] : memref<18x384xf32, #tpu.memory_space<vmem>>, vector<3x32xf32>
    tpu.vector_store %arg10[%c6_719, %c96_720], %458 {strides = array<i32>} : memref<18x384xf32, #tpu.memory_space<vmem>>, vector<3x32xf32>,
    %c16_721 = arith.constant 16 : index
    %c0_722 = arith.constant 0 : index
    %460 = vector.load %arg7[%c16_721, %c0_722] : memref<50x128xf32, #tpu.memory_space<vmem>>, vector<3x32xf32>
    %c6_723 = arith.constant 6 : index
    %c128_724 = arith.constant 128 : index
    %461 = vector.load %arg10[%c6_723, %c128_724] : memref<18x384xf32, #tpu.memory_space<vmem>>, vector<3x32xf32>
    tpu.vector_store %arg10[%c6_723, %c128_724], %460 {strides = array<i32>} : memref<18x384xf32, #tpu.memory_space<vmem>>, vector<3x32xf32>,
    %c17_725 = arith.constant 17 : index
    %c0_726 = arith.constant 0 : index
    %462 = vector.load %arg7[%c17_725, %c0_726] : memref<50x128xf32, #tpu.memory_space<vmem>>, vector<3x32xf32>
    %c6_727 = arith.constant 6 : index
    %c160_728 = arith.constant 160 : index
    %463 = vector.load %arg10[%c6_727, %c160_728] : memref<18x384xf32, #tpu.memory_space<vmem>>, vector<3x32xf32>
    tpu.vector_store %arg10[%c6_727, %c160_728], %462 {strides = array<i32>} : memref<18x384xf32, #tpu.memory_space<vmem>>, vector<3x32xf32>,
    %c20_729 = arith.constant 20 : index
    %c0_730 = arith.constant 0 : index
    %464 = vector.load %arg7[%c20_729, %c0_730] : memref<50x128xf32, #tpu.memory_space<vmem>>, vector<3x32xf32>
    %c6_731 = arith.constant 6 : index
    %c192_732 = arith.constant 192 : index
    %465 = vector.load %arg10[%c6_731, %c192_732] : memref<18x384xf32, #tpu.memory_space<vmem>>, vector<3x32xf32>
    tpu.vector_store %arg10[%c6_731, %c192_732], %464 {strides = array<i32>} : memref<18x384xf32, #tpu.memory_space<vmem>>, vector<3x32xf32>,
    %c21_733 = arith.constant 21 : index
    %c0_734 = arith.constant 0 : index
    %466 = vector.load %arg7[%c21_733, %c0_734] : memref<50x128xf32, #tpu.memory_space<vmem>>, vector<3x32xf32>
    %c6_735 = arith.constant 6 : index
    %c224_736 = arith.constant 224 : index
    %467 = vector.load %arg10[%c6_735, %c224_736] : memref<18x384xf32, #tpu.memory_space<vmem>>, vector<3x32xf32>
    tpu.vector_store %arg10[%c6_735, %c224_736], %466 {strides = array<i32>} : memref<18x384xf32, #tpu.memory_space<vmem>>, vector<3x32xf32>,
    %c22_737 = arith.constant 22 : index
    %c0_738 = arith.constant 0 : index
    %468 = vector.load %arg7[%c22_737, %c0_738] : memref<50x128xf32, #tpu.memory_space<vmem>>, vector<3x32xf32>
    %c6_739 = arith.constant 6 : index
    %c256_740 = arith.constant 256 : index
    %469 = vector.load %arg10[%c6_739, %c256_740] : memref<18x384xf32, #tpu.memory_space<vmem>>, vector<3x32xf32>
    tpu.vector_store %arg10[%c6_739, %c256_740], %468 {strides = array<i32>} : memref<18x384xf32, #tpu.memory_space<vmem>>, vector<3x32xf32>,
    %c25_741 = arith.constant 25 : index
    %c0_742 = arith.constant 0 : index
    %470 = vector.load %arg7[%c25_741, %c0_742] : memref<50x128xf32, #tpu.memory_space<vmem>>, vector<3x32xf32>
    %c9_743 = arith.constant 9 : index
    %c0_744 = arith.constant 0 : index
    %471 = vector.load %arg10[%c9_743, %c0_744] : memref<18x384xf32, #tpu.memory_space<vmem>>, vector<3x32xf32>
    tpu.vector_store %arg10[%c9_743, %c0_744], %470 {strides = array<i32>} : memref<18x384xf32, #tpu.memory_space<vmem>>, vector<3x32xf32>,
    %c26_745 = arith.constant 26 : index
    %c0_746 = arith.constant 0 : index
    %472 = vector.load %arg7[%c26_745, %c0_746] : memref<50x128xf32, #tpu.memory_space<vmem>>, vector<3x32xf32>
    %c9_747 = arith.constant 9 : index
    %c32_748 = arith.constant 32 : index
    %473 = vector.load %arg10[%c9_747, %c32_748] : memref<18x384xf32, #tpu.memory_space<vmem>>, vector<3x32xf32>
    tpu.vector_store %arg10[%c9_747, %c32_748], %472 {strides = array<i32>} : memref<18x384xf32, #tpu.memory_space<vmem>>, vector<3x32xf32>,
    %c27_749 = arith.constant 27 : index
    %c0_750 = arith.constant 0 : index
    %474 = vector.load %arg7[%c27_749, %c0_750] : memref<50x128xf32, #tpu.memory_space<vmem>>, vector<3x32xf32>
    %c9_751 = arith.constant 9 : index
    %c64_752 = arith.constant 64 : index
    %475 = vector.load %arg10[%c9_751, %c64_752] : memref<18x384xf32, #tpu.memory_space<vmem>>, vector<3x32xf32>
    tpu.vector_store %arg10[%c9_751, %c64_752], %474 {strides = array<i32>} : memref<18x384xf32, #tpu.memory_space<vmem>>, vector<3x32xf32>,
    %c30_753 = arith.constant 30 : index
    %c0_754 = arith.constant 0 : index
    %476 = vector.load %arg7[%c30_753, %c0_754] : memref<50x128xf32, #tpu.memory_space<vmem>>, vector<3x32xf32>
    %c9_755 = arith.constant 9 : index
    %c96_756 = arith.constant 96 : index
    %477 = vector.load %arg10[%c9_755, %c96_756] : memref<18x384xf32, #tpu.memory_space<vmem>>, vector<3x32xf32>
    tpu.vector_store %arg10[%c9_755, %c96_756], %476 {strides = array<i32>} : memref<18x384xf32, #tpu.memory_space<vmem>>, vector<3x32xf32>,
    %c31_757 = arith.constant 31 : index
    %c0_758 = arith.constant 0 : index
    %478 = vector.load %arg7[%c31_757, %c0_758] : memref<50x128xf32, #tpu.memory_space<vmem>>, vector<3x32xf32>
    %c9_759 = arith.constant 9 : index
    %c128_760 = arith.constant 128 : index
    %479 = vector.load %arg10[%c9_759, %c128_760] : memref<18x384xf32, #tpu.memory_space<vmem>>, vector<3x32xf32>
    tpu.vector_store %arg10[%c9_759, %c128_760], %478 {strides = array<i32>} : memref<18x384xf32, #tpu.memory_space<vmem>>, vector<3x32xf32>,
    %c32_761 = arith.constant 32 : index
    %c0_762 = arith.constant 0 : index
    %480 = vector.load %arg7[%c32_761, %c0_762] : memref<50x128xf32, #tpu.memory_space<vmem>>, vector<3x32xf32>
    %c9_763 = arith.constant 9 : index
    %c160_764 = arith.constant 160 : index
    %481 = vector.load %arg10[%c9_763, %c160_764] : memref<18x384xf32, #tpu.memory_space<vmem>>, vector<3x32xf32>
    tpu.vector_store %arg10[%c9_763, %c160_764], %480 {strides = array<i32>} : memref<18x384xf32, #tpu.memory_space<vmem>>, vector<3x32xf32>,
    %c35_765 = arith.constant 35 : index
    %c0_766 = arith.constant 0 : index
    %482 = vector.load %arg7[%c35_765, %c0_766] : memref<50x128xf32, #tpu.memory_space<vmem>>, vector<3x32xf32>
    %c9_767 = arith.constant 9 : index
    %c192_768 = arith.constant 192 : index
    %483 = vector.load %arg10[%c9_767, %c192_768] : memref<18x384xf32, #tpu.memory_space<vmem>>, vector<3x32xf32>
    tpu.vector_store %arg10[%c9_767, %c192_768], %482 {strides = array<i32>} : memref<18x384xf32, #tpu.memory_space<vmem>>, vector<3x32xf32>,
    %c36_769 = arith.constant 36 : index
    %c0_770 = arith.constant 0 : index
    %484 = vector.load %arg7[%c36_769, %c0_770] : memref<50x128xf32, #tpu.memory_space<vmem>>, vector<3x32xf32>
    %c9_771 = arith.constant 9 : index
    %c224_772 = arith.constant 224 : index
    %485 = vector.load %arg10[%c9_771, %c224_772] : memref<18x384xf32, #tpu.memory_space<vmem>>, vector<3x32xf32>
    tpu.vector_store %arg10[%c9_771, %c224_772], %484 {strides = array<i32>} : memref<18x384xf32, #tpu.memory_space<vmem>>, vector<3x32xf32>,
    %c37_773 = arith.constant 37 : index
    %c0_774 = arith.constant 0 : index
    %486 = vector.load %arg7[%c37_773, %c0_774] : memref<50x128xf32, #tpu.memory_space<vmem>>, vector<3x32xf32>
    %c9_775 = arith.constant 9 : index
    %c256_776 = arith.constant 256 : index
    %487 = vector.load %arg10[%c9_775, %c256_776] : memref<18x384xf32, #tpu.memory_space<vmem>>, vector<3x32xf32>
    tpu.vector_store %arg10[%c9_775, %c256_776], %486 {strides = array<i32>} : memref<18x384xf32, #tpu.memory_space<vmem>>, vector<3x32xf32>,
    %c30_777 = arith.constant 30 : index
    %c0_778 = arith.constant 0 : index
    %488 = vector.load %arg7[%c30_777, %c0_778] : memref<50x128xf32, #tpu.memory_space<vmem>>, vector<3x32xf32>
    %c12_779 = arith.constant 12 : index
    %c0_780 = arith.constant 0 : index
    %489 = vector.load %arg10[%c12_779, %c0_780] : memref<18x384xf32, #tpu.memory_space<vmem>>, vector<3x32xf32>
    tpu.vector_store %arg10[%c12_779, %c0_780], %488 {strides = array<i32>} : memref<18x384xf32, #tpu.memory_space<vmem>>, vector<3x32xf32>,
    %c31_781 = arith.constant 31 : index
    %c0_782 = arith.constant 0 : index
    %490 = vector.load %arg7[%c31_781, %c0_782] : memref<50x128xf32, #tpu.memory_space<vmem>>, vector<3x32xf32>
    %c12_783 = arith.constant 12 : index
    %c32_784 = arith.constant 32 : index
    %491 = vector.load %arg10[%c12_783, %c32_784] : memref<18x384xf32, #tpu.memory_space<vmem>>, vector<3x32xf32>
    tpu.vector_store %arg10[%c12_783, %c32_784], %490 {strides = array<i32>} : memref<18x384xf32, #tpu.memory_space<vmem>>, vector<3x32xf32>,
    %c32_785 = arith.constant 32 : index
    %c0_786 = arith.constant 0 : index
    %492 = vector.load %arg7[%c32_785, %c0_786] : memref<50x128xf32, #tpu.memory_space<vmem>>, vector<3x32xf32>
    %c12_787 = arith.constant 12 : index
    %c64_788 = arith.constant 64 : index
    %493 = vector.load %arg10[%c12_787, %c64_788] : memref<18x384xf32, #tpu.memory_space<vmem>>, vector<3x32xf32>
    tpu.vector_store %arg10[%c12_787, %c64_788], %492 {strides = array<i32>} : memref<18x384xf32, #tpu.memory_space<vmem>>, vector<3x32xf32>,
    %c35_789 = arith.constant 35 : index
    %c0_790 = arith.constant 0 : index
    %494 = vector.load %arg7[%c35_789, %c0_790] : memref<50x128xf32, #tpu.memory_space<vmem>>, vector<3x32xf32>
    %c12_791 = arith.constant 12 : index
    %c96_792 = arith.constant 96 : index
    %495 = vector.load %arg10[%c12_791, %c96_792] : memref<18x384xf32, #tpu.memory_space<vmem>>, vector<3x32xf32>
    tpu.vector_store %arg10[%c12_791, %c96_792], %494 {strides = array<i32>} : memref<18x384xf32, #tpu.memory_space<vmem>>, vector<3x32xf32>,
    %c36_793 = arith.constant 36 : index
    %c0_794 = arith.constant 0 : index
    %496 = vector.load %arg7[%c36_793, %c0_794] : memref<50x128xf32, #tpu.memory_space<vmem>>, vector<3x32xf32>
    %c12_795 = arith.constant 12 : index
    %c128_796 = arith.constant 128 : index
    %497 = vector.load %arg10[%c12_795, %c128_796] : memref<18x384xf32, #tpu.memory_space<vmem>>, vector<3x32xf32>
    tpu.vector_store %arg10[%c12_795, %c128_796], %496 {strides = array<i32>} : memref<18x384xf32, #tpu.memory_space<vmem>>, vector<3x32xf32>,
    %c37_797 = arith.constant 37 : index
    %c0_798 = arith.constant 0 : index
    %498 = vector.load %arg7[%c37_797, %c0_798] : memref<50x128xf32, #tpu.memory_space<vmem>>, vector<3x32xf32>
    %c12_799 = arith.constant 12 : index
    %c160_800 = arith.constant 160 : index
    %499 = vector.load %arg10[%c12_799, %c160_800] : memref<18x384xf32, #tpu.memory_space<vmem>>, vector<3x32xf32>
    tpu.vector_store %arg10[%c12_799, %c160_800], %498 {strides = array<i32>} : memref<18x384xf32, #tpu.memory_space<vmem>>, vector<3x32xf32>,
    %c40_801 = arith.constant 40 : index
    %c0_802 = arith.constant 0 : index
    %500 = vector.load %arg7[%c40_801, %c0_802] : memref<50x128xf32, #tpu.memory_space<vmem>>, vector<3x32xf32>
    %c12_803 = arith.constant 12 : index
    %c192_804 = arith.constant 192 : index
    %501 = vector.load %arg10[%c12_803, %c192_804] : memref<18x384xf32, #tpu.memory_space<vmem>>, vector<3x32xf32>
    tpu.vector_store %arg10[%c12_803, %c192_804], %500 {strides = array<i32>} : memref<18x384xf32, #tpu.memory_space<vmem>>, vector<3x32xf32>,
    %c41_805 = arith.constant 41 : index
    %c0_806 = arith.constant 0 : index
    %502 = vector.load %arg7[%c41_805, %c0_806] : memref<50x128xf32, #tpu.memory_space<vmem>>, vector<3x32xf32>
    %c12_807 = arith.constant 12 : index
    %c224_808 = arith.constant 224 : index
    %503 = vector.load %arg10[%c12_807, %c224_808] : memref<18x384xf32, #tpu.memory_space<vmem>>, vector<3x32xf32>
    tpu.vector_store %arg10[%c12_807, %c224_808], %502 {strides = array<i32>} : memref<18x384xf32, #tpu.memory_space<vmem>>, vector<3x32xf32>,
    %c42_809 = arith.constant 42 : index
    %c0_810 = arith.constant 0 : index
    %504 = vector.load %arg7[%c42_809, %c0_810] : memref<50x128xf32, #tpu.memory_space<vmem>>, vector<3x32xf32>
    %c12_811 = arith.constant 12 : index
    %c256_812 = arith.constant 256 : index
    %505 = vector.load %arg10[%c12_811, %c256_812] : memref<18x384xf32, #tpu.memory_space<vmem>>, vector<3x32xf32>
    tpu.vector_store %arg10[%c12_811, %c256_812], %504 {strides = array<i32>} : memref<18x384xf32, #tpu.memory_space<vmem>>, vector<3x32xf32>,
    %c35_813 = arith.constant 35 : index
    %c0_814 = arith.constant 0 : index
    %506 = vector.load %arg7[%c35_813, %c0_814] : memref<50x128xf32, #tpu.memory_space<vmem>>, vector<3x32xf32>
    %c15_815 = arith.constant 15 : index
    %c0_816 = arith.constant 0 : index
    %507 = vector.load %arg10[%c15_815, %c0_816] : memref<18x384xf32, #tpu.memory_space<vmem>>, vector<3x32xf32>
    tpu.vector_store %arg10[%c15_815, %c0_816], %506 {strides = array<i32>} : memref<18x384xf32, #tpu.memory_space<vmem>>, vector<3x32xf32>,
    %c36_817 = arith.constant 36 : index
    %c0_818 = arith.constant 0 : index
    %508 = vector.load %arg7[%c36_817, %c0_818] : memref<50x128xf32, #tpu.memory_space<vmem>>, vector<3x32xf32>
    %c15_819 = arith.constant 15 : index
    %c32_820 = arith.constant 32 : index
    %509 = vector.load %arg10[%c15_819, %c32_820] : memref<18x384xf32, #tpu.memory_space<vmem>>, vector<3x32xf32>
    tpu.vector_store %arg10[%c15_819, %c32_820], %508 {strides = array<i32>} : memref<18x384xf32, #tpu.memory_space<vmem>>, vector<3x32xf32>,
    %c37_821 = arith.constant 37 : index
    %c0_822 = arith.constant 0 : index
    %510 = vector.load %arg7[%c37_821, %c0_822] : memref<50x128xf32, #tpu.memory_space<vmem>>, vector<3x32xf32>
    %c15_823 = arith.constant 15 : index
    %c64_824 = arith.constant 64 : index
    %511 = vector.load %arg10[%c15_823, %c64_824] : memref<18x384xf32, #tpu.memory_space<vmem>>, vector<3x32xf32>
    tpu.vector_store %arg10[%c15_823, %c64_824], %510 {strides = array<i32>} : memref<18x384xf32, #tpu.memory_space<vmem>>, vector<3x32xf32>,
    %c40_825 = arith.constant 40 : index
    %c0_826 = arith.constant 0 : index
    %512 = vector.load %arg7[%c40_825, %c0_826] : memref<50x128xf32, #tpu.memory_space<vmem>>, vector<3x32xf32>
    %c15_827 = arith.constant 15 : index
    %c96_828 = arith.constant 96 : index
    %513 = vector.load %arg10[%c15_827, %c96_828] : memref<18x384xf32, #tpu.memory_space<vmem>>, vector<3x32xf32>
    tpu.vector_store %arg10[%c15_827, %c96_828], %512 {strides = array<i32>} : memref<18x384xf32, #tpu.memory_space<vmem>>, vector<3x32xf32>,
    %c41_829 = arith.constant 41 : index
    %c0_830 = arith.constant 0 : index
    %514 = vector.load %arg7[%c41_829, %c0_830] : memref<50x128xf32, #tpu.memory_space<vmem>>, vector<3x32xf32>
    %c15_831 = arith.constant 15 : index
    %c128_832 = arith.constant 128 : index
    %515 = vector.load %arg10[%c15_831, %c128_832] : memref<18x384xf32, #tpu.memory_space<vmem>>, vector<3x32xf32>
    tpu.vector_store %arg10[%c15_831, %c128_832], %514 {strides = array<i32>} : memref<18x384xf32, #tpu.memory_space<vmem>>, vector<3x32xf32>,
    %c42_833 = arith.constant 42 : index
    %c0_834 = arith.constant 0 : index
    %516 = vector.load %arg7[%c42_833, %c0_834] : memref<50x128xf32, #tpu.memory_space<vmem>>, vector<3x32xf32>
    %c15_835 = arith.constant 15 : index
    %c160_836 = arith.constant 160 : index
    %517 = vector.load %arg10[%c15_835, %c160_836] : memref<18x384xf32, #tpu.memory_space<vmem>>, vector<3x32xf32>
    tpu.vector_store %arg10[%c15_835, %c160_836], %516 {strides = array<i32>} : memref<18x384xf32, #tpu.memory_space<vmem>>, vector<3x32xf32>,
    %c45_837 = arith.constant 45 : index
    %c0_838 = arith.constant 0 : index
    %518 = vector.load %arg7[%c45_837, %c0_838] : memref<50x128xf32, #tpu.memory_space<vmem>>, vector<3x32xf32>
    %c15_839 = arith.constant 15 : index
    %c192_840 = arith.constant 192 : index
    %519 = vector.load %arg10[%c15_839, %c192_840] : memref<18x384xf32, #tpu.memory_space<vmem>>, vector<3x32xf32>
    tpu.vector_store %arg10[%c15_839, %c192_840], %518 {strides = array<i32>} : memref<18x384xf32, #tpu.memory_space<vmem>>, vector<3x32xf32>,
    %c46_841 = arith.constant 46 : index
    %c0_842 = arith.constant 0 : index
    %520 = vector.load %arg7[%c46_841, %c0_842] : memref<50x128xf32, #tpu.memory_space<vmem>>, vector<3x32xf32>
    %c15_843 = arith.constant 15 : index
    %c224_844 = arith.constant 224 : index
    %521 = vector.load %arg10[%c15_843, %c224_844] : memref<18x384xf32, #tpu.memory_space<vmem>>, vector<3x32xf32>
    tpu.vector_store %arg10[%c15_843, %c224_844], %520 {strides = array<i32>} : memref<18x384xf32, #tpu.memory_space<vmem>>, vector<3x32xf32>,
    %c47_845 = arith.constant 47 : index
    %c0_846 = arith.constant 0 : index
    %522 = vector.load %arg7[%c47_845, %c0_846] : memref<50x128xf32, #tpu.memory_space<vmem>>, vector<3x32xf32>
    %c15_847 = arith.constant 15 : index
    %c256_848 = arith.constant 256 : index
    %523 = vector.load %arg10[%c15_847, %c256_848] : memref<18x384xf32, #tpu.memory_space<vmem>>, vector<3x32xf32>
    tpu.vector_store %arg10[%c15_847, %c256_848], %522 {strides = array<i32>} : memref<18x384xf32, #tpu.memory_space<vmem>>, vector<3x32xf32>,
    %c0_849 = arith.constant 0 : index
    %c0_850 = arith.constant 0 : index
    %524 = vector.load %arg10[%c0_849, %c0_850] : memref<18x384xf32, #tpu.memory_space<vmem>>, vector<18x384xf32>
    %525 = arith.truncf %524 : vector<18x384xf32> to vector<18x384xbf16>
    %c2432 = arith.constant 2432 : index
    %c0_851 = arith.constant 0 : index
    %526 = vector.load %arg1[%c2432, %c0_851] : memref<2816x128xbf16, #tpu.memory_space<vmem>>, vector<384x128xbf16>
    %cst_852 = arith.constant dense<0.000000e+00> : vector<18x128xf32>
    %527 = tpu.matmul %525, %526, %cst_852 {dimension_numbers = #tpu.dot_dimension_numbers<[1], [0], [0], [1], [0, 0, 1, 1], [], []>} : vector<18x384xbf16>, vector<384x128xbf16>, vector<18x128xf32> -> vector<18x128xf32>
    %c7_853 = arith.constant 7 : index
    %c0_854 = arith.constant 0 : index
    %528 = vector.load %arg3[%c7_853, %c0_854] : memref<8x128xf32, #tpu.memory_space<vmem>>, vector<1x128xf32>
    %529 = vector.broadcast %528 : vector<1x128xf32> to vector<18x128xf32>
    %530 = arith.addf %527, %529 : vector<18x128xf32>
    %c4_855 = arith.constant 4 : index
    %c0_856 = arith.constant 0 : index
    %531 = vector.load %arg4[%c4_855, %c0_856] : memref<22x128xf32, #tpu.memory_space<vmem>>, vector<18x128xf32>
    tpu.vector_store %arg4[%c4_855, %c0_856], %530 {strides = array<i32>} : memref<22x128xf32, #tpu.memory_space<vmem>>, vector<18x128xf32>,
    return
  }
}

</mosaic_0001>

<llo_original>
// kernel: vae_forward.1
$region0: #{vae_forward.1}
  #allocation0 [shape = 'u32[]', space=smem, size = 0x4, offset = 0x4, fixed_abs, tag = 'smem constant byte address 0x4 - core index']
  #allocation1 [shape = 'u32[144,128]{1,0:T(1,128)}', space=vmem, size = 0x12000, scoped, tag = 'internal scratch']
  #allocation2 [shape = 'f32[32,128]{1,0:T(8,128)}', space=vmem, size = 0x4000, scoped, tag = 'scratch operand']
  #allocation3 [shape = 'f32[2,512]{1,0:T(2,128)}', space=vmem, size = 0x1000, scoped, tag = 'scratch operand']
  #allocation4 [shape = 'f32[50,128]{1,0:T(8,128)}', space=vmem, size = 0x7000, scoped, tag = 'scratch operand']
  #allocation5 [shape = 'f32[8,1024]{1,0:T(8,128)}', space=vmem, size = 0x8000, scoped, tag = 'scratch operand']
  #allocation6 [shape = 'f32[18,640]{1,0:T(8,128)}', space=vmem, size = 0xf000, scoped, tag = 'scratch operand']
  #allocation7 [shape = 'f32[18,384]{1,0:T(8,128)}', space=vmem, size = 0x9000, scoped, tag = 'scratch operand']
  %s0 = inlined_call_operand.vmem [shape: f32[10,128], index: 0, kind: input, shape index: {}]
  %s1 = inlined_call_operand.hbm [shape: bf16[2816,128], index: 1, kind: input, shape index: {}]
  %s2 = inlined_call_operand.vmem [shape: bf16[128,256], index: 2, kind: input, shape index: {}]
  %s3 = inlined_call_operand.vmem [shape: f32[8,128], index: 3, kind: input, shape index: {}]
  %s4 = inlined_call_operand.vmem [shape: f32[22,128], index: 4, kind: output, shape index: {}]
  %s5 = sld [smem:[#allocation0]]
  $region30: #{vae_forward.1} parent=0
    _
  %s7 = ssub.s32 1, %s5
  %s8 = scalar_select 0, %s7, %s5
  $region1: #{vae_forward.1} parent=0
    #allocation8 [shape = 'u8[720896]{0}', space=vmem, size = 0xb0000, scoped, tag = 'input window, operand 1, single buffered']
    #allocation9 [shape = 's32[1]{0}', space=sflag, size = 0x4, scoped, tag = 'scoped memory for vae_forward.1']
    %9 = vsyncpa [#allocation9], 0
    // Predicated region
    $region2: #{vae_forward.1} parent=1 // pred_check
      _
    $region3: #{vae_forward.1} parent=1 // pred_check_branch
      %11 = sbr.rel (0) target = $region5
    $region4: #{vae_forward.1} parent=1 // pred_region
      _
    $region5: #{vae_forward.1} parent=1 // pred_fallthru
      _
    // Predicated region
    $region6: #{vae_forward.1} parent=1 // pred_check
      _
    $region7: #{vae_forward.1} parent=1 // pred_check_branch
      %13 = sbr.rel (0) target = $region9
    $region8: #{vae_forward.1} parent=1 // pred_region
      %s15 = ssub.s32 22528, 22528
      %16 = vsyncadd [#allocation9], %s15
      %s17 = sshll.u32 [#allocation8], 4
      %s18 = int_to_ptr.vmem [resolvable:$true] %s17
      %23 = dma.hbm_to_vmem [thread:$0]  %s1, 22528, %s18, [#allocation9], 64, 64, 4
    $region9: #{vae_forward.1} parent=1 // pred_fallthru
      _
    // Predicated region
    $region10: #{vae_forward.1} parent=1 // pred_check
      _
    $region11: #{vae_forward.1} parent=1 // pred_check_branch
      %25 = sbr.rel (0) target = $region13
    $region12: #{vae_forward.1} parent=1 // pred_region
      _
    $region13: #{vae_forward.1} parent=1 // pred_fallthru
      _
    // Predicated region
    $region14: #{vae_forward.1} parent=1 // pred_check
      _
    $region15: #{vae_forward.1} parent=1 // pred_check_branch
      %27 = sbr.rel (0) target = $region17
    $region16: #{vae_forward.1} parent=1 // pred_region
      _
    $region17: #{vae_forward.1} parent=1 // pred_fallthru
      _
    // Predicated region
    $region18: #{vae_forward.1} parent=1 // pred_check
      _
    $region19: #{vae_forward.1} parent=1 // pred_check_branch
      %29 = sbr.rel (0) target = $region21
    $region20: #{vae_forward.1} parent=1 // pred_region
      %30 = dma.done [#allocation9], 22528
    $region21: #{vae_forward.1} parent=1 // pred_fallthru
      _
    %v32 = vld [vmem:[%s0] sm:$0xff]
    %v33 = vpack.c.bf16 %v32, %v32
    %v34 = vld [vmem:[#allocation8] sm:$0xf]
    %v35 = vld [vmem:[#allocation8 + $0x4] sm:$0xf]
    %v36 = vld [vmem:[#allocation8 + $0x8] sm:$0xf]
    %v37 = vld [vmem:[#allocation8 + $0xc] sm:$0xf]
    %v38 = vld [vmem:[#allocation8 + $0x10] sm:$0xf]
    %v39 = vld [vmem:[#allocation8 + $0x14] sm:$0xf]
    %v40 = vld [vmem:[#allocation8 + $0x18] sm:$0xf]
    %v41 = vld [vmem:[#allocation8 + $0x1c] sm:$0xf]
    %v42 = vld [vmem:[#allocation8 + $0x20] sm:$0xf]
    %v43 = vld [vmem:[#allocation8 + $0x24] sm:$0xf]
    %v44 = vld [vmem:[#allocation8 + $0x28] sm:$0xf]
    %v45 = vld [vmem:[#allocation8 + $0x2c] sm:$0xf]
    %v46 = vld [vmem:[#allocation8 + $0x30] sm:$0xf]
    %v47 = vld [vmem:[#allocation8 + $0x34] sm:$0xf]
    %v48 = vld [vmem:[#allocation8 + $0x38] sm:$0xf]
    %v49 = vld [vmem:[#allocation8 + $0x3c] sm:$0xf]
    %v50 = vld [vmem:[%s3] sm:$0x1]
    %v51 = vlaneseq
    %v52 = vshrl.u32 %v51, 7
    %v53 = vsub.s32 0, %v52
    %v54 = vrot.slane %v50, %v53
    %v71 = vunpack.c.l.b16 %v34
    %v72 = vunpack.c.l.b16 %v35
    %v73 = vunpack.c.l.b16 %v36
    %v74 = vunpack.c.l.b16 %v37
    %v75 = vunpack.c.l.b16 %v38
    %v76 = vunpack.c.l.b16 %v39
    %v77 = vunpack.c.l.b16 %v40
    %v78 = vunpack.c.l.b16 %v41
    %v79 = vunpack.c.l.b16 %v42
    %v80 = vunpack.c.l.b16 %v43
    %v81 = vunpack.c.l.b16 %v44
    %v82 = vunpack.c.l.b16 %v45
    %v83 = vunpack.c.l.b16 %v46
    %v84 = vunpack.c.l.b16 %v47
    %v85 = vunpack.c.l.b16 %v48
    %v86 = vunpack.c.l.b16 %v49
    %v87 = vpack.c.b16 %v72, %v71
    %v88 = vpack.c.b16 %v74, %v73
    %v89 = vpack.c.b16 %v76, %v75
    %v90 = vpack.c.b16 %v78, %v77
    %v91 = vpack.c.b16 %v80, %v79
    %v92 = vpack.c.b16 %v82, %v81
    %v93 = vpack.c.b16 %v84, %v83
    %v94 = vpack.c.b16 %v86, %v85
    %103 = vmatprep.subr.bf16.mxu0 0
    %104 = vmatpush1.bf16.msra.mxu0 %v87
    %105 = vmatprep.subr.bf16.mxu0 0
    %106 = vmatpush1.bf16.msra.mxu0 %v88
    %107 = vmatprep.subr.bf16.mxu0 0
    %108 = vmatpush1.bf16.msra.mxu0 %v89
    %109 = vmatprep.subr.bf16.mxu0 0
    %110 = vmatpush1.bf16.msra.mxu0 %v90
    %111 = vmatprep.subr.bf16.mxu0 0
    %112 = vmatpush1.bf16.msra.mxu0 %v91
    %113 = vmatprep.subr.bf16.mxu0 0
    %114 = vmatpush1.bf16.msra.mxu0 %v92
    %115 = vmatprep.subr.bf16.mxu0 0
    %116 = vmatpush1.bf16.msra.mxu0 %v93
    %117 = vmatprep.subr.bf16.mxu0 0
    %118 = vmatpush1.bf16.msra.mxu0 %v94
    %119 = vmatprep.subr.bf16.mxu0 0
    %120 = vmatpush1.bf16.msra.mxu0 0
    %121 = vmatprep.subr.bf16.mxu0 0
    %122 = vmatpush1.bf16.msra.mxu0 0
    %123 = vmatprep.subr.bf16.mxu0 0
    %124 = vmatpush1.bf16.msra.mxu0 0
    %125 = vmatprep.subr.bf16.mxu0 0
    %126 = vmatpush1.bf16.msra.mxu0 0
    %127 = vmatprep.subr.bf16.mxu0 0
    %128 = vmatpush1.bf16.msra.mxu0 0
    %129 = vmatprep.subr.bf16.mxu0 0
    %130 = vmatpush1.bf16.msra.mxu0 0
    %131 = vmatprep.subr.bf16.mxu0 0
    %132 = vmatpush1.bf16.msra.mxu0 0
    %133 = vmatprep.subr.bf16.mxu0 0
    %134 = vmatpush1.bf16.msra.mxu0 0
    %135 = vmatprep.mubr.bf16.mxu0 0
    %136 = vmatmul.mubr.bf16.gmra.mrb[0].mxu0 %v33
    %v137 = vpop.f32.mrb[0].mxu0
    %v138 = vadd.f32 %v54, %v137
    %v139 = vpop.f32.mrb[0].mxu0
    %v140 = vpop.f32.mrb[0].mxu0
    %v141 = vpop.f32.mrb[0].mxu0
    %142 = vdwg.mxu0
    %v143 = vmax.f32 %v138, 0.0
    %144 = vst [vmem:[#allocation2] sm:$0xff] 0.0
    %145 = vst [vmem:[#allocation2 + $0x8] sm:$0xff] 0.0
    %146 = vst [vmem:[#allocation2 + $0x10] sm:$0xff] 0.0
    %147 = vst [vmem:[#allocation2 + $0x18] sm:$0xff] 0.0
    %148 = vst [vmem:[#allocation2 + $0x5] sm:$0x3] %v143
    %149 = vst [vmem:[#allocation2 + $0x7] sm:$0xc] %v143
    %150 = vst [vmem:[#allocation2 + $0x11] sm:$0x30] %v143
    %151 = vst [vmem:[#allocation2 + $0x13] sm:$0xc0] %v143
    %v152 = vld [vmem:[#allocation2] sm:$0x1]
    %vm153 = vcmask 253952
    %154 = vst.msk [vmem:[#allocation3] sm:$0x1] %vm153, %v152
    %v155 = vld [vmem:[#allocation2 + $0x1] sm:$0x1]
    %v158 = vunpack.c.l.s4 1983009808
    %v159 = vunpack.c.0.s8 %v158
    %v160 = vlaneseq
    %v161 = vshrl.u32 %v160, 7
    %v162 = vsub.s32 %v159, %v161
    %v163 = vrot.slane %v155, %v162
    %164 = vrot.lane.b32.xlu0 %v163, 32
    %v165 = vpop.permute.xlu0 %164
    %vm167 = vcmask 516352
    %168 = vst.msk [vmem:[#allocation3] sm:$0x1] %vm167, %v165
    %v169 = vld [vmem:[#allocation2 + $0x2] sm:$0x1]
    %v172 = vunpack.c.l.s4 1983009808
    %v173 = vunpack.c.0.s8 %v172
    %v174 = vlaneseq
    %v175 = vshrl.u32 %v174, 7
    %v176 = vsub.s32 %v173, %v175
    %v177 = vrot.slane %v169, %v176
    %178 = vrot.lane.b32.xlu0 %v177, 64
    %v179 = vpop.permute.xlu0 %178
    %vm181 = vcmask 778752
    %182 = vst.msk [vmem:[#allocation3] sm:$0x1] %vm181, %v179
    %v183 = vld [vmem:[#allocation2 + $0x3] sm:$0x1]
    %v186 = vunpack.c.l.s4 1983009808
    %v187 = vunpack.c.0.s8 %v186
    %v188 = vlaneseq
    %v189 = vshrl.u32 %v188, 7
    %v190 = vsub.s32 %v187, %v189
    %v191 = vrot.slane %v183, %v190
    %192 = vrot.lane.b32.xlu0 %v191, 96
    %v193 = vpop.permute.xlu0 %192
    %vm195 = vcmask 1041152
    %196 = vst.msk [vmem:[#allocation3] sm:$0x1] %vm195, %v193
    %v197 = vld [vmem:[#allocation2 + $0x4] sm:$0x1]
    %198 = vst.msk [vmem:[#allocation3 + $0x2] sm:$0x1] %vm153, %v197
    %v199 = vld [vmem:[#allocation2 + $0x5] sm:$0x1]
    %v202 = vunpack.c.l.s4 1983009808
    %v203 = vunpack.c.0.s8 %v202
    %v204 = vlaneseq
    %v205 = vshrl.u32 %v204, 7
    %v206 = vsub.s32 %v203, %v205
    %v207 = vrot.slane %v199, %v206
    %208 = vrot.lane.b32.xlu0 %v207, 32
    %v209 = vpop.permute.xlu0 %208
    %211 = vst.msk [vmem:[#allocation3 + $0x2] sm:$0x1] %vm167, %v209
    %v212 = vld [vmem:[#allocation2 + $0x6] sm:$0x1]
    %v215 = vunpack.c.l.s4 1983009808
    %v216 = vunpack.c.0.s8 %v215
    %v217 = vlaneseq
    %v218 = vshrl.u32 %v217, 7
    %v219 = vsub.s32 %v216, %v218
    %v220 = vrot.slane %v212, %v219
    %221 = vrot.lane.b32.xlu0 %v220, 64
    %v222 = vpop.permute.xlu0 %221
    %224 = vst.msk [vmem:[#allocation3 + $0x2] sm:$0x1] %vm181, %v222
    %v225 = vld [vmem:[#allocation2 + $0x7] sm:$0x1]
    %v228 = vunpack.c.l.s4 1983009808
    %v229 = vunpack.c.0.s8 %v228
    %v230 = vlaneseq
    %v231 = vshrl.u32 %v230, 7
    %v232 = vsub.s32 %v229, %v231
    %v233 = vrot.slane %v225, %v232
    %234 = vrot.lane.b32.xlu0 %v233, 96
    %v235 = vpop.permute.xlu0 %234
    %237 = vst.msk [vmem:[#allocation3 + $0x2] sm:$0x1] %vm195, %v235
    %v238 = vld [vmem:[#allocation2 + $0x8] sm:$0x1]
    %239 = vst.msk [vmem:[#allocation3 + $0x4] sm:$0x1] %vm153, %v238
    %v240 = vld [vmem:[#allocation2 + $0x9] sm:$0x1]
    %v243 = vunpack.c.l.s4 1983009808
    %v244 = vunpack.c.0.s8 %v243
    %v245 = vlaneseq
    %v246 = vshrl.u32 %v245, 7
    %v247 = vsub.s32 %v244, %v246
    %v248 = vrot.slane %v240, %v247
    %249 = vrot.lane.b32.xlu0 %v248, 32
    %v250 = vpop.permute.xlu0 %249
    %252 = vst.msk [vmem:[#allocation3 + $0x4] sm:$0x1] %vm167, %v250
    %v253 = vld [vmem:[#allocation2 + $0xa] sm:$0x1]
    %v256 = vunpack.c.l.s4 1983009808
    %v257 = vunpack.c.0.s8 %v256
    %v258 = vlaneseq
    %v259 = vshrl.u32 %v258, 7
    %v260 = vsub.s32 %v257, %v259
    %v261 = vrot.slane %v253, %v260
    %262 = vrot.lane.b32.xlu0 %v261, 64
    %v263 = vpop.permute.xlu0 %262
    %265 = vst.msk [vmem:[#allocation3 + $0x4] sm:$0x1] %vm181, %v263
    %v266 = vld [vmem:[#allocation2 + $0xb] sm:$0x1]
    %v269 = vunpack.c.l.s4 1983009808
    %v270 = vunpack.c.0.s8 %v269
    %v271 = vlaneseq
    %v272 = vshrl.u32 %v271, 7
    %v273 = vsub.s32 %v270, %v272
    %v274 = vrot.slane %v266, %v273
    %275 = vrot.lane.b32.xlu0 %v274, 96
    %v276 = vpop.permute.xlu0 %275
    %278 = vst.msk [vmem:[#allocation3 + $0x4] sm:$0x1] %vm195, %v276
    %v279 = vld [vmem:[#allocation2 + $0xc] sm:$0x1]
    %280 = vst.msk [vmem:[#allocation3 + $0x6] sm:$0x1] %vm153, %v279
    %v281 = vld [vmem:[#allocation2 + $0xd] sm:$0x1]
    %v284 = vunpack.c.l.s4 1983009808
    %v285 = vunpack.c.0.s8 %v284
    %v286 = vlaneseq
    %v287 = vshrl.u32 %v286, 7
    %v288 = vsub.s32 %v285, %v287
    %v289 = vrot.slane %v281, %v288
    %290 = vrot.lane.b32.xlu0 %v289, 32
    %v291 = vpop.permute.xlu0 %290
    %293 = vst.msk [vmem:[#allocation3 + $0x6] sm:$0x1] %vm167, %v291
    %v294 = vld [vmem:[#allocation2 + $0xe] sm:$0x1]
    %v297 = vunpack.c.l.s4 1983009808
    %v298 = vunpack.c.0.s8 %v297
    %v299 = vlaneseq
    %v300 = vshrl.u32 %v299, 7
    %v301 = vsub.s32 %v298, %v300
    %v302 = vrot.slane %v294, %v301
    %303 = vrot.lane.b32.xlu0 %v302, 64
    %v304 = vpop.permute.xlu0 %303
    %306 = vst.msk [vmem:[#allocation3 + $0x6] sm:$0x1] %vm181, %v304
    %v307 = vld [vmem:[#allocation2 + $0xf] sm:$0x1]
    %v310 = vunpack.c.l.s4 1983009808
    %v311 = vunpack.c.0.s8 %v310
    %v312 = vlaneseq
    %v313 = vshrl.u32 %v312, 7
    %v314 = vsub.s32 %v311, %v313
    %v315 = vrot.slane %v307, %v314
    %316 = vrot.lane.b32.xlu0 %v315, 96
    %v317 = vpop.permute.xlu0 %316
    %319 = vst.msk [vmem:[#allocation3 + $0x6] sm:$0x1] %vm195, %v317
    %v320 = vld [vmem:[#allocation2 + $0x10] sm:$0x1]
    %321 = vst.msk [vmem:[#allocation3 + $0x1] sm:$0x1] %vm153, %v320
    %v322 = vld [vmem:[#allocation2 + $0x11] sm:$0x1]
    %v325 = vunpack.c.l.s4 1983009808
    %v326 = vunpack.c.0.s8 %v325
    %v327 = vlaneseq
    %v328 = vshrl.u32 %v327, 7
    %v329 = vsub.s32 %v326, %v328
    %v330 = vrot.slane %v322, %v329
    %331 = vrot.lane.b32.xlu0 %v330, 32
    %v332 = vpop.permute.xlu0 %331
    %334 = vst.msk [vmem:[#allocation3 + $0x1] sm:$0x1] %vm167, %v332
    %v335 = vld [vmem:[#allocation2 + $0x12] sm:$0x1]
    %v338 = vunpack.c.l.s4 1983009808
    %v339 = vunpack.c.0.s8 %v338
    %v340 = vlaneseq
    %v341 = vshrl.u32 %v340, 7
    %v342 = vsub.s32 %v339, %v341
    %v343 = vrot.slane %v335, %v342
    %344 = vrot.lane.b32.xlu0 %v343, 64
    %v345 = vpop.permute.xlu0 %344
    %347 = vst.msk [vmem:[#allocation3 + $0x1] sm:$0x1] %vm181, %v345
    %v348 = vld [vmem:[#allocation2 + $0x13] sm:$0x1]
    %v351 = vunpack.c.l.s4 1983009808
    %v352 = vunpack.c.0.s8 %v351
    %v353 = vlaneseq
    %v354 = vshrl.u32 %v353, 7
    %v355 = vsub.s32 %v352, %v354
    %v356 = vrot.slane %v348, %v355
    %357 = vrot.lane.b32.xlu0 %v356, 96
    %v358 = vpop.permute.xlu0 %357
    %360 = vst.msk [vmem:[#allocation3 + $0x1] sm:$0x1] %vm195, %v358
    %v361 = vld [vmem:[#allocation2 + $0x14] sm:$0x1]
    %362 = vst.msk [vmem:[#allocation3 + $0x3] sm:$0x1] %vm153, %v361
    %v363 = vld [vmem:[#allocation2 + $0x15] sm:$0x1]
    %v366 = vunpack.c.l.s4 1983009808
    %v367 = vunpack.c.0.s8 %v366
    %v368 = vlaneseq
    %v369 = vshrl.u32 %v368, 7
    %v370 = vsub.s32 %v367, %v369
    %v371 = vrot.slane %v363, %v370
    %372 = vrot.lane.b32.xlu0 %v371, 32
    %v373 = vpop.permute.xlu0 %372
    %375 = vst.msk [vmem:[#allocation3 + $0x3] sm:$0x1] %vm167, %v373
    %v376 = vld [vmem:[#allocation2 + $0x16] sm:$0x1]
    %v379 = vunpack.c.l.s4 1983009808
    %v380 = vunpack.c.0.s8 %v379
    %v381 = vlaneseq
    %v382 = vshrl.u32 %v381, 7
    %v383 = vsub.s32 %v380, %v382
    %v384 = vrot.slane %v376, %v383
    %385 = vrot.lane.b32.xlu0 %v384, 64
    %v386 = vpop.permute.xlu0 %385
    %388 = vst.msk [vmem:[#allocation3 + $0x3] sm:$0x1] %vm181, %v386
    %v389 = vld [vmem:[#allocation2 + $0x17] sm:$0x1]
    %v392 = vunpack.c.l.s4 1983009808
    %v393 = vunpack.c.0.s8 %v392
    %v394 = vlaneseq
    %v395 = vshrl.u32 %v394, 7
    %v396 = vsub.s32 %v393, %v395
    %v397 = vrot.slane %v389, %v396
    %398 = vrot.lane.b32.xlu0 %v397, 96
    %v399 = vpop.permute.xlu0 %398
    %401 = vst.msk [vmem:[#allocation3 + $0x3] sm:$0x1] %vm195, %v399
    %v402 = vld [vmem:[#allocation2 + $0x18] sm:$0x1]
    %403 = vst.msk [vmem:[#allocation3 + $0x5] sm:$0x1] %vm153, %v402
    %v404 = vld [vmem:[#allocation2 + $0x19] sm:$0x1]
    %v407 = vunpack.c.l.s4 1983009808
    %v408 = vunpack.c.0.s8 %v407
    %v409 = vlaneseq
    %v410 = vshrl.u32 %v409, 7
    %v411 = vsub.s32 %v408, %v410
    %v412 = vrot.slane %v404, %v411
    %413 = vrot.lane.b32.xlu0 %v412, 32
    %v414 = vpop.permute.xlu0 %413
    %416 = vst.msk [vmem:[#allocation3 + $0x5] sm:$0x1] %vm167, %v414
    %v417 = vld [vmem:[#allocation2 + $0x1a] sm:$0x1]
    %v420 = vunpack.c.l.s4 1983009808
    %v421 = vunpack.c.0.s8 %v420
    %v422 = vlaneseq
    %v423 = vshrl.u32 %v422, 7
    %v424 = vsub.s32 %v421, %v423
    %v425 = vrot.slane %v417, %v424
    %426 = vrot.lane.b32.xlu0 %v425, 64
    %v427 = vpop.permute.xlu0 %426
    %429 = vst.msk [vmem:[#allocation3 + $0x5] sm:$0x1] %vm181, %v427
    %v430 = vld [vmem:[#allocation2 + $0x1b] sm:$0x1]
    %v433 = vunpack.c.l.s4 1983009808
    %v434 = vunpack.c.0.s8 %v433
    %v435 = vlaneseq
    %v436 = vshrl.u32 %v435, 7
    %v437 = vsub.s32 %v434, %v436
    %v438 = vrot.slane %v430, %v437
    %439 = vrot.lane.b32.xlu0 %v438, 96
    %v440 = vpop.permute.xlu0 %439
    %442 = vst.msk [vmem:[#allocation3 + $0x5] sm:$0x1] %vm195, %v440
    %v443 = vld [vmem:[#allocation2 + $0x1c] sm:$0x1]
    %444 = vst.msk [vmem:[#allocation3 + $0x7] sm:$0x1] %vm153, %v443
    %v445 = vld [vmem:[#allocation2 + $0x1d] sm:$0x1]
    %v448 = vunpack.c.l.s4 1983009808
    %v449 = vunpack.c.0.s8 %v448
    %v450 = vlaneseq
    %v451 = vshrl.u32 %v450, 7
    %v452 = vsub.s32 %v449, %v451
    %v453 = vrot.slane %v445, %v452
    %454 = vrot.lane.b32.xlu0 %v453, 32
    %v455 = vpop.permute.xlu0 %454
    %457 = vst.msk [vmem:[#allocation3 + $0x7] sm:$0x1] %vm167, %v455
    %v458 = vld [vmem:[#allocation2 + $0x1e] sm:$0x1]
    %v461 = vunpack.c.l.s4 1983009808
    %v462 = vunpack.c.0.s8 %v461
    %v463 = vlaneseq
    %v464 = vshrl.u32 %v463, 7
    %v465 = vsub.s32 %v462, %v464
    %v466 = vrot.slane %v458, %v465
    %467 = vrot.lane.b32.xlu0 %v466, 64
    %v468 = vpop.permute.xlu0 %467
    %470 = vst.msk [vmem:[#allocation3 + $0x7] sm:$0x1] %vm181, %v468
    %v471 = vld [vmem:[#allocation2 + $0x1f] sm:$0x1]
    %v474 = vunpack.c.l.s4 1983009808
    %v475 = vunpack.c.0.s8 %v474
    %v476 = vlaneseq
    %v477 = vshrl.u32 %v476, 7
    %v478 = vsub.s32 %v475, %v477
    %v479 = vrot.slane %v471, %v478
    %480 = vrot.lane.b32.xlu0 %v479, 96
    %v481 = vpop.permute.xlu0 %480
    %483 = vst.msk [vmem:[#allocation3 + $0x7] sm:$0x1] %vm195, %v481
    %v484 = vld [vmem:[#allocation3] sm:$0xff]
    %v486 = vcombine.high %v484, %v484
    %v488 = vunpack.c.l.s4 1983009808
    %v489 = vunpack.c.0.s8 %v488
    %v490 = vlaneseq
    %v491 = vshrl.u32 %v490, 7
    %v492 = vsub.s32 %v489, %v491
    %v493 = vrot.slane %v484, %v492
    %v495 = vunpack.c.l.s4 1983009808
    %v496 = vunpack.c.0.s8 %v495
    %v497 = vlaneseq
    %v498 = vshrl.u32 %v497, 7
    %v499 = vsub.s32 %v496, %v498
    %v500 = vrot.slane %v486, %v499
    %v501 = vcombine.high %v493, %v493
    %v502 = vcombine.high %v500, %v500
    %v507 = vpack.c.bf16 %v493, %v493
    %v508 = vpack.c.bf16 %v501, %v501
    %v509 = vpack.c.bf16 %v500, %v500
    %v510 = vpack.c.bf16 %v502, %v502
    %v511 = vld [vmem:[#allocation8 + $0x40] sm:$0xf]
    %v512 = vld [vmem:[#allocation8 + $0x44] sm:$0xf]
    %v513 = vld [vmem:[#allocation8 + $0x48] sm:$0xf]
    %v514 = vld [vmem:[#allocation8 + $0x4c] sm:$0xf]
    %v515 = vld [vmem:[#allocation8 + $0x50] sm:$0xf]
    %v516 = vld [vmem:[#allocation8 + $0x54] sm:$0xf]
    %v517 = vld [vmem:[#allocation8 + $0x58] sm:$0xf]
    %v518 = vld [vmem:[#allocation8 + $0x5c] sm:$0xf]
    %v519 = vld [vmem:[#allocation8 + $0x60] sm:$0xf]
    %v520 = vld [vmem:[#allocation8 + $0x64] sm:$0xf]
    %v521 = vld [vmem:[#allocation8 + $0x68] sm:$0xf]
    %v522 = vld [vmem:[#allocation8 + $0x6c] sm:$0xf]
    %v523 = vld [vmem:[#allocation8 + $0x70] sm:$0xf]
    %v524 = vld [vmem:[#allocation8 + $0x74] sm:$0xf]
    %v525 = vld [vmem:[#allocation8 + $0x78] sm:$0xf]
    %v526 = vld [vmem:[#allocation8 + $0x7c] sm:$0xf]
    %v527 = vld [vmem:[#allocation8 + $0x80] sm:$0xf]
    %v528 = vld [vmem:[#allocation8 + $0x84] sm:$0xf]
    %v529 = vld [vmem:[#allocation8 + $0x88] sm:$0xf]
    %v530 = vld [vmem:[#allocation8 + $0x8c] sm:$0xf]
    %v531 = vld [vmem:[#allocation8 + $0x90] sm:$0xf]
    %v532 = vld [vmem:[#allocation8 + $0x94] sm:$0xf]
    %v533 = vld [vmem:[#allocation8 + $0x98] sm:$0xf]
    %v534 = vld [vmem:[#allocation8 + $0x9c] sm:$0xf]
    %v535 = vld [vmem:[#allocation8 + $0xa0] sm:$0xf]
    %v536 = vld [vmem:[#allocation8 + $0xa4] sm:$0xf]
    %v537 = vld [vmem:[#allocation8 + $0xa8] sm:$0xf]
    %v538 = vld [vmem:[#allocation8 + $0xac] sm:$0xf]
    %v539 = vld [vmem:[#allocation8 + $0xb0] sm:$0xf]
    %v540 = vld [vmem:[#allocation8 + $0xb4] sm:$0xf]
    %v541 = vld [vmem:[#allocation8 + $0xb8] sm:$0xf]
    %v542 = vld [vmem:[#allocation8 + $0xbc] sm:$0xf]
    %v543 = vld [vmem:[#allocation8 + $0xc0] sm:$0xf]
    %v544 = vld [vmem:[#allocation8 + $0xc4] sm:$0xf]
    %v545 = vld [vmem:[#allocation8 + $0xc8] sm:$0xf]
    %v546 = vld [vmem:[#allocation8 + $0xcc] sm:$0xf]
    %v547 = vld [vmem:[#allocation8 + $0xd0] sm:$0xf]
    %v548 = vld [vmem:[#allocation8 + $0xd4] sm:$0xf]
    %v549 = vld [vmem:[#allocation8 + $0xd8] sm:$0xf]
    %v550 = vld [vmem:[#allocation8 + $0xdc] sm:$0xf]
    %v551 = vld [vmem:[#allocation8 + $0xe0] sm:$0xf]
    %v552 = vld [vmem:[#allocation8 + $0xe4] sm:$0xf]
    %v553 = vld [vmem:[#allocation8 + $0xe8] sm:$0xf]
    %v554 = vld [vmem:[#allocation8 + $0xec] sm:$0xf]
    %v555 = vld [vmem:[#allocation8 + $0xf0] sm:$0xf]
    %v556 = vld [vmem:[#allocation8 + $0xf4] sm:$0xf]
    %v557 = vld [vmem:[#allocation8 + $0xf8] sm:$0xf]
    %v558 = vld [vmem:[#allocation8 + $0xfc] sm:$0xf]
    %v559 = vld [vmem:[#allocation8 + $0x100] sm:$0xf]
    %v560 = vld [vmem:[#allocation8 + $0x104] sm:$0xf]
    %v561 = vld [vmem:[#allocation8 + $0x108] sm:$0xf]
    %v562 = vld [vmem:[#allocation8 + $0x10c] sm:$0xf]
    %v563 = vld [vmem:[#allocation8 + $0x110] sm:$0xf]
    %v564 = vld [vmem:[#allocation8 + $0x114] sm:$0xf]
    %v565 = vld [vmem:[#allocation8 + $0x118] sm:$0xf]
    %v566 = vld [vmem:[#allocation8 + $0x11c] sm:$0xf]
    %v567 = vld [vmem:[#allocation8 + $0x120] sm:$0xf]
    %v568 = vld [vmem:[#allocation8 + $0x124] sm:$0xf]
    %v569 = vld [vmem:[#allocation8 + $0x128] sm:$0xf]
    %v570 = vld [vmem:[#allocation8 + $0x12c] sm:$0xf]
    %v571 = vld [vmem:[#allocation8 + $0x130] sm:$0xf]
    %v572 = vld [vmem:[#allocation8 + $0x134] sm:$0xf]
    %v573 = vld [vmem:[#allocation8 + $0x138] sm:$0xf]
    %v574 = vld [vmem:[#allocation8 + $0x13c] sm:$0xf]
    %v575 = vld [vmem:[%s3 + $0x1] sm:$0x1]
    %v576 = vlaneseq
    %v577 = vshrl.u32 %v576, 7
    %v578 = vsub.s32 0, %v577
    %v579 = vrot.slane %v575, %v578
    %v644 = vunpack.c.l.b16 %v511
    %v645 = vunpack.c.l.b16 %v512
    %v646 = vunpack.c.l.b16 %v513
    %v647 = vunpack.c.l.b16 %v514
    %v648 = vunpack.c.l.b16 %v515
    %v649 = vunpack.c.l.b16 %v516
    %v650 = vunpack.c.l.b16 %v517
    %v651 = vunpack.c.l.b16 %v518
    %v652 = vunpack.c.l.b16 %v519
    %v653 = vunpack.c.l.b16 %v520
    %v654 = vunpack.c.l.b16 %v521
    %v655 = vunpack.c.l.b16 %v522
    %v656 = vunpack.c.l.b16 %v523
    %v657 = vunpack.c.l.b16 %v524
    %v658 = vunpack.c.l.b16 %v525
    %v659 = vunpack.c.l.b16 %v526
    %v660 = vunpack.c.l.b16 %v527
    %v661 = vunpack.c.l.b16 %v528
    %v662 = vunpack.c.l.b16 %v529
    %v663 = vunpack.c.l.b16 %v530
    %v664 = vunpack.c.l.b16 %v531
    %v665 = vunpack.c.l.b16 %v532
    %v666 = vunpack.c.l.b16 %v533
    %v667 = vunpack.c.l.b16 %v534
    %v668 = vunpack.c.l.b16 %v535
    %v669 = vunpack.c.l.b16 %v536
    %v670 = vunpack.c.l.b16 %v537
    %v671 = vunpack.c.l.b16 %v538
    %v672 = vunpack.c.l.b16 %v539
    %v673 = vunpack.c.l.b16 %v540
    %v674 = vunpack.c.l.b16 %v541
    %v675 = vunpack.c.l.b16 %v542
    %v676 = vunpack.c.l.b16 %v543
    %v677 = vunpack.c.l.b16 %v544
    %v678 = vunpack.c.l.b16 %v545
    %v679 = vunpack.c.l.b16 %v546
    %v680 = vunpack.c.l.b16 %v547
    %v681 = vunpack.c.l.b16 %v548
    %v682 = vunpack.c.l.b16 %v549
    %v683 = vunpack.c.l.b16 %v550
    %v684 = vunpack.c.l.b16 %v551
    %v685 = vunpack.c.l.b16 %v552
    %v686 = vunpack.c.l.b16 %v553
    %v687 = vunpack.c.l.b16 %v554
    %v688 = vunpack.c.l.b16 %v555
    %v689 = vunpack.c.l.b16 %v556
    %v690 = vunpack.c.l.b16 %v557
    %v691 = vunpack.c.l.b16 %v558
    %v692 = vunpack.c.l.b16 %v559
    %v693 = vunpack.c.l.b16 %v560
    %v694 = vunpack.c.l.b16 %v561
    %v695 = vunpack.c.l.b16 %v562
    %v696 = vunpack.c.l.b16 %v563
    %v697 = vunpack.c.l.b16 %v564
    %v698 = vunpack.c.l.b16 %v565
    %v699 = vunpack.c.l.b16 %v566
    %v700 = vunpack.c.l.b16 %v567
    %v701 = vunpack.c.l.b16 %v568
    %v702 = vunpack.c.l.b16 %v569
    %v703 = vunpack.c.l.b16 %v570
    %v704 = vunpack.c.l.b16 %v571
    %v705 = vunpack.c.l.b16 %v572
    %v706 = vunpack.c.l.b16 %v573
    %v707 = vunpack.c.l.b16 %v574
    %v708 = vpack.c.b16 %v645, %v644
    %v709 = vpack.c.b16 %v647, %v646
    %v710 = vpack.c.b16 %v649, %v648
    %v711 = vpack.c.b16 %v651, %v650
    %v712 = vpack.c.b16 %v653, %v652
    %v713 = vpack.c.b16 %v655, %v654
    %v714 = vpack.c.b16 %v657, %v656
    %v715 = vpack.c.b16 %v659, %v658
    %v716 = vpack.c.b16 %v661, %v660
    %v717 = vpack.c.b16 %v663, %v662
    %v718 = vpack.c.b16 %v665, %v664
    %v719 = vpack.c.b16 %v667, %v666
    %v720 = vpack.c.b16 %v669, %v668
    %v721 = vpack.c.b16 %v671, %v670
    %v722 = vpack.c.b16 %v673, %v672
    %v723 = vpack.c.b16 %v675, %v674
    %v724 = vpack.c.b16 %v677, %v676
    %v725 = vpack.c.b16 %v679, %v678
    %v726 = vpack.c.b16 %v681, %v680
    %v727 = vpack.c.b16 %v683, %v682
    %v728 = vpack.c.b16 %v685, %v684
    %v729 = vpack.c.b16 %v687, %v686
    %v730 = vpack.c.b16 %v689, %v688
    %v731 = vpack.c.b16 %v691, %v690
    %v732 = vpack.c.b16 %v693, %v692
    %v733 = vpack.c.b16 %v695, %v694
    %v734 = vpack.c.b16 %v697, %v696
    %v735 = vpack.c.b16 %v699, %v698
    %v736 = vpack.c.b16 %v701, %v700
    %v737 = vpack.c.b16 %v703, %v702
    %v738 = vpack.c.b16 %v705, %v704
    %v739 = vpack.c.b16 %v707, %v706
    %772 = vmatprep.subr.bf16.mxu0 0
    %773 = vmatpush1.bf16.msra.mxu0 %v708
    %774 = vmatprep.subr.bf16.mxu0 0
    %775 = vmatpush1.bf16.msra.mxu0 %v709
    %776 = vmatprep.subr.bf16.mxu0 0
    %777 = vmatpush1.bf16.msra.mxu0 %v710
    %778 = vmatprep.subr.bf16.mxu0 0
    %779 = vmatpush1.bf16.msra.mxu0 %v711
    %780 = vmatprep.subr.bf16.mxu0 0
    %781 = vmatpush1.bf16.msra.mxu0 %v712
    %782 = vmatprep.subr.bf16.mxu0 0
    %783 = vmatpush1.bf16.msra.mxu0 %v713
    %784 = vmatprep.subr.bf16.mxu0 0
    %785 = vmatpush1.bf16.msra.mxu0 %v714
    %786 = vmatprep.subr.bf16.mxu0 0
    %787 = vmatpush1.bf16.msra.mxu0 %v715
    %788 = vmatprep.subr.bf16.mxu0 0
    %789 = vmatpush1.bf16.msra.mxu0 %v716
    %790 = vmatprep.subr.bf16.mxu0 0
    %791 = vmatpush1.bf16.msra.mxu0 %v717
    %792 = vmatprep.subr.bf16.mxu0 0
    %793 = vmatpush1.bf16.msra.mxu0 %v718
    %794 = vmatprep.subr.bf16.mxu0 0
    %795 = vmatpush1.bf16.msra.mxu0 %v719
    %796 = vmatprep.subr.bf16.mxu0 0
    %797 = vmatpush1.bf16.msra.mxu0 %v720
    %798 = vmatprep.subr.bf16.mxu0 0
    %799 = vmatpush1.bf16.msra.mxu0 %v721
    %800 = vmatprep.subr.bf16.mxu0 0
    %801 = vmatpush1.bf16.msra.mxu0 %v722
    %802 = vmatprep.subr.bf16.mxu0 0
    %803 = vmatpush1.bf16.msra.mxu0 %v723
    %804 = vmatprep.mubr.bf16.mxu0 %v508
    %805 = vmatmul.mubr.bf16.gmra.mrb[0].mxu0 %v507
    %v806 = vpop.f32.mrb[0].mxu0
    %v807 = vadd.f32 %v579, %v806
    %v808 = vpop.f32.mrb[0].mxu0
    %v809 = vpop.f32.mrb[0].mxu0
    %v810 = vpop.f32.mrb[0].mxu0
    %811 = vdwg.mxu0
    %812 = vmatprep.subr.bf16.mxu0 0
    %813 = vmatpush1.bf16.msra.mxu0 %v724
    %814 = vmatprep.subr.bf16.mxu0 0
    %815 = vmatpush1.bf16.msra.mxu0 %v725
    %816 = vmatprep.subr.bf16.mxu0 0
    %817 = vmatpush1.bf16.msra.mxu0 %v726
    %818 = vmatprep.subr.bf16.mxu0 0
    %819 = vmatpush1.bf16.msra.mxu0 %v727
    %820 = vmatprep.subr.bf16.mxu0 0
    %821 = vmatpush1.bf16.msra.mxu0 %v728
    %822 = vmatprep.subr.bf16.mxu0 0
    %823 = vmatpush1.bf16.msra.mxu0 %v729
    %824 = vmatprep.subr.bf16.mxu0 0
    %825 = vmatpush1.bf16.msra.mxu0 %v730
    %826 = vmatprep.subr.bf16.mxu0 0
    %827 = vmatpush1.bf16.msra.mxu0 %v731
    %828 = vmatprep.subr.bf16.mxu0 0
    %829 = vmatpush1.bf16.msra.mxu0 %v732
    %830 = vmatprep.subr.bf16.mxu0 0
    %831 = vmatpush1.bf16.msra.mxu0 %v733
    %832 = vmatprep.subr.bf16.mxu0 0
    %833 = vmatpush1.bf16.msra.mxu0 %v734
    %834 = vmatprep.subr.bf16.mxu0 0
    %835 = vmatpush1.bf16.msra.mxu0 %v735
    %836 = vmatprep.subr.bf16.mxu0 0
    %837 = vmatpush1.bf16.msra.mxu0 %v736
    %838 = vmatprep.subr.bf16.mxu0 0
    %839 = vmatpush1.bf16.msra.mxu0 %v737
    %840 = vmatprep.subr.bf16.mxu0 0
    %841 = vmatpush1.bf16.msra.mxu0 %v738
    %842 = vmatprep.subr.bf16.mxu0 0
    %843 = vmatpush1.bf16.msra.mxu0 %v739
    %844 = vmatprep.mubr.bf16.mxu0 %v510
    %845 = vmatmul.mubr.bf16.gmra.mrb[0].mxu0 %v509
    %v846 = vpop.f32.mrb[0].mxu0
    %v847 = vadd.f32 %v807, %v846
    %v848 = vpop.f32.mrb[0].mxu0
    %v849 = vpop.f32.mrb[0].mxu0
    %v850 = vpop.f32.mrb[0].mxu0
    %851 = vdwg.mxu0
    %v852 = vmax.f32 %v847, 0.0
    %v853 = vpack.c.bf16 %v852, %v852
    %v854 = vld [vmem:[%s2] sm:$0xff]
    %v855 = vld [vmem:[%s2 + $0x8] sm:$0xff]
    %v856 = vld [vmem:[%s2 + $0x10] sm:$0xff]
    %v857 = vld [vmem:[%s2 + $0x18] sm:$0xff]
    %v858 = vld [vmem:[%s2 + $0x20] sm:$0xff]
    %v859 = vld [vmem:[%s2 + $0x28] sm:$0xff]
    %v860 = vld [vmem:[%s2 + $0x30] sm:$0xff]
    %v861 = vld [vmem:[%s2 + $0x38] sm:$0xff]
    %v862 = vld [vmem:[%s2 + $0x40] sm:$0xff]
    %v863 = vld [vmem:[%s2 + $0x48] sm:$0xff]
    %v864 = vld [vmem:[%s2 + $0x50] sm:$0xff]
    %v865 = vld [vmem:[%s2 + $0x58] sm:$0xff]
    %v866 = vld [vmem:[%s2 + $0x60] sm:$0xff]
    %v867 = vld [vmem:[%s2 + $0x68] sm:$0xff]
    %v868 = vld [vmem:[%s2 + $0x70] sm:$0xff]
    %v869 = vld [vmem:[%s2 + $0x78] sm:$0xff]
    %v886 = vunpack.c.l.b16 %v854
    %v887 = vunpack.c.h.b16 %v854
    %v888 = vunpack.c.l.b16 %v855
    %v889 = vunpack.c.h.b16 %v855
    %v890 = vunpack.c.l.b16 %v856
    %v891 = vunpack.c.h.b16 %v856
    %v892 = vunpack.c.l.b16 %v857
    %v893 = vunpack.c.h.b16 %v857
    %v894 = vunpack.c.l.b16 %v858
    %v895 = vunpack.c.h.b16 %v858
    %v896 = vunpack.c.l.b16 %v859
    %v897 = vunpack.c.h.b16 %v859
    %v898 = vunpack.c.l.b16 %v860
    %v899 = vunpack.c.h.b16 %v860
    %v900 = vunpack.c.l.b16 %v861
    %v901 = vunpack.c.h.b16 %v861
    %v902 = vunpack.c.l.b16 %v862
    %v903 = vunpack.c.h.b16 %v862
    %v904 = vunpack.c.l.b16 %v863
    %v905 = vunpack.c.h.b16 %v863
    %v906 = vunpack.c.l.b16 %v864
    %v907 = vunpack.c.h.b16 %v864
    %v908 = vunpack.c.l.b16 %v865
    %v909 = vunpack.c.h.b16 %v865
    %v910 = vunpack.c.l.b16 %v866
    %v911 = vunpack.c.h.b16 %v866
    %v912 = vunpack.c.l.b16 %v867
    %v913 = vunpack.c.h.b16 %v867
    %v914 = vunpack.c.l.b16 %v868
    %v915 = vunpack.c.h.b16 %v868
    %v916 = vunpack.c.l.b16 %v869
    %v917 = vunpack.c.h.b16 %v869
    %v918 = vpack.c.b16 %v888, %v886
    %v919 = vpack.c.b16 %v889, %v887
    %v920 = vpack.c.b16 %v892, %v890
    %v921 = vpack.c.b16 %v893, %v891
    %v922 = vpack.c.b16 %v896, %v894
    %v923 = vpack.c.b16 %v897, %v895
    %v924 = vpack.c.b16 %v900, %v898
    %v925 = vpack.c.b16 %v901, %v899
    %v926 = vpack.c.b16 %v904, %v902
    %v927 = vpack.c.b16 %v905, %v903
    %v928 = vpack.c.b16 %v908, %v906
    %v929 = vpack.c.b16 %v909, %v907
    %v930 = vpack.c.b16 %v912, %v910
    %v931 = vpack.c.b16 %v913, %v911
    %v932 = vpack.c.b16 %v916, %v914
    %v933 = vpack.c.b16 %v917, %v915
    %950 = vmatprep.subr.bf16.mxu0 %v919
    %951 = vmatpush1.bf16.msra.mxu0 %v918
    %952 = vmatprep.subr.bf16.mxu0 %v921
    %953 = vmatpush1.bf16.msra.mxu0 %v920
    %954 = vmatprep.subr.bf16.mxu0 %v923
    %955 = vmatpush1.bf16.msra.mxu0 %v922
    %956 = vmatprep.subr.bf16.mxu0 %v925
    %957 = vmatpush1.bf16.msra.mxu0 %v924
    %958 = vmatprep.subr.bf16.mxu0 %v927
    %959 = vmatpush1.bf16.msra.mxu0 %v926
    %960 = vmatprep.subr.bf16.mxu0 %v929
    %961 = vmatpush1.bf16.msra.mxu0 %v928
    %962 = vmatprep.subr.bf16.mxu0 %v931
    %963 = vmatpush1.bf16.msra.mxu0 %v930
    %964 = vmatprep.subr.bf16.mxu0 %v933
    %965 = vmatpush1.bf16.msra.mxu0 %v932
    %966 = vmatprep.subr.bf16.mxu0 0
    %967 = vmatpush1.bf16.msra.mxu0 0
    %968 = vmatprep.subr.bf16.mxu0 0
    %969 = vmatpush1.bf16.msra.mxu0 0
    %970 = vmatprep.subr.bf16.mxu0 0
    %971 = vmatpush1.bf16.msra.mxu0 0
    %972 = vmatprep.subr.bf16.mxu0 0
    %973 = vmatpush1.bf16.msra.mxu0 0
    %974 = vmatprep.subr.bf16.mxu0 0
    %975 = vmatpush1.bf16.msra.mxu0 0
    %976 = vmatprep.subr.bf16.mxu0 0
    %977 = vmatpush1.bf16.msra.mxu0 0
    %978 = vmatprep.subr.bf16.mxu0 0
    %979 = vmatpush1.bf16.msra.mxu0 0
    %980 = vmatprep.subr.bf16.mxu0 0
    %981 = vmatpush1.bf16.msra.mxu0 0
    %982 = vmatprep.mubr.bf16.mxu0 0
    %983 = vmatmul.mubr.bf16.gmra.mrb[0].mxu0 %v853
    %v984 = vpop.f32.mrb[0].mxu0
    %v985 = vadd.f32 0.0, %v984
    %v986 = vpop.f32.mrb[0].mxu0
    %v987 = vadd.f32 0.0, %v986
    %v988 = vpop.f32.mrb[0].mxu0
    %v989 = vpop.f32.mrb[0].mxu0
    %990 = vdwg.mxu0
    %v991 = vld [vmem:[%s3 + $0x2] sm:$0x1]
    %v992 = vlaneseq
    %v993 = vshrl.u32 %v992, 7
    %v994 = vsub.s32 0, %v993
    %v995 = vrot.slane %v991, %v994
    %v996 = vadd.f32 %v985, %v995
    %v997 = vld [vmem:[%s3 + $0x3] sm:$0x1]
    %v998 = vlaneseq
    %v999 = vshrl.u32 %v998, 7
    %v1000 = vsub.s32 0, %v999
    %v1001 = vrot.slane %v997, %v1000
    %v1002 = vadd.f32 %v987, %v1001
    %1003 = vst [vmem:[%s4] sm:$0x3] %v996
    %1004 = vst [vmem:[%s4 + $0x2] sm:$0x3] %v1002
    %v1005 = vld [vmem:[%s0 + $0x8] sm:$0x3]
    %v1006 = vmul.f32 %v1002, 0.5
    %v1007 = vmul.f32 %v1006, 1.442695
    %v1008 = vpow.pop %v1007
    %v1009 = vmul.f32 %v1005, %v1008
    %v1010 = vadd.f32 %v996, %v1009
    %v1011 = vpack.c.bf16 %v1010, %v1010
    %v1012 = vld [vmem:[#allocation8 + $0x140] sm:$0xf]
    %v1013 = vld [vmem:[#allocation8 + $0x144] sm:$0xf]
    %v1014 = vld [vmem:[#allocation8 + $0x148] sm:$0xf]
    %v1015 = vld [vmem:[#allocation8 + $0x14c] sm:$0xf]
    %v1016 = vld [vmem:[#allocation8 + $0x150] sm:$0xf]
    %v1017 = vld [vmem:[#allocation8 + $0x154] sm:$0xf]
    %v1018 = vld [vmem:[#allocation8 + $0x158] sm:$0xf]
    %v1019 = vld [vmem:[#allocation8 + $0x15c] sm:$0xf]
    %v1020 = vld [vmem:[#allocation8 + $0x160] sm:$0xf]
    %v1021 = vld [vmem:[#allocation8 + $0x164] sm:$0xf]
    %v1022 = vld [vmem:[#allocation8 + $0x168] sm:$0xf]
    %v1023 = vld [vmem:[#allocation8 + $0x16c] sm:$0xf]
    %v1024 = vld [vmem:[#allocation8 + $0x170] sm:$0xf]
    %v1025 = vld [vmem:[#allocation8 + $0x174] sm:$0xf]
    %v1026 = vld [vmem:[#allocation8 + $0x178] sm:$0xf]
    %v1027 = vld [vmem:[#allocation8 + $0x17c] sm:$0xf]
    %v1028 = vld [vmem:[%s3 + $0x4] sm:$0x1]
    %v1029 = vlaneseq
    %v1030 = vshrl.u32 %v1029, 7
    %v1031 = vsub.s32 0, %v1030
    %v1032 = vrot.slane %v1028, %v1031
    %v1049 = vunpack.c.l.b16 %v1012
    %v1050 = vunpack.c.l.b16 %v1013
    %v1051 = vunpack.c.l.b16 %v1014
    %v1052 = vunpack.c.l.b16 %v1015
    %v1053 = vunpack.c.l.b16 %v1016
    %v1054 = vunpack.c.l.b16 %v1017
    %v1055 = vunpack.c.l.b16 %v1018
    %v1056 = vunpack.c.l.b16 %v1019
    %v1057 = vunpack.c.l.b16 %v1020
    %v1058 = vunpack.c.l.b16 %v1021
    %v1059 = vunpack.c.l.b16 %v1022
    %v1060 = vunpack.c.l.b16 %v1023
    %v1061 = vunpack.c.l.b16 %v1024
    %v1062 = vunpack.c.l.b16 %v1025
    %v1063 = vunpack.c.l.b16 %v1026
    %v1064 = vunpack.c.l.b16 %v1027
    %v1065 = vpack.c.b16 %v1050, %v1049
    %v1066 = vpack.c.b16 %v1052, %v1051
    %v1067 = vpack.c.b16 %v1054, %v1053
    %v1068 = vpack.c.b16 %v1056, %v1055
    %v1069 = vpack.c.b16 %v1058, %v1057
    %v1070 = vpack.c.b16 %v1060, %v1059
    %v1071 = vpack.c.b16 %v1062, %v1061
    %v1072 = vpack.c.b16 %v1064, %v1063
    %1081 = vmatprep.subr.bf16.mxu0 0
    %1082 = vmatpush1.bf16.msra.mxu0 %v1065
    %1083 = vmatprep.subr.bf16.mxu0 0
    %1084 = vmatpush1.bf16.msra.mxu0 %v1066
    %1085 = vmatprep.subr.bf16.mxu0 0
    %1086 = vmatpush1.bf16.msra.mxu0 %v1067
    %1087 = vmatprep.subr.bf16.mxu0 0
    %1088 = vmatpush1.bf16.msra.mxu0 %v1068
    %1089 = vmatprep.subr.bf16.mxu0 0
    %1090 = vmatpush1.bf16.msra.mxu0 %v1069
    %1091 = vmatprep.subr.bf16.mxu0 0
    %1092 = vmatpush1.bf16.msra.mxu0 %v1070
    %1093 = vmatprep.subr.bf16.mxu0 0
    %1094 = vmatpush1.bf16.msra.mxu0 %v1071
    %1095 = vmatprep.subr.bf16.mxu0 0
    %1096 = vmatpush1.bf16.msra.mxu0 %v1072
    %1097 = vmatprep.subr.bf16.mxu0 0
    %1098 = vmatpush1.bf16.msra.mxu0 0
    %1099 = vmatprep.subr.bf16.mxu0 0
    %1100 = vmatpush1.bf16.msra.mxu0 0
    %1101 = vmatprep.subr.bf16.mxu0 0
    %1102 = vmatpush1.bf16.msra.mxu0 0
    %1103 = vmatprep.subr.bf16.mxu0 0
    %1104 = vmatpush1.bf16.msra.mxu0 0
    %1105 = vmatprep.subr.bf16.mxu0 0
    %1106 = vmatpush1.bf16.msra.mxu0 0
    %1107 = vmatprep.subr.bf16.mxu0 0
    %1108 = vmatpush1.bf16.msra.mxu0 0
    %1109 = vmatprep.subr.bf16.mxu0 0
    %1110 = vmatpush1.bf16.msra.mxu0 0
    %1111 = vmatprep.subr.bf16.mxu0 0
    %1112 = vmatpush1.bf16.msra.mxu0 0
    %1113 = vmatprep.mubr.bf16.mxu0 0
    %1114 = vmatmul.mubr.bf16.gmra.mrb[0].mxu0 %v1011
    %v1115 = vpop.f32.mrb[0].mxu0
    %v1116 = vadd.f32 %v1032, %v1115
    %v1117 = vpop.f32.mrb[0].mxu0
    %v1118 = vpop.f32.mrb[0].mxu0
    %v1119 = vpop.f32.mrb[0].mxu0
    %1120 = vdwg.mxu0
    %v1121 = vmax.f32 %v1116, 0.0
    %1122 = vst [vmem:[#allocation4] sm:$0xff] 0.0
    %1123 = vst [vmem:[#allocation4 + $0x8] sm:$0xff] 0.0
    %1124 = vst [vmem:[#allocation4 + $0x10] sm:$0xff] 0.0
    %1125 = vst [vmem:[#allocation4 + $0x18] sm:$0xff] 0.0
    %1126 = vst [vmem:[#allocation4 + $0x20] sm:$0xff] 0.0
    %1127 = vst [vmem:[#allocation4 + $0x28] sm:$0xff] 0.0
    %1128 = vst [vmem:[#allocation4 + $0x30] sm:$0x3] 0.0
    %1129 = vst [vmem:[#allocation4 + $0xc] sm:$0x1] %v1121
    %1130 = vst [vmem:[#allocation4 + $0x24] sm:$0x2] %v1121
    %v1131 = vld [vmem:[#allocation4] sm:$0x3]
    %vm1132 = vcmask 517120
    %1133 = vst.msk [vmem:[#allocation5] sm:$0x3] %vm1132, %v1131
    %v1134 = vld [vmem:[#allocation4 + $0x1] sm:$0x3]
    %1136 = vrot.lane.b32.xlu0 %v1134, 64
    %v1137 = vpop.permute.xlu0 %1136
    %vm1139 = vcmask 1041920
    %1140 = vst.msk [vmem:[#allocation5] sm:$0x3] %vm1139, %v1137
    %v1141 = vld [vmem:[#allocation4 + $0x2] sm:$0x3]
    %1142 = vst.msk [vmem:[#allocation5 + $0x8] sm:$0x3] %vm1132, %v1141
    %v1143 = vld [vmem:[#allocation4 + $0x3] sm:$0x3]
    %1145 = vrot.lane.b32.xlu0 %v1143, 64
    %v1146 = vpop.permute.xlu0 %1145
    %1148 = vst.msk [vmem:[#allocation5 + $0x8] sm:$0x3] %vm1139, %v1146
    %v1149 = vld [vmem:[#allocation4 + $0x5] sm:$0x3]
    %1150 = vst.msk [vmem:[#allocation5 + $0x10] sm:$0x3] %vm1132, %v1149
    %v1151 = vld [vmem:[#allocation4 + $0x6] sm:$0x3]
    %1153 = vrot.lane.b32.xlu0 %v1151, 64
    %v1154 = vpop.permute.xlu0 %1153
    %1156 = vst.msk [vmem:[#allocation5 + $0x10] sm:$0x3] %vm1139, %v1154
    %v1157 = vld [vmem:[#allocation4 + $0x7] sm:$0x3]
    %1158 = vst.msk [vmem:[#allocation5 + $0x18] sm:$0x3] %vm1132, %v1157
    %v1159 = vld [vmem:[#allocation4 + $0x8] sm:$0x3]
    %1161 = vrot.lane.b32.xlu0 %v1159, 64
    %v1162 = vpop.permute.xlu0 %1161
    %1164 = vst.msk [vmem:[#allocation5 + $0x18] sm:$0x3] %vm1139, %v1162
    %v1165 = vld [vmem:[#allocation4 + $0xa] sm:$0x3]
    %1166 = vst.msk [vmem:[#allocation5 + $0x20] sm:$0x3] %vm1132, %v1165
    %v1167 = vld [vmem:[#allocation4 + $0xb] sm:$0x3]
    %1169 = vrot.lane.b32.xlu0 %v1167, 64
    %v1170 = vpop.permute.xlu0 %1169
    %1172 = vst.msk [vmem:[#allocation5 + $0x20] sm:$0x3] %vm1139, %v1170
    %v1173 = vld [vmem:[#allocation4 + $0xc] sm:$0x3]
    %1174 = vst.msk [vmem:[#allocation5 + $0x28] sm:$0x3] %vm1132, %v1173
    %v1175 = vld [vmem:[#allocation4 + $0xd] sm:$0x3]
    %1177 = vrot.lane.b32.xlu0 %v1175, 64
    %v1178 = vpop.permute.xlu0 %1177
    %1180 = vst.msk [vmem:[#allocation5 + $0x28] sm:$0x3] %vm1139, %v1178
    %v1181 = vld [vmem:[#allocation4 + $0xf] sm:$0x3]
    %1182 = vst.msk [vmem:[#allocation5 + $0x30] sm:$0x3] %vm1132, %v1181
    %v1183 = vld [vmem:[#allocation4 + $0x10] sm:$0x3]
    %1185 = vrot.lane.b32.xlu0 %v1183, 64
    %v1186 = vpop.permute.xlu0 %1185
    %1188 = vst.msk [vmem:[#allocation5 + $0x30] sm:$0x3] %vm1139, %v1186
    %v1189 = vld [vmem:[#allocation4 + $0x11] sm:$0x3]
    %1190 = vst.msk [vmem:[#allocation5 + $0x38] sm:$0x3] %vm1132, %v1189
    %v1191 = vld [vmem:[#allocation4 + $0x12] sm:$0x3]
    %1193 = vrot.lane.b32.xlu0 %v1191, 64
    %v1194 = vpop.permute.xlu0 %1193
    %1196 = vst.msk [vmem:[#allocation5 + $0x38] sm:$0x3] %vm1139, %v1194
    %v1197 = vld [vmem:[#allocation4 + $0x5] sm:$0x3]
    %v1199 = vrot.slane %v1197, 6
    %vm1201 = vcmask 519170
    %1202 = vst.msk [vmem:[#allocation5] sm:$0xc] %vm1201, %v1199
    %v1203 = vld [vmem:[#allocation4 + $0x6] sm:$0x3]
    %v1205 = vrot.slane %v1203, 6
    %1206 = vrot.lane.b32.xlu0 %v1205, 64
    %v1207 = vpop.permute.xlu0 %1206
    %vm1209 = vcmask 1043970
    %1210 = vst.msk [vmem:[#allocation5] sm:$0xc] %vm1209, %v1207
    %v1211 = vld [vmem:[#allocation4 + $0x7] sm:$0x3]
    %v1213 = vrot.slane %v1211, 6
    %1215 = vst.msk [vmem:[#allocation5 + $0x8] sm:$0xc] %vm1201, %v1213
    %v1216 = vld [vmem:[#allocation4 + $0x8] sm:$0x3]
    %v1218 = vrot.slane %v1216, 6
    %1219 = vrot.lane.b32.xlu0 %v1218, 64
    %v1220 = vpop.permute.xlu0 %1219
    %1222 = vst.msk [vmem:[#allocation5 + $0x8] sm:$0xc] %vm1209, %v1220
    %v1223 = vld [vmem:[#allocation4 + $0xa] sm:$0x3]
    %v1225 = vrot.slane %v1223, 6
    %1227 = vst.msk [vmem:[#allocation5 + $0x10] sm:$0xc] %vm1201, %v1225
    %v1228 = vld [vmem:[#allocation4 + $0xb] sm:$0x3]
    %v1230 = vrot.slane %v1228, 6
    %1231 = vrot.lane.b32.xlu0 %v1230, 64
    %v1232 = vpop.permute.xlu0 %1231
    %1234 = vst.msk [vmem:[#allocation5 + $0x10] sm:$0xc] %vm1209, %v1232
    %v1235 = vld [vmem:[#allocation4 + $0xc] sm:$0x3]
    %v1237 = vrot.slane %v1235, 6
    %1239 = vst.msk [vmem:[#allocation5 + $0x18] sm:$0xc] %vm1201, %v1237
    %v1240 = vld [vmem:[#allocation4 + $0xd] sm:$0x3]
    %v1242 = vrot.slane %v1240, 6
    %1243 = vrot.lane.b32.xlu0 %v1242, 64
    %v1244 = vpop.permute.xlu0 %1243
    %1246 = vst.msk [vmem:[#allocation5 + $0x18] sm:$0xc] %vm1209, %v1244
    %v1247 = vld [vmem:[#allocation4 + $0xf] sm:$0x3]
    %v1249 = vrot.slane %v1247, 6
    %1251 = vst.msk [vmem:[#allocation5 + $0x20] sm:$0xc] %vm1201, %v1249
    %v1252 = vld [vmem:[#allocation4 + $0x10] sm:$0x3]
    %v1254 = vrot.slane %v1252, 6
    %1255 = vrot.lane.b32.xlu0 %v1254, 64
    %v1256 = vpop.permute.xlu0 %1255
    %1258 = vst.msk [vmem:[#allocation5 + $0x20] sm:$0xc] %vm1209, %v1256
    %v1259 = vld [vmem:[#allocation4 + $0x11] sm:$0x3]
    %v1261 = vrot.slane %v1259, 6
    %1263 = vst.msk [vmem:[#allocation5 + $0x28] sm:$0xc] %vm1201, %v1261
    %v1264 = vld [vmem:[#allocation4 + $0x12] sm:$0x3]
    %v1266 = vrot.slane %v1264, 6
    %1267 = vrot.lane.b32.xlu0 %v1266, 64
    %v1268 = vpop.permute.xlu0 %1267
    %1270 = vst.msk [vmem:[#allocation5 + $0x28] sm:$0xc] %vm1209, %v1268
    %v1271 = vld [vmem:[#allocation4 + $0x14] sm:$0x3]
    %v1273 = vrot.slane %v1271, 6
    %1275 = vst.msk [vmem:[#allocation5 + $0x30] sm:$0xc] %vm1201, %v1273
    %v1276 = vld [vmem:[#allocation4 + $0x15] sm:$0x3]
    %v1278 = vrot.slane %v1276, 6
    %1279 = vrot.lane.b32.xlu0 %v1278, 64
    %v1280 = vpop.permute.xlu0 %1279
    %1282 = vst.msk [vmem:[#allocation5 + $0x30] sm:$0xc] %vm1209, %v1280
    %v1283 = vld [vmem:[#allocation4 + $0x16] sm:$0x3]
    %v1285 = vrot.slane %v1283, 6
    %1287 = vst.msk [vmem:[#allocation5 + $0x38] sm:$0xc] %vm1201, %v1285
    %v1288 = vld [vmem:[#allocation4 + $0x17] sm:$0x3]
    %v1290 = vrot.slane %v1288, 6
    %1291 = vrot.lane.b32.xlu0 %v1290, 64
    %v1292 = vpop.permute.xlu0 %1291
    %1294 = vst.msk [vmem:[#allocation5 + $0x38] sm:$0xc] %vm1209, %v1292
    %v1295 = vld [vmem:[#allocation4 + $0x19] sm:$0x3]
    %v1297 = vrot.slane %v1295, 4
    %vm1299 = vcmask 521220
    %1300 = vst.msk [vmem:[#allocation5] sm:$0x30] %vm1299, %v1297
    %v1301 = vld [vmem:[#allocation4 + $0x1a] sm:$0x3]
    %v1303 = vrot.slane %v1301, 4
    %1304 = vrot.lane.b32.xlu0 %v1303, 64
    %v1305 = vpop.permute.xlu0 %1304
    %vm1307 = vcmask 1046020
    %1308 = vst.msk [vmem:[#allocation5] sm:$0x30] %vm1307, %v1305
    %v1309 = vld [vmem:[#allocation4 + $0x1b] sm:$0x3]
    %v1311 = vrot.slane %v1309, 4
    %1313 = vst.msk [vmem:[#allocation5 + $0x8] sm:$0x30] %vm1299, %v1311
    %v1314 = vld [vmem:[#allocation4 + $0x1c] sm:$0x3]
    %v1316 = vrot.slane %v1314, 4
    %1317 = vrot.lane.b32.xlu0 %v1316, 64
    %v1318 = vpop.permute.xlu0 %1317
    %1320 = vst.msk [vmem:[#allocation5 + $0x8] sm:$0x30] %vm1307, %v1318
    %v1321 = vld [vmem:[#allocation4 + $0x1e] sm:$0x3]
    %v1323 = vrot.slane %v1321, 4
    %1325 = vst.msk [vmem:[#allocation5 + $0x10] sm:$0x30] %vm1299, %v1323
    %v1326 = vld [vmem:[#allocation4 + $0x1f] sm:$0x3]
    %v1328 = vrot.slane %v1326, 4
    %1329 = vrot.lane.b32.xlu0 %v1328, 64
    %v1330 = vpop.permute.xlu0 %1329
    %1332 = vst.msk [vmem:[#allocation5 + $0x10] sm:$0x30] %vm1307, %v1330
    %v1333 = vld [vmem:[#allocation4 + $0x20] sm:$0x3]
    %v1335 = vrot.slane %v1333, 4
    %1337 = vst.msk [vmem:[#allocation5 + $0x18] sm:$0x30] %vm1299, %v1335
    %v1338 = vld [vmem:[#allocation4 + $0x21] sm:$0x3]
    %v1340 = vrot.slane %v1338, 4
    %1341 = vrot.lane.b32.xlu0 %v1340, 64
    %v1342 = vpop.permute.xlu0 %1341
    %1344 = vst.msk [vmem:[#allocation5 + $0x18] sm:$0x30] %vm1307, %v1342
    %v1345 = vld [vmem:[#allocation4 + $0x23] sm:$0x3]
    %v1347 = vrot.slane %v1345, 4
    %1349 = vst.msk [vmem:[#allocation5 + $0x20] sm:$0x30] %vm1299, %v1347
    %v1350 = vld [vmem:[#allocation4 + $0x24] sm:$0x3]
    %v1352 = vrot.slane %v1350, 4
    %1353 = vrot.lane.b32.xlu0 %v1352, 64
    %v1354 = vpop.permute.xlu0 %1353
    %1356 = vst.msk [vmem:[#allocation5 + $0x20] sm:$0x30] %vm1307, %v1354
    %v1357 = vld [vmem:[#allocation4 + $0x25] sm:$0x3]
    %v1359 = vrot.slane %v1357, 4
    %1361 = vst.msk [vmem:[#allocation5 + $0x28] sm:$0x30] %vm1299, %v1359
    %v1362 = vld [vmem:[#allocation4 + $0x26] sm:$0x3]
    %v1364 = vrot.slane %v1362, 4
    %1365 = vrot.lane.b32.xlu0 %v1364, 64
    %v1366 = vpop.permute.xlu0 %1365
    %1368 = vst.msk [vmem:[#allocation5 + $0x28] sm:$0x30] %vm1307, %v1366
    %v1369 = vld [vmem:[#allocation4 + $0x28] sm:$0x3]
    %v1371 = vrot.slane %v1369, 4
    %1373 = vst.msk [vmem:[#allocation5 + $0x30] sm:$0x30] %vm1299, %v1371
    %v1374 = vld [vmem:[#allocation4 + $0x29] sm:$0x3]
    %v1376 = vrot.slane %v1374, 4
    %1377 = vrot.lane.b32.xlu0 %v1376, 64
    %v1378 = vpop.permute.xlu0 %1377
    %1380 = vst.msk [vmem:[#allocation5 + $0x30] sm:$0x30] %vm1307, %v1378
    %v1381 = vld [vmem:[#allocation4 + $0x2a] sm:$0x3]
    %v1383 = vrot.slane %v1381, 4
    %1385 = vst.msk [vmem:[#allocation5 + $0x38] sm:$0x30] %vm1299, %v1383
    %v1386 = vld [vmem:[#allocation4 + $0x2b] sm:$0x3]
    %v1388 = vrot.slane %v1386, 4
    %1389 = vrot.lane.b32.xlu0 %v1388, 64
    %v1390 = vpop.permute.xlu0 %1389
    %1392 = vst.msk [vmem:[#allocation5 + $0x38] sm:$0x30] %vm1307, %v1390
    %v1393 = vld [vmem:[#allocation4 + $0x1e] sm:$0x3]
    %v1395 = vrot.slane %v1393, 2
    %vm1397 = vcmask 523270
    %1398 = vst.msk [vmem:[#allocation5] sm:$0xc0] %vm1397, %v1395
    %v1399 = vld [vmem:[#allocation4 + $0x1f] sm:$0x3]
    %v1401 = vrot.slane %v1399, 2
    %1402 = vrot.lane.b32.xlu0 %v1401, 64
    %v1403 = vpop.permute.xlu0 %1402
    %vm1405 = vcmask 1048070
    %1406 = vst.msk [vmem:[#allocation5] sm:$0xc0] %vm1405, %v1403
    %v1407 = vld [vmem:[#allocation4 + $0x20] sm:$0x3]
    %v1409 = vrot.slane %v1407, 2
    %1411 = vst.msk [vmem:[#allocation5 + $0x8] sm:$0xc0] %vm1397, %v1409
    %v1412 = vld [vmem:[#allocation4 + $0x21] sm:$0x3]
    %v1414 = vrot.slane %v1412, 2
    %1415 = vrot.lane.b32.xlu0 %v1414, 64
    %v1416 = vpop.permute.xlu0 %1415
    %1418 = vst.msk [vmem:[#allocation5 + $0x8] sm:$0xc0] %vm1405, %v1416
    %v1419 = vld [vmem:[#allocation4 + $0x23] sm:$0x3]
    %v1421 = vrot.slane %v1419, 2
    %1423 = vst.msk [vmem:[#allocation5 + $0x10] sm:$0xc0] %vm1397, %v1421
    %v1424 = vld [vmem:[#allocation4 + $0x24] sm:$0x3]
    %v1426 = vrot.slane %v1424, 2
    %1427 = vrot.lane.b32.xlu0 %v1426, 64
    %v1428 = vpop.permute.xlu0 %1427
    %1430 = vst.msk [vmem:[#allocation5 + $0x10] sm:$0xc0] %vm1405, %v1428
    %v1431 = vld [vmem:[#allocation4 + $0x25] sm:$0x3]
    %v1433 = vrot.slane %v1431, 2
    %1435 = vst.msk [vmem:[#allocation5 + $0x18] sm:$0xc0] %vm1397, %v1433
    %v1436 = vld [vmem:[#allocation4 + $0x26] sm:$0x3]
    %v1438 = vrot.slane %v1436, 2
    %1439 = vrot.lane.b32.xlu0 %v1438, 64
    %v1440 = vpop.permute.xlu0 %1439
    %1442 = vst.msk [vmem:[#allocation5 + $0x18] sm:$0xc0] %vm1405, %v1440
    %v1443 = vld [vmem:[#allocation4 + $0x28] sm:$0x3]
    %v1445 = vrot.slane %v1443, 2
    %1447 = vst.msk [vmem:[#allocation5 + $0x20] sm:$0xc0] %vm1397, %v1445
    %v1448 = vld [vmem:[#allocation4 + $0x29] sm:$0x3]
    %v1450 = vrot.slane %v1448, 2
    %1451 = vrot.lane.b32.xlu0 %v1450, 64
    %v1452 = vpop.permute.xlu0 %1451
    %1454 = vst.msk [vmem:[#allocation5 + $0x20] sm:$0xc0] %vm1405, %v1452
    %v1455 = vld [vmem:[#allocation4 + $0x2a] sm:$0x3]
    %v1457 = vrot.slane %v1455, 2
    %1459 = vst.msk [vmem:[#allocation5 + $0x28] sm:$0xc0] %vm1397, %v1457
    %v1460 = vld [vmem:[#allocation4 + $0x2b] sm:$0x3]
    %v1462 = vrot.slane %v1460, 2
    %1463 = vrot.lane.b32.xlu0 %v1462, 64
    %v1464 = vpop.permute.xlu0 %1463
    %1466 = vst.msk [vmem:[#allocation5 + $0x28] sm:$0xc0] %vm1405, %v1464
    %v1467 = vld [vmem:[#allocation4 + $0x2d] sm:$0x3]
    %v1469 = vrot.slane %v1467, 2
    %1471 = vst.msk [vmem:[#allocation5 + $0x30] sm:$0xc0] %vm1397, %v1469
    %v1472 = vld [vmem:[#allocation4 + $0x2e] sm:$0x3]
    %v1474 = vrot.slane %v1472, 2
    %1475 = vrot.lane.b32.xlu0 %v1474, 64
    %v1476 = vpop.permute.xlu0 %1475
    %1478 = vst.msk [vmem:[#allocation5 + $0x30] sm:$0xc0] %vm1405, %v1476
    %v1479 = vld [vmem:[#allocation4 + $0x2f] sm:$0x3]
    %v1481 = vrot.slane %v1479, 2
    %1483 = vst.msk [vmem:[#allocation5 + $0x38] sm:$0xc0] %vm1397, %v1481
    %v1484 = vld [vmem:[#allocation4 + $0x30] sm:$0x3]
    %v1486 = vrot.slane %v1484, 2
    %1487 = vrot.lane.b32.xlu0 %v1486, 64
    %v1488 = vpop.permute.xlu0 %1487
    %1490 = vst.msk [vmem:[#allocation5 + $0x38] sm:$0xc0] %vm1405, %v1488
    %v1491 = vld [vmem:[#allocation5] sm:$0xff]
    %v1492 = vld [vmem:[#allocation5 + $0x8] sm:$0xff]
    %v1493 = vld [vmem:[#allocation5 + $0x10] sm:$0xff]
    %v1494 = vld [vmem:[#allocation5 + $0x18] sm:$0xff]
    %v1495 = vld [vmem:[#allocation5 + $0x20] sm:$0xff]
    %v1496 = vld [vmem:[#allocation5 + $0x28] sm:$0xff]
    %v1497 = vld [vmem:[#allocation5 + $0x30] sm:$0xff]
    %v1498 = vld [vmem:[#allocation5 + $0x38] sm:$0xff]
    %v1499 = vpack.c.bf16 %v1491, %v1491
    %v1500 = vpack.c.bf16 %v1492, %v1492
    %v1501 = vpack.c.bf16 %v1493, %v1493
    %v1502 = vpack.c.bf16 %v1494, %v1494
    %v1503 = vpack.c.bf16 %v1495, %v1495
    %v1504 = vpack.c.bf16 %v1496, %v1496
    %v1505 = vpack.c.bf16 %v1497, %v1497
    %v1506 = vpack.c.bf16 %v1498, %v1498
    %v1507 = vld [vmem:[#allocation8 + $0x180] sm:$0xf]
    %v1508 = vld [vmem:[#allocation8 + $0x184] sm:$0xf]
    %v1509 = vld [vmem:[#allocation8 + $0x188] sm:$0xf]
    %v1510 = vld [vmem:[#allocation8 + $0x18c] sm:$0xf]
    %v1511 = vld [vmem:[#allocation8 + $0x190] sm:$0xf]
    %v1512 = vld [vmem:[#allocation8 + $0x194] sm:$0xf]
    %v1513 = vld [vmem:[#allocation8 + $0x198] sm:$0xf]
    %v1514 = vld [vmem:[#allocation8 + $0x19c] sm:$0xf]
    %v1515 = vld [vmem:[#allocation8 + $0x1a0] sm:$0xf]
    %v1516 = vld [vmem:[#allocation8 + $0x1a4] sm:$0xf]
    %v1517 = vld [vmem:[#allocation8 + $0x1a8] sm:$0xf]
    %v1518 = vld [vmem:[#allocation8 + $0x1ac] sm:$0xf]
    %v1519 = vld [vmem:[#allocation8 + $0x1b0] sm:$0xf]
    %v1520 = vld [vmem:[#allocation8 + $0x1b4] sm:$0xf]
    %v1521 = vld [vmem:[#allocation8 + $0x1b8] sm:$0xf]
    %v1522 = vld [vmem:[#allocation8 + $0x1bc] sm:$0xf]
    %v1523 = vld [vmem:[#allocation8 + $0x1c0] sm:$0xf]
    %v1524 = vld [vmem:[#allocation8 + $0x1c4] sm:$0xf]
    %v1525 = vld [vmem:[#allocation8 + $0x1c8] sm:$0xf]
    %v1526 = vld [vmem:[#allocation8 + $0x1cc] sm:$0xf]
    %v1527 = vld [vmem:[#allocation8 + $0x1d0] sm:$0xf]
    %v1528 = vld [vmem:[#allocation8 + $0x1d4] sm:$0xf]
    %v1529 = vld [vmem:[#allocation8 + $0x1d8] sm:$0xf]
    %v1530 = vld [vmem:[#allocation8 + $0x1dc] sm:$0xf]
    %v1531 = vld [vmem:[#allocation8 + $0x1e0] sm:$0xf]
    %v1532 = vld [vmem:[#allocation8 + $0x1e4] sm:$0xf]
    %v1533 = vld [vmem:[#allocation8 + $0x1e8] sm:$0xf]
    %v1534 = vld [vmem:[#allocation8 + $0x1ec] sm:$0xf]
    %v1535 = vld [vmem:[#allocation8 + $0x1f0] sm:$0xf]
    %v1536 = vld [vmem:[#allocation8 + $0x1f4] sm:$0xf]
    %v1537 = vld [vmem:[#allocation8 + $0x1f8] sm:$0xf]
    %v1538 = vld [vmem:[#allocation8 + $0x1fc] sm:$0xf]
    %v1539 = vld [vmem:[#allocation8 + $0x200] sm:$0xf]
    %v1540 = vld [vmem:[#allocation8 + $0x204] sm:$0xf]
    %v1541 = vld [vmem:[#allocation8 + $0x208] sm:$0xf]
    %v1542 = vld [vmem:[#allocation8 + $0x20c] sm:$0xf]
    %v1543 = vld [vmem:[#allocation8 + $0x210] sm:$0xf]
    %v1544 = vld [vmem:[#allocation8 + $0x214] sm:$0xf]
    %v1545 = vld [vmem:[#allocation8 + $0x218] sm:$0xf]
    %v1546 = vld [vmem:[#allocation8 + $0x21c] sm:$0xf]
    %v1547 = vld [vmem:[#allocation8 + $0x220] sm:$0xf]
    %v1548 = vld [vmem:[#allocation8 + $0x224] sm:$0xf]
    %v1549 = vld [vmem:[#allocation8 + $0x228] sm:$0xf]
    %v1550 = vld [vmem:[#allocation8 + $0x22c] sm:$0xf]
    %v1551 = vld [vmem:[#allocation8 + $0x230] sm:$0xf]
    %v1552 = vld [vmem:[#allocation8 + $0x234] sm:$0xf]
    %v1553 = vld [vmem:[#allocation8 + $0x238] sm:$0xf]
    %v1554 = vld [vmem:[#allocation8 + $0x23c] sm:$0xf]
    %v1555 = vld [vmem:[#allocation8 + $0x240] sm:$0xf]
    %v1556 = vld [vmem:[#allocation8 + $0x244] sm:$0xf]
    %v1557 = vld [vmem:[#allocation8 + $0x248] sm:$0xf]
    %v1558 = vld [vmem:[#allocation8 + $0x24c] sm:$0xf]
    %v1559 = vld [vmem:[#allocation8 + $0x250] sm:$0xf]
    %v1560 = vld [vmem:[#allocation8 + $0x254] sm:$0xf]
    %v1561 = vld [vmem:[#allocation8 + $0x258] sm:$0xf]
    %v1562 = vld [vmem:[#allocation8 + $0x25c] sm:$0xf]
    %v1563 = vld [vmem:[#allocation8 + $0x260] sm:$0xf]
    %v1564 = vld [vmem:[#allocation8 + $0x264] sm:$0xf]
    %v1565 = vld [vmem:[#allocation8 + $0x268] sm:$0xf]
    %v1566 = vld [vmem:[#allocation8 + $0x26c] sm:$0xf]
    %v1567 = vld [vmem:[#allocation8 + $0x270] sm:$0xf]
    %v1568 = vld [vmem:[#allocation8 + $0x274] sm:$0xf]
    %v1569 = vld [vmem:[#allocation8 + $0x278] sm:$0xf]
    %v1570 = vld [vmem:[#allocation8 + $0x27c] sm:$0xf]
    %v1571 = vld [vmem:[#allocation8 + $0x280] sm:$0xf]
    %v1572 = vld [vmem:[#allocation8 + $0x284] sm:$0xf]
    %v1573 = vld [vmem:[#allocation8 + $0x288] sm:$0xf]
    %v1574 = vld [vmem:[#allocation8 + $0x28c] sm:$0xf]
    %v1575 = vld [vmem:[#allocation8 + $0x290] sm:$0xf]
    %v1576 = vld [vmem:[#allocation8 + $0x294] sm:$0xf]
    %v1577 = vld [vmem:[#allocation8 + $0x298] sm:$0xf]
    %v1578 = vld [vmem:[#allocation8 + $0x29c] sm:$0xf]
    %v1579 = vld [vmem:[#allocation8 + $0x2a0] sm:$0xf]
    %v1580 = vld [vmem:[#allocation8 + $0x2a4] sm:$0xf]
    %v1581 = vld [vmem:[#allocation8 + $0x2a8] sm:$0xf]
    %v1582 = vld [vmem:[#allocation8 + $0x2ac] sm:$0xf]
    %v1583 = vld [vmem:[#allocation8 + $0x2b0] sm:$0xf]
    %v1584 = vld [vmem:[#allocation8 + $0x2b4] sm:$0xf]
    %v1585 = vld [vmem:[#allocation8 + $0x2b8] sm:$0xf]
    %v1586 = vld [vmem:[#allocation8 + $0x2bc] sm:$0xf]
    %v1587 = vld [vmem:[#allocation8 + $0x2c0] sm:$0xf]
    %v1588 = vld [vmem:[#allocation8 + $0x2c4] sm:$0xf]
    %v1589 = vld [vmem:[#allocation8 + $0x2c8] sm:$0xf]
    %v1590 = vld [vmem:[#allocation8 + $0x2cc] sm:$0xf]
    %v1591 = vld [vmem:[#allocation8 + $0x2d0] sm:$0xf]
    %v1592 = vld [vmem:[#allocation8 + $0x2d4] sm:$0xf]
    %v1593 = vld [vmem:[#allocation8 + $0x2d8] sm:$0xf]
    %v1594 = vld [vmem:[#allocation8 + $0x2dc] sm:$0xf]
    %v1595 = vld [vmem:[#allocation8 + $0x2e0] sm:$0xf]
    %v1596 = vld [vmem:[#allocation8 + $0x2e4] sm:$0xf]
    %v1597 = vld [vmem:[#allocation8 + $0x2e8] sm:$0xf]
    %v1598 = vld [vmem:[#allocation8 + $0x2ec] sm:$0xf]
    %v1599 = vld [vmem:[#allocation8 + $0x2f0] sm:$0xf]
    %v1600 = vld [vmem:[#allocation8 + $0x2f4] sm:$0xf]
    %v1601 = vld [vmem:[#allocation8 + $0x2f8] sm:$0xf]
    %v1602 = vld [vmem:[#allocation8 + $0x2fc] sm:$0xf]
    %v1603 = vld [vmem:[#allocation8 + $0x300] sm:$0xf]
    %v1604 = vld [vmem:[#allocation8 + $0x304] sm:$0xf]
    %v1605 = vld [vmem:[#allocation8 + $0x308] sm:$0xf]
    %v1606 = vld [vmem:[#allocation8 + $0x30c] sm:$0xf]
    %v1607 = vld [vmem:[#allocation8 + $0x310] sm:$0xf]
    %v1608 = vld [vmem:[#allocation8 + $0x314] sm:$0xf]
    %v1609 = vld [vmem:[#allocation8 + $0x318] sm:$0xf]
    %v1610 = vld [vmem:[#allocation8 + $0x31c] sm:$0xf]
    %v1611 = vld [vmem:[#allocation8 + $0x320] sm:$0xf]
    %v1612 = vld [vmem:[#allocation8 + $0x324] sm:$0xf]
    %v1613 = vld [vmem:[#allocation8 + $0x328] sm:$0xf]
    %v1614 = vld [vmem:[#allocation8 + $0x32c] sm:$0xf]
    %v1615 = vld [vmem:[#allocation8 + $0x330] sm:$0xf]
    %v1616 = vld [vmem:[#allocation8 + $0x334] sm:$0xf]
    %v1617 = vld [vmem:[#allocation8 + $0x338] sm:$0xf]
    %v1618 = vld [vmem:[#allocation8 + $0x33c] sm:$0xf]
    %v1619 = vld [vmem:[#allocation8 + $0x340] sm:$0xf]
    %v1620 = vld [vmem:[#allocation8 + $0x344] sm:$0xf]
    %v1621 = vld [vmem:[#allocation8 + $0x348] sm:$0xf]
    %v1622 = vld [vmem:[#allocation8 + $0x34c] sm:$0xf]
    %v1623 = vld [vmem:[#allocation8 + $0x350] sm:$0xf]
    %v1624 = vld [vmem:[#allocation8 + $0x354] sm:$0xf]
    %v1625 = vld [vmem:[#allocation8 + $0x358] sm:$0xf]
    %v1626 = vld [vmem:[#allocation8 + $0x35c] sm:$0xf]
    %v1627 = vld [vmem:[#allocation8 + $0x360] sm:$0xf]
    %v1628 = vld [vmem:[#allocation8 + $0x364] sm:$0xf]
    %v1629 = vld [vmem:[#allocation8 + $0x368] sm:$0xf]
    %v1630 = vld [vmem:[#allocation8 + $0x36c] sm:$0xf]
    %v1631 = vld [vmem:[#allocation8 + $0x370] sm:$0xf]
    %v1632 = vld [vmem:[#allocation8 + $0x374] sm:$0xf]
    %v1633 = vld [vmem:[#allocation8 + $0x378] sm:$0xf]
    %v1634 = vld [vmem:[#allocation8 + $0x37c] sm:$0xf]
    %v1635 = vld [vmem:[%s3 + $0x5] sm:$0x1]
    %v1636 = vlaneseq
    %v1637 = vshrl.u32 %v1636, 7
    %v1638 = vsub.s32 0, %v1637
    %v1639 = vrot.slane %v1635, %v1638
    %v1768 = vunpack.c.l.b16 %v1507
    %v1769 = vunpack.c.l.b16 %v1508
    %v1770 = vunpack.c.l.b16 %v1509
    %v1771 = vunpack.c.l.b16 %v1510
    %v1772 = vunpack.c.l.b16 %v1511
    %v1773 = vunpack.c.l.b16 %v1512
    %v1774 = vunpack.c.l.b16 %v1513
    %v1775 = vunpack.c.l.b16 %v1514
    %v1776 = vunpack.c.l.b16 %v1515
    %v1777 = vunpack.c.l.b16 %v1516
    %v1778 = vunpack.c.l.b16 %v1517
    %v1779 = vunpack.c.l.b16 %v1518
    %v1780 = vunpack.c.l.b16 %v1519
    %v1781 = vunpack.c.l.b16 %v1520
    %v1782 = vunpack.c.l.b16 %v1521
    %v1783 = vunpack.c.l.b16 %v1522
    %v1784 = vunpack.c.l.b16 %v1523
    %v1785 = vunpack.c.l.b16 %v1524
    %v1786 = vunpack.c.l.b16 %v1525
    %v1787 = vunpack.c.l.b16 %v1526
    %v1788 = vunpack.c.l.b16 %v1527
    %v1789 = vunpack.c.l.b16 %v1528
    %v1790 = vunpack.c.l.b16 %v1529
    %v1791 = vunpack.c.l.b16 %v1530
    %v1792 = vunpack.c.l.b16 %v1531
    %v1793 = vunpack.c.l.b16 %v1532
    %v1794 = vunpack.c.l.b16 %v1533
    %v1795 = vunpack.c.l.b16 %v1534
    %v1796 = vunpack.c.l.b16 %v1535
    %v1797 = vunpack.c.l.b16 %v1536
    %v1798 = vunpack.c.l.b16 %v1537
    %v1799 = vunpack.c.l.b16 %v1538
    %v1800 = vunpack.c.l.b16 %v1539
    %v1801 = vunpack.c.l.b16 %v1540
    %v1802 = vunpack.c.l.b16 %v1541
    %v1803 = vunpack.c.l.b16 %v1542
    %v1804 = vunpack.c.l.b16 %v1543
    %v1805 = vunpack.c.l.b16 %v1544
    %v1806 = vunpack.c.l.b16 %v1545
    %v1807 = vunpack.c.l.b16 %v1546
    %v1808 = vunpack.c.l.b16 %v1547
    %v1809 = vunpack.c.l.b16 %v1548
    %v1810 = vunpack.c.l.b16 %v1549
    %v1811 = vunpack.c.l.b16 %v1550
    %v1812 = vunpack.c.l.b16 %v1551
    %v1813 = vunpack.c.l.b16 %v1552
    %v1814 = vunpack.c.l.b16 %v1553
    %v1815 = vunpack.c.l.b16 %v1554
    %v1816 = vunpack.c.l.b16 %v1555
    %v1817 = vunpack.c.l.b16 %v1556
    %v1818 = vunpack.c.l.b16 %v1557
    %v1819 = vunpack.c.l.b16 %v1558
    %v1820 = vunpack.c.l.b16 %v1559
    %v1821 = vunpack.c.l.b16 %v1560
    %v1822 = vunpack.c.l.b16 %v1561
    %v1823 = vunpack.c.l.b16 %v1562
    %v1824 = vunpack.c.l.b16 %v1563
    %v1825 = vunpack.c.l.b16 %v1564
    %v1826 = vunpack.c.l.b16 %v1565
    %v1827 = vunpack.c.l.b16 %v1566
    %v1828 = vunpack.c.l.b16 %v1567
    %v1829 = vunpack.c.l.b16 %v1568
    %v1830 = vunpack.c.l.b16 %v1569
    %v1831 = vunpack.c.l.b16 %v1570
    %v1832 = vunpack.c.l.b16 %v1571
    %v1833 = vunpack.c.l.b16 %v1572
    %v1834 = vunpack.c.l.b16 %v1573
    %v1835 = vunpack.c.l.b16 %v1574
    %v1836 = vunpack.c.l.b16 %v1575
    %v1837 = vunpack.c.l.b16 %v1576
    %v1838 = vunpack.c.l.b16 %v1577
    %v1839 = vunpack.c.l.b16 %v1578
    %v1840 = vunpack.c.l.b16 %v1579
    %v1841 = vunpack.c.l.b16 %v1580
    %v1842 = vunpack.c.l.b16 %v1581
    %v1843 = vunpack.c.l.b16 %v1582
    %v1844 = vunpack.c.l.b16 %v1583
    %v1845 = vunpack.c.l.b16 %v1584
    %v1846 = vunpack.c.l.b16 %v1585
    %v1847 = vunpack.c.l.b16 %v1586
    %v1848 = vunpack.c.l.b16 %v1587
    %v1849 = vunpack.c.l.b16 %v1588
    %v1850 = vunpack.c.l.b16 %v1589
    %v1851 = vunpack.c.l.b16 %v1590
    %v1852 = vunpack.c.l.b16 %v1591
    %v1853 = vunpack.c.l.b16 %v1592
    %v1854 = vunpack.c.l.b16 %v1593
    %v1855 = vunpack.c.l.b16 %v1594
    %v1856 = vunpack.c.l.b16 %v1595
    %v1857 = vunpack.c.l.b16 %v1596
    %v1858 = vunpack.c.l.b16 %v1597
    %v1859 = vunpack.c.l.b16 %v1598
    %v1860 = vunpack.c.l.b16 %v1599
    %v1861 = vunpack.c.l.b16 %v1600
    %v1862 = vunpack.c.l.b16 %v1601
    %v1863 = vunpack.c.l.b16 %v1602
    %v1864 = vunpack.c.l.b16 %v1603
    %v1865 = vunpack.c.l.b16 %v1604
    %v1866 = vunpack.c.l.b16 %v1605
    %v1867 = vunpack.c.l.b16 %v1606
    %v1868 = vunpack.c.l.b16 %v1607
    %v1869 = vunpack.c.l.b16 %v1608
    %v1870 = vunpack.c.l.b16 %v1609
    %v1871 = vunpack.c.l.b16 %v1610
    %v1872 = vunpack.c.l.b16 %v1611
    %v1873 = vunpack.c.l.b16 %v1612
    %v1874 = vunpack.c.l.b16 %v1613
    %v1875 = vunpack.c.l.b16 %v1614
    %v1876 = vunpack.c.l.b16 %v1615
    %v1877 = vunpack.c.l.b16 %v1616
    %v1878 = vunpack.c.l.b16 %v1617
    %v1879 = vunpack.c.l.b16 %v1618
    %v1880 = vunpack.c.l.b16 %v1619
    %v1881 = vunpack.c.l.b16 %v1620
    %v1882 = vunpack.c.l.b16 %v1621
    %v1883 = vunpack.c.l.b16 %v1622
    %v1884 = vunpack.c.l.b16 %v1623
    %v1885 = vunpack.c.l.b16 %v1624
    %v1886 = vunpack.c.l.b16 %v1625
    %v1887 = vunpack.c.l.b16 %v1626
    %v1888 = vunpack.c.l.b16 %v1627
    %v1889 = vunpack.c.l.b16 %v1628
    %v1890 = vunpack.c.l.b16 %v1629
    %v1891 = vunpack.c.l.b16 %v1630
    %v1892 = vunpack.c.l.b16 %v1631
    %v1893 = vunpack.c.l.b16 %v1632
    %v1894 = vunpack.c.l.b16 %v1633
    %v1895 = vunpack.c.l.b16 %v1634
    %v1896 = vpack.c.b16 %v1769, %v1768
    %v1897 = vpack.c.b16 %v1771, %v1770
    %v1898 = vpack.c.b16 %v1773, %v1772
    %v1899 = vpack.c.b16 %v1775, %v1774
    %v1900 = vpack.c.b16 %v1777, %v1776
    %v1901 = vpack.c.b16 %v1779, %v1778
    %v1902 = vpack.c.b16 %v1781, %v1780
    %v1903 = vpack.c.b16 %v1783, %v1782
    %v1904 = vpack.c.b16 %v1785, %v1784
    %v1905 = vpack.c.b16 %v1787, %v1786
    %v1906 = vpack.c.b16 %v1789, %v1788
    %v1907 = vpack.c.b16 %v1791, %v1790
    %v1908 = vpack.c.b16 %v1793, %v1792
    %v1909 = vpack.c.b16 %v1795, %v1794
    %v1910 = vpack.c.b16 %v1797, %v1796
    %v1911 = vpack.c.b16 %v1799, %v1798
    %v1912 = vpack.c.b16 %v1801, %v1800
    %v1913 = vpack.c.b16 %v1803, %v1802
    %v1914 = vpack.c.b16 %v1805, %v1804
    %v1915 = vpack.c.b16 %v1807, %v1806
    %v1916 = vpack.c.b16 %v1809, %v1808
    %v1917 = vpack.c.b16 %v1811, %v1810
    %v1918 = vpack.c.b16 %v1813, %v1812
    %v1919 = vpack.c.b16 %v1815, %v1814
    %v1920 = vpack.c.b16 %v1817, %v1816
    %v1921 = vpack.c.b16 %v1819, %v1818
    %v1922 = vpack.c.b16 %v1821, %v1820
    %v1923 = vpack.c.b16 %v1823, %v1822
    %v1924 = vpack.c.b16 %v1825, %v1824
    %v1925 = vpack.c.b16 %v1827, %v1826
    %v1926 = vpack.c.b16 %v1829, %v1828
    %v1927 = vpack.c.b16 %v1831, %v1830
    %v1928 = vpack.c.b16 %v1833, %v1832
    %v1929 = vpack.c.b16 %v1835, %v1834
    %v1930 = vpack.c.b16 %v1837, %v1836
    %v1931 = vpack.c.b16 %v1839, %v1838
    %v1932 = vpack.c.b16 %v1841, %v1840
    %v1933 = vpack.c.b16 %v1843, %v1842
    %v1934 = vpack.c.b16 %v1845, %v1844
    %v1935 = vpack.c.b16 %v1847, %v1846
    %v1936 = vpack.c.b16 %v1849, %v1848
    %v1937 = vpack.c.b16 %v1851, %v1850
    %v1938 = vpack.c.b16 %v1853, %v1852
    %v1939 = vpack.c.b16 %v1855, %v1854
    %v1940 = vpack.c.b16 %v1857, %v1856
    %v1941 = vpack.c.b16 %v1859, %v1858
    %v1942 = vpack.c.b16 %v1861, %v1860
    %v1943 = vpack.c.b16 %v1863, %v1862
    %v1944 = vpack.c.b16 %v1865, %v1864
    %v1945 = vpack.c.b16 %v1867, %v1866
    %v1946 = vpack.c.b16 %v1869, %v1868
    %v1947 = vpack.c.b16 %v1871, %v1870
    %v1948 = vpack.c.b16 %v1873, %v1872
    %v1949 = vpack.c.b16 %v1875, %v1874
    %v1950 = vpack.c.b16 %v1877, %v1876
    %v1951 = vpack.c.b16 %v1879, %v1878
    %v1952 = vpack.c.b16 %v1881, %v1880
    %v1953 = vpack.c.b16 %v1883, %v1882
    %v1954 = vpack.c.b16 %v1885, %v1884
    %v1955 = vpack.c.b16 %v1887, %v1886
    %v1956 = vpack.c.b16 %v1889, %v1888
    %v1957 = vpack.c.b16 %v1891, %v1890
    %v1958 = vpack.c.b16 %v1893, %v1892
    %v1959 = vpack.c.b16 %v1895, %v1894
    %2024 = vmatprep.subr.bf16.mxu0 0
    %2025 = vmatpush1.bf16.msra.mxu0 %v1896
    %2026 = vmatprep.subr.bf16.mxu0 0
    %2027 = vmatpush1.bf16.msra.mxu0 %v1897
    %2028 = vmatprep.subr.bf16.mxu0 0
    %2029 = vmatpush1.bf16.msra.mxu0 %v1898
    %2030 = vmatprep.subr.bf16.mxu0 0
    %2031 = vmatpush1.bf16.msra.mxu0 %v1899
    %2032 = vmatprep.subr.bf16.mxu0 0
    %2033 = vmatpush1.bf16.msra.mxu0 %v1900
    %2034 = vmatprep.subr.bf16.mxu0 0
    %2035 = vmatpush1.bf16.msra.mxu0 %v1901
    %2036 = vmatprep.subr.bf16.mxu0 0
    %2037 = vmatpush1.bf16.msra.mxu0 %v1902
    %2038 = vmatprep.subr.bf16.mxu0 0
    %2039 = vmatpush1.bf16.msra.mxu0 %v1903
    %2040 = vmatprep.subr.bf16.mxu0 0
    %2041 = vmatpush1.bf16.msra.mxu0 %v1904
    %2042 = vmatprep.subr.bf16.mxu0 0
    %2043 = vmatpush1.bf16.msra.mxu0 %v1905
    %2044 = vmatprep.subr.bf16.mxu0 0
    %2045 = vmatpush1.bf16.msra.mxu0 %v1906
    %2046 = vmatprep.subr.bf16.mxu0 0
    %2047 = vmatpush1.bf16.msra.mxu0 %v1907
    %2048 = vmatprep.subr.bf16.mxu0 0
    %2049 = vmatpush1.bf16.msra.mxu0 %v1908
    %2050 = vmatprep.subr.bf16.mxu0 0
    %2051 = vmatpush1.bf16.msra.mxu0 %v1909
    %2052 = vmatprep.subr.bf16.mxu0 0
    %2053 = vmatpush1.bf16.msra.mxu0 %v1910
    %2054 = vmatprep.subr.bf16.mxu0 0
    %2055 = vmatpush1.bf16.msra.mxu0 %v1911
    %2056 = vmatprep.mubr.bf16.mxu0 %v1500
    %2057 = vmatmul.mubr.bf16.gmra.mrb[0].mxu0 %v1499
    %v2058 = vpop.f32.mrb[0].mxu0
    %v2059 = vadd.f32 %v1639, %v2058
    %v2060 = vpop.f32.mrb[0].mxu0
    %v2061 = vpop.f32.mrb[0].mxu0
    %v2062 = vpop.f32.mrb[0].mxu0
    %2063 = vdwg.mxu0
    %2064 = vmatprep.subr.bf16.mxu0 0
    %2065 = vmatpush1.bf16.msra.mxu0 %v1912
    %2066 = vmatprep.subr.bf16.mxu0 0
    %2067 = vmatpush1.bf16.msra.mxu0 %v1913
    %2068 = vmatprep.subr.bf16.mxu0 0
    %2069 = vmatpush1.bf16.msra.mxu0 %v1914
    %2070 = vmatprep.subr.bf16.mxu0 0
    %2071 = vmatpush1.bf16.msra.mxu0 %v1915
    %2072 = vmatprep.subr.bf16.mxu0 0
    %2073 = vmatpush1.bf16.msra.mxu0 %v1916
    %2074 = vmatprep.subr.bf16.mxu0 0
    %2075 = vmatpush1.bf16.msra.mxu0 %v1917
    %2076 = vmatprep.subr.bf16.mxu0 0
    %2077 = vmatpush1.bf16.msra.mxu0 %v1918
    %2078 = vmatprep.subr.bf16.mxu0 0
    %2079 = vmatpush1.bf16.msra.mxu0 %v1919
    %2080 = vmatprep.subr.bf16.mxu0 0
    %2081 = vmatpush1.bf16.msra.mxu0 %v1920
    %2082 = vmatprep.subr.bf16.mxu0 0
    %2083 = vmatpush1.bf16.msra.mxu0 %v1921
    %2084 = vmatprep.subr.bf16.mxu0 0
    %2085 = vmatpush1.bf16.msra.mxu0 %v1922
    %2086 = vmatprep.subr.bf16.mxu0 0
    %2087 = vmatpush1.bf16.msra.mxu0 %v1923
    %2088 = vmatprep.subr.bf16.mxu0 0
    %2089 = vmatpush1.bf16.msra.mxu0 %v1924
    %2090 = vmatprep.subr.bf16.mxu0 0
    %2091 = vmatpush1.bf16.msra.mxu0 %v1925
    %2092 = vmatprep.subr.bf16.mxu0 0
    %2093 = vmatpush1.bf16.msra.mxu0 %v1926
    %2094 = vmatprep.subr.bf16.mxu0 0
    %2095 = vmatpush1.bf16.msra.mxu0 %v1927
    %2096 = vmatprep.mubr.bf16.mxu0 %v1502
    %2097 = vmatmul.mubr.bf16.gmra.mrb[0].mxu0 %v1501
    %v2098 = vpop.f32.mrb[0].mxu0
    %v2099 = vadd.f32 %v2059, %v2098
    %v2100 = vpop.f32.mrb[0].mxu0
    %v2101 = vpop.f32.mrb[0].mxu0
    %v2102 = vpop.f32.mrb[0].mxu0
    %2103 = vdwg.mxu0
    %2104 = vmatprep.subr.bf16.mxu0 0
    %2105 = vmatpush1.bf16.msra.mxu0 %v1928
    %2106 = vmatprep.subr.bf16.mxu0 0
    %2107 = vmatpush1.bf16.msra.mxu0 %v1929
    %2108 = vmatprep.subr.bf16.mxu0 0
    %2109 = vmatpush1.bf16.msra.mxu0 %v1930
    %2110 = vmatprep.subr.bf16.mxu0 0
    %2111 = vmatpush1.bf16.msra.mxu0 %v1931
    %2112 = vmatprep.subr.bf16.mxu0 0
    %2113 = vmatpush1.bf16.msra.mxu0 %v1932
    %2114 = vmatprep.subr.bf16.mxu0 0
    %2115 = vmatpush1.bf16.msra.mxu0 %v1933
    %2116 = vmatprep.subr.bf16.mxu0 0
    %2117 = vmatpush1.bf16.msra.mxu0 %v1934
    %2118 = vmatprep.subr.bf16.mxu0 0
    %2119 = vmatpush1.bf16.msra.mxu0 %v1935
    %2120 = vmatprep.subr.bf16.mxu0 0
    %2121 = vmatpush1.bf16.msra.mxu0 %v1936
    %2122 = vmatprep.subr.bf16.mxu0 0
    %2123 = vmatpush1.bf16.msra.mxu0 %v1937
    %2124 = vmatprep.subr.bf16.mxu0 0
    %2125 = vmatpush1.bf16.msra.mxu0 %v1938
    %2126 = vmatprep.subr.bf16.mxu0 0
    %2127 = vmatpush1.bf16.msra.mxu0 %v1939
    %2128 = vmatprep.subr.bf16.mxu0 0
    %2129 = vmatpush1.bf16.msra.mxu0 %v1940
    %2130 = vmatprep.subr.bf16.mxu0 0
    %2131 = vmatpush1.bf16.msra.mxu0 %v1941
    %2132 = vmatprep.subr.bf16.mxu0 0
    %2133 = vmatpush1.bf16.msra.mxu0 %v1942
    %2134 = vmatprep.subr.bf16.mxu0 0
    %2135 = vmatpush1.bf16.msra.mxu0 %v1943
    %2136 = vmatprep.mubr.bf16.mxu0 %v1504
    %2137 = vmatmul.mubr.bf16.gmra.mrb[0].mxu0 %v1503
    %v2138 = vpop.f32.mrb[0].mxu0
    %v2139 = vadd.f32 %v2099, %v2138
    %v2140 = vpop.f32.mrb[0].mxu0
    %v2141 = vpop.f32.mrb[0].mxu0
    %v2142 = vpop.f32.mrb[0].mxu0
    %2143 = vdwg.mxu0
    %2144 = vmatprep.subr.bf16.mxu0 0
    %2145 = vmatpush1.bf16.msra.mxu0 %v1944
    %2146 = vmatprep.subr.bf16.mxu0 0
    %2147 = vmatpush1.bf16.msra.mxu0 %v1945
    %2148 = vmatprep.subr.bf16.mxu0 0
    %2149 = vmatpush1.bf16.msra.mxu0 %v1946
    %2150 = vmatprep.subr.bf16.mxu0 0
    %2151 = vmatpush1.bf16.msra.mxu0 %v1947
    %2152 = vmatprep.subr.bf16.mxu0 0
    %2153 = vmatpush1.bf16.msra.mxu0 %v1948
    %2154 = vmatprep.subr.bf16.mxu0 0
    %2155 = vmatpush1.bf16.msra.mxu0 %v1949
    %2156 = vmatprep.subr.bf16.mxu0 0
    %2157 = vmatpush1.bf16.msra.mxu0 %v1950
    %2158 = vmatprep.subr.bf16.mxu0 0
    %2159 = vmatpush1.bf16.msra.mxu0 %v1951
    %2160 = vmatprep.subr.bf16.mxu0 0
    %2161 = vmatpush1.bf16.msra.mxu0 %v1952
    %2162 = vmatprep.subr.bf16.mxu0 0
    %2163 = vmatpush1.bf16.msra.mxu0 %v1953
    %2164 = vmatprep.subr.bf16.mxu0 0
    %2165 = vmatpush1.bf16.msra.mxu0 %v1954
    %2166 = vmatprep.subr.bf16.mxu0 0
    %2167 = vmatpush1.bf16.msra.mxu0 %v1955
    %2168 = vmatprep.subr.bf16.mxu0 0
    %2169 = vmatpush1.bf16.msra.mxu0 %v1956
    %2170 = vmatprep.subr.bf16.mxu0 0
    %2171 = vmatpush1.bf16.msra.mxu0 %v1957
    %2172 = vmatprep.subr.bf16.mxu0 0
    %2173 = vmatpush1.bf16.msra.mxu0 %v1958
    %2174 = vmatprep.subr.bf16.mxu0 0
    %2175 = vmatpush1.bf16.msra.mxu0 %v1959
    %2176 = vmatprep.mubr.bf16.mxu0 %v1506
    %2177 = vmatmul.mubr.bf16.gmra.mrb[0].mxu0 %v1505
    %v2178 = vpop.f32.mrb[0].mxu0
    %v2179 = vadd.f32 %v2139, %v2178
    %v2180 = vpop.f32.mrb[0].mxu0
    %v2181 = vpop.f32.mrb[0].mxu0
    %v2182 = vpop.f32.mrb[0].mxu0
    %2183 = vdwg.mxu0
    %v2184 = vmax.f32 %v2179, 0.0
    %2185 = vst [vmem:[#allocation4 + $0xc] sm:$0x1] 0.0
    %2186 = vst [vmem:[#allocation4 + $0x25] sm:$0x1] 0.0
    %v2188 = vrot.slane %v2184, 7
    %vm2190 = vcmask 1040384
    %v2191 = vsel %vm2190, %v2184, 0.0
    %vm2192 = vcmask 1041408
    %v2193 = vsel %vm2192, %v2191, %v2188
    %2194 = vst [vmem:[#allocation4 + $0x6] sm:$0x7] %v2193
    %v2195 = vrot.slane %v2184, 2
    %v2197 = vrot.slane %v2184, 1
    %v2199 = vsel %vm2190, %v2195, 0.0
    %v2200 = vsel %vm2192, %v2199, %v2197
    %2201 = vst [vmem:[#allocation4 + $0x10] sm:$0x7] %v2200
    %v2202 = vrot.slane %v2184, 4
    %v2204 = vrot.slane %v2184, 3
    %v2206 = vsel %vm2190, %v2202, 0.0
    %v2207 = vsel %vm2192, %v2206, %v2204
    %2208 = vst [vmem:[#allocation4 + $0x1f] sm:$0x7] %v2207
    %v2209 = vrot.slane %v2184, 6
    %v2211 = vrot.slane %v2184, 5
    %v2213 = vsel %vm2190, %v2209, 0.0
    %v2214 = vsel %vm2192, %v2213, %v2211
    %2215 = vst [vmem:[#allocation4 + $0x29] sm:$0x7] %v2214
    %vm2216 = vcmask 1048064
    %2217 = vst.msk [vmem:[#allocation6 + $0x20] sm:$0xff] %vm2216, 0.0
    %2218 = vst.msk [vmem:[#allocation6 + $0x48] sm:$0xff] %vm2216, 0.0
    %2219 = vst.msk [vmem:[#allocation6 + $0x70] sm:$0x3] %vm1139, 0.0
    %v2220 = vld [vmem:[#allocation4] sm:$0x7]
    %vm2221 = vcmask 518144
    %2222 = vst.msk [vmem:[#allocation6] sm:$0x7] %vm2221, %v2220
    %v2223 = vld [vmem:[#allocation4 + $0x1] sm:$0x7]
    %2225 = vrot.lane.b32.xlu0 %v2223, 64
    %v2226 = vpop.permute.xlu0 %2225
    %vm2228 = vcmask 1042944
    %2229 = vst.msk [vmem:[#allocation6] sm:$0x7] %vm2228, %v2226
    %v2230 = vld [vmem:[#allocation4 + $0x2] sm:$0x7]
    %2231 = vst.msk [vmem:[#allocation6 + $0x8] sm:$0x7] %vm2221, %v2230
    %v2232 = vld [vmem:[#allocation4 + $0x5] sm:$0x7]
    %2234 = vrot.lane.b32.xlu0 %v2232, 64
    %v2235 = vpop.permute.xlu0 %2234
    %2237 = vst.msk [vmem:[#allocation6 + $0x8] sm:$0x7] %vm2228, %v2235
    %v2238 = vld [vmem:[#allocation4 + $0x6] sm:$0x7]
    %2239 = vst.msk [vmem:[#allocation6 + $0x10] sm:$0x7] %vm2221, %v2238
    %v2240 = vld [vmem:[#allocation4 + $0x7] sm:$0x7]
    %2242 = vrot.lane.b32.xlu0 %v2240, 64
    %v2243 = vpop.permute.xlu0 %2242
    %2245 = vst.msk [vmem:[#allocation6 + $0x10] sm:$0x7] %vm2228, %v2243
    %v2246 = vld [vmem:[#allocation4 + $0xa] sm:$0x7]
    %2247 = vst.msk [vmem:[#allocation6 + $0x18] sm:$0x7] %vm2221, %v2246
    %v2248 = vld [vmem:[#allocation4 + $0xb] sm:$0x7]
    %2250 = vrot.lane.b32.xlu0 %v2248, 64
    %v2251 = vpop.permute.xlu0 %2250
    %2253 = vst.msk [vmem:[#allocation6 + $0x18] sm:$0x7] %vm2228, %v2251
    %v2254 = vld [vmem:[#allocation4 + $0xc] sm:$0x7]
    %2255 = vst.msk [vmem:[#allocation6 + $0x20] sm:$0x7] %vm2221, %v2254
    %v2256 = vld [vmem:[#allocation4 + $0x5] sm:$0x7]
    %v2258 = vrot.slane %v2256, 5
    %vm2260 = vcmask 521219
    %2261 = vst.msk [vmem:[#allocation6] sm:$0x38] %vm2260, %v2258
    %v2262 = vld [vmem:[#allocation4 + $0x6] sm:$0x7]
    %v2264 = vrot.slane %v2262, 5
    %2265 = vrot.lane.b32.xlu0 %v2264, 64
    %v2266 = vpop.permute.xlu0 %2265
    %vm2268 = vcmask 1046019
    %2269 = vst.msk [vmem:[#allocation6] sm:$0x38] %vm2268, %v2266
    %v2270 = vld [vmem:[#allocation4 + $0x7] sm:$0x7]
    %v2272 = vrot.slane %v2270, 5
    %2274 = vst.msk [vmem:[#allocation6 + $0x8] sm:$0x38] %vm2260, %v2272
    %v2275 = vld [vmem:[#allocation4 + $0xa] sm:$0x7]
    %v2277 = vrot.slane %v2275, 5
    %2278 = vrot.lane.b32.xlu0 %v2277, 64
    %v2279 = vpop.permute.xlu0 %2278
    %2281 = vst.msk [vmem:[#allocation6 + $0x8] sm:$0x38] %vm2268, %v2279
    %v2282 = vld [vmem:[#allocation4 + $0xb] sm:$0x7]
    %v2284 = vrot.slane %v2282, 5
    %2286 = vst.msk [vmem:[#allocation6 + $0x10] sm:$0x38] %vm2260, %v2284
    %v2287 = vld [vmem:[#allocation4 + $0xc] sm:$0x7]
    %v2289 = vrot.slane %v2287, 5
    %2290 = vrot.lane.b32.xlu0 %v2289, 64
    %v2291 = vpop.permute.xlu0 %2290
    %2293 = vst.msk [vmem:[#allocation6 + $0x10] sm:$0x38] %vm2268, %v2291
    %v2294 = vld [vmem:[#allocation4 + $0xf] sm:$0x7]
    %v2296 = vrot.slane %v2294, 5
    %2298 = vst.msk [vmem:[#allocation6 + $0x18] sm:$0x38] %vm2260, %v2296
    %v2299 = vld [vmem:[#allocation4 + $0x10] sm:$0x7]
    %v2301 = vrot.slane %v2299, 5
    %2302 = vrot.lane.b32.xlu0 %v2301, 64
    %v2303 = vpop.permute.xlu0 %2302
    %2305 = vst.msk [vmem:[#allocation6 + $0x18] sm:$0x38] %vm2268, %v2303
    %v2306 = vld [vmem:[#allocation4 + $0x11] sm:$0x7]
    %v2308 = vrot.slane %v2306, 5
    %2310 = vst.msk [vmem:[#allocation6 + $0x20] sm:$0x38] %vm2260, %v2308
    %v2311 = vld [vmem:[#allocation4 + $0xa] sm:$0x7]
    %v2313 = vrot.slane %v2311, 2
    %2315 = vst.msk [vmem:[#allocation6] sm:$0xc0] %vm1397, %v2313
    %vm2316 = vcmask 516096
    %2317 = vst.msk [vmem:[#allocation6 + $0x28] sm:$0x1] %vm2316, %v2313
    %v2318 = vld [vmem:[#allocation4 + $0xb] sm:$0x7]
    %v2320 = vrot.slane %v2318, 2
    %2321 = vrot.lane.b32.xlu0 %v2320, 64
    %v2322 = vpop.permute.xlu0 %2321
    %2324 = vst.msk [vmem:[#allocation6] sm:$0xc0] %vm1405, %v2322
    %vm2325 = vcmask 1040896
    %2326 = vst.msk [vmem:[#allocation6 + $0x28] sm:$0x1] %vm2325, %v2322
    %v2327 = vld [vmem:[#allocation4 + $0xc] sm:$0x7]
    %v2329 = vrot.slane %v2327, 2
    %2331 = vst.msk [vmem:[#allocation6 + $0x8] sm:$0xc0] %vm1397, %v2329
    %2332 = vst.msk [vmem:[#allocation6 + $0x30] sm:$0x1] %vm2316, %v2329
    %v2333 = vld [vmem:[#allocation4 + $0xf] sm:$0x7]
    %v2335 = vrot.slane %v2333, 2
    %2336 = vrot.lane.b32.xlu0 %v2335, 64
    %v2337 = vpop.permute.xlu0 %2336
    %2339 = vst.msk [vmem:[#allocation6 + $0x8] sm:$0xc0] %vm1405, %v2337
    %2340 = vst.msk [vmem:[#allocation6 + $0x30] sm:$0x1] %vm2325, %v2337
    %v2341 = vld [vmem:[#allocation4 + $0x10] sm:$0x7]
    %v2343 = vrot.slane %v2341, 2
    %2345 = vst.msk [vmem:[#allocation6 + $0x10] sm:$0xc0] %vm1397, %v2343
    %2346 = vst.msk [vmem:[#allocation6 + $0x38] sm:$0x1] %vm2316, %v2343
    %v2347 = vld [vmem:[#allocation4 + $0x11] sm:$0x7]
    %v2349 = vrot.slane %v2347, 2
    %2350 = vrot.lane.b32.xlu0 %v2349, 64
    %v2351 = vpop.permute.xlu0 %2350
    %2353 = vst.msk [vmem:[#allocation6 + $0x10] sm:$0xc0] %vm1405, %v2351
    %2354 = vst.msk [vmem:[#allocation6 + $0x38] sm:$0x1] %vm2325, %v2351
    %v2355 = vld [vmem:[#allocation4 + $0x14] sm:$0x7]
    %v2357 = vrot.slane %v2355, 2
    %2359 = vst.msk [vmem:[#allocation6 + $0x18] sm:$0xc0] %vm1397, %v2357
    %2360 = vst.msk [vmem:[#allocation6 + $0x40] sm:$0x1] %vm2316, %v2357
    %v2361 = vld [vmem:[#allocation4 + $0x15] sm:$0x7]
    %v2363 = vrot.slane %v2361, 2
    %2364 = vrot.lane.b32.xlu0 %v2363, 64
    %v2365 = vpop.permute.xlu0 %2364
    %2367 = vst.msk [vmem:[#allocation6 + $0x18] sm:$0xc0] %vm1405, %v2365
    %2368 = vst.msk [vmem:[#allocation6 + $0x40] sm:$0x1] %vm2325, %v2365
    %v2369 = vld [vmem:[#allocation4 + $0x16] sm:$0x7]
    %v2371 = vrot.slane %v2369, 2
    %2373 = vst.msk [vmem:[#allocation6 + $0x20] sm:$0xc0] %vm1397, %v2371
    %2374 = vst.msk [vmem:[#allocation6 + $0x48] sm:$0x1] %vm2316, %v2371
    %v2375 = vld [vmem:[#allocation4 + $0x19] sm:$0x7]
    %v2377 = vrot.slane %v2375, 7
    %vm2379 = vcmask 519169
    %2380 = vst.msk [vmem:[#allocation6 + $0x28] sm:$0xe] %vm2379, %v2377
    %v2381 = vld [vmem:[#allocation4 + $0x1a] sm:$0x7]
    %v2383 = vrot.slane %v2381, 7
    %2384 = vrot.lane.b32.xlu0 %v2383, 64
    %v2385 = vpop.permute.xlu0 %2384
    %vm2387 = vcmask 1043969
    %2388 = vst.msk [vmem:[#allocation6 + $0x28] sm:$0xe] %vm2387, %v2385
    %v2389 = vld [vmem:[#allocation4 + $0x1b] sm:$0x7]
    %v2391 = vrot.slane %v2389, 7
    %2393 = vst.msk [vmem:[#allocation6 + $0x30] sm:$0xe] %vm2379, %v2391
    %v2394 = vld [vmem:[#allocation4 + $0x1e] sm:$0x7]
    %v2396 = vrot.slane %v2394, 7
    %2397 = vrot.lane.b32.xlu0 %v2396, 64
    %v2398 = vpop.permute.xlu0 %2397
    %2400 = vst.msk [vmem:[#allocation6 + $0x30] sm:$0xe] %vm2387, %v2398
    %v2401 = vld [vmem:[#allocation4 + $0x1f] sm:$0x7]
    %v2403 = vrot.slane %v2401, 7
    %2405 = vst.msk [vmem:[#allocation6 + $0x38] sm:$0xe] %vm2379, %v2403
    %v2406 = vld [vmem:[#allocation4 + $0x20] sm:$0x7]
    %v2408 = vrot.slane %v2406, 7
    %2409 = vrot.lane.b32.xlu0 %v2408, 64
    %v2410 = vpop.permute.xlu0 %2409
    %2412 = vst.msk [vmem:[#allocation6 + $0x38] sm:$0xe] %vm2387, %v2410
    %v2413 = vld [vmem:[#allocation4 + $0x23] sm:$0x7]
    %v2415 = vrot.slane %v2413, 7
    %2417 = vst.msk [vmem:[#allocation6 + $0x40] sm:$0xe] %vm2379, %v2415
    %v2418 = vld [vmem:[#allocation4 + $0x24] sm:$0x7]
    %v2420 = vrot.slane %v2418, 7
    %2421 = vrot.lane.b32.xlu0 %v2420, 64
    %v2422 = vpop.permute.xlu0 %2421
    %2424 = vst.msk [vmem:[#allocation6 + $0x40] sm:$0xe] %vm2387, %v2422
    %v2425 = vld [vmem:[#allocation4 + $0x25] sm:$0x7]
    %v2427 = vrot.slane %v2425, 7
    %2429 = vst.msk [vmem:[#allocation6 + $0x48] sm:$0xe] %vm2379, %v2427
    %v2430 = vld [vmem:[#allocation4 + $0x1e] sm:$0x7]
    %v2432 = vrot.slane %v2430, 4
    %vm2434 = vcmask 522244
    %2435 = vst.msk [vmem:[#allocation6 + $0x28] sm:$0x70] %vm2434, %v2432
    %v2436 = vld [vmem:[#allocation4 + $0x1f] sm:$0x7]
    %v2438 = vrot.slane %v2436, 4
    %2439 = vrot.lane.b32.xlu0 %v2438, 64
    %v2440 = vpop.permute.xlu0 %2439
    %vm2442 = vcmask 1047044
    %2443 = vst.msk [vmem:[#allocation6 + $0x28] sm:$0x70] %vm2442, %v2440
    %v2444 = vld [vmem:[#allocation4 + $0x20] sm:$0x7]
    %v2446 = vrot.slane %v2444, 4
    %2448 = vst.msk [vmem:[#allocation6 + $0x30] sm:$0x70] %vm2434, %v2446
    %v2449 = vld [vmem:[#allocation4 + $0x23] sm:$0x7]
    %v2451 = vrot.slane %v2449, 4
    %2452 = vrot.lane.b32.xlu0 %v2451, 64
    %v2453 = vpop.permute.xlu0 %2452
    %2455 = vst.msk [vmem:[#allocation6 + $0x30] sm:$0x70] %vm2442, %v2453
    %v2456 = vld [vmem:[#allocation4 + $0x24] sm:$0x7]
    %v2458 = vrot.slane %v2456, 4
    %2460 = vst.msk [vmem:[#allocation6 + $0x38] sm:$0x70] %vm2434, %v2458
    %v2461 = vld [vmem:[#allocation4 + $0x25] sm:$0x7]
    %v2463 = vrot.slane %v2461, 4
    %2464 = vrot.lane.b32.xlu0 %v2463, 64
    %v2465 = vpop.permute.xlu0 %2464
    %2467 = vst.msk [vmem:[#allocation6 + $0x38] sm:$0x70] %vm2442, %v2465
    %v2468 = vld [vmem:[#allocation4 + $0x28] sm:$0x7]
    %v2470 = vrot.slane %v2468, 4
    %2472 = vst.msk [vmem:[#allocation6 + $0x40] sm:$0x70] %vm2434, %v2470
    %v2473 = vld [vmem:[#allocation4 + $0x29] sm:$0x7]
    %v2475 = vrot.slane %v2473, 4
    %2476 = vrot.lane.b32.xlu0 %v2475, 64
    %v2477 = vpop.permute.xlu0 %2476
    %2479 = vst.msk [vmem:[#allocation6 + $0x40] sm:$0x70] %vm2442, %v2477
    %v2480 = vld [vmem:[#allocation4 + $0x2a] sm:$0x7]
    %v2482 = vrot.slane %v2480, 4
    %2484 = vst.msk [vmem:[#allocation6 + $0x48] sm:$0x70] %vm2434, %v2482
    %v2485 = vld [vmem:[#allocation4 + $0x23] sm:$0x7]
    %v2487 = vrot.slane %v2485, 1
    %vm2489 = vcmask 523271
    %2490 = vst.msk [vmem:[#allocation6 + $0x28] sm:$0x80] %vm2489, %v2487
    %2491 = vst.msk [vmem:[#allocation6 + $0x50] sm:$0x3] %vm1132, %v2487
    %v2492 = vld [vmem:[#allocation4 + $0x24] sm:$0x7]
    %v2494 = vrot.slane %v2492, 1
    %2495 = vrot.lane.b32.xlu0 %v2494, 64
    %v2496 = vpop.permute.xlu0 %2495
    %vm2498 = vcmask 1048071
    %2499 = vst.msk [vmem:[#allocation6 + $0x28] sm:$0x80] %vm2498, %v2496
    %2500 = vst.msk [vmem:[#allocation6 + $0x50] sm:$0x3] %vm1139, %v2496
    %v2501 = vld [vmem:[#allocation4 + $0x25] sm:$0x7]
    %v2503 = vrot.slane %v2501, 1
    %2505 = vst.msk [vmem:[#allocation6 + $0x30] sm:$0x80] %vm2489, %v2503
    %2506 = vst.msk [vmem:[#allocation6 + $0x58] sm:$0x3] %vm1132, %v2503
    %v2507 = vld [vmem:[#allocation4 + $0x28] sm:$0x7]
    %v2509 = vrot.slane %v2507, 1
    %2510 = vrot.lane.b32.xlu0 %v2509, 64
    %v2511 = vpop.permute.xlu0 %2510
    %2513 = vst.msk [vmem:[#allocation6 + $0x30] sm:$0x80] %vm2498, %v2511
    %2514 = vst.msk [vmem:[#allocation6 + $0x58] sm:$0x3] %vm1139, %v2511
    %v2515 = vld [vmem:[#allocation4 + $0x29] sm:$0x7]
    %v2517 = vrot.slane %v2515, 1
    %2519 = vst.msk [vmem:[#allocation6 + $0x38] sm:$0x80] %vm2489, %v2517
    %2520 = vst.msk [vmem:[#allocation6 + $0x60] sm:$0x3] %vm1132, %v2517
    %v2521 = vld [vmem:[#allocation4 + $0x2a] sm:$0x7]
    %v2523 = vrot.slane %v2521, 1
    %2524 = vrot.lane.b32.xlu0 %v2523, 64
    %v2525 = vpop.permute.xlu0 %2524
    %2527 = vst.msk [vmem:[#allocation6 + $0x38] sm:$0x80] %vm2498, %v2525
    %2528 = vst.msk [vmem:[#allocation6 + $0x60] sm:$0x3] %vm1139, %v2525
    %v2529 = vld [vmem:[#allocation4 + $0x2d] sm:$0x7]
    %v2531 = vrot.slane %v2529, 1
    %2533 = vst.msk [vmem:[#allocation6 + $0x40] sm:$0x80] %vm2489, %v2531
    %2534 = vst.msk [vmem:[#allocation6 + $0x68] sm:$0x3] %vm1132, %v2531
    %v2535 = vld [vmem:[#allocation4 + $0x2e] sm:$0x7]
    %v2537 = vrot.slane %v2535, 1
    %2538 = vrot.lane.b32.xlu0 %v2537, 64
    %v2539 = vpop.permute.xlu0 %2538
    %2541 = vst.msk [vmem:[#allocation6 + $0x40] sm:$0x80] %vm2498, %v2539
    %2542 = vst.msk [vmem:[#allocation6 + $0x68] sm:$0x3] %vm1139, %v2539
    %v2543 = vld [vmem:[#allocation4 + $0x2f] sm:$0x7]
    %v2545 = vrot.slane %v2543, 1
    %2547 = vst.msk [vmem:[#allocation6 + $0x48] sm:$0x80] %vm2489, %v2545
    %2548 = vst.msk [vmem:[#allocation6 + $0x70] sm:$0x3] %vm1132, %v2545
    %v2549 = vld [vmem:[#allocation6] sm:$0xff]
    %v2550 = vld [vmem:[#allocation6 + $0x8] sm:$0xff]
    %v2551 = vld [vmem:[#allocation6 + $0x10] sm:$0xff]
    %v2552 = vld [vmem:[#allocation6 + $0x18] sm:$0xff]
    %v2553 = vld [vmem:[#allocation6 + $0x20] sm:$0xff]
    %v2554 = vld [vmem:[#allocation6 + $0x28] sm:$0xff]
    %v2555 = vld [vmem:[#allocation6 + $0x30] sm:$0xff]
    %v2556 = vld [vmem:[#allocation6 + $0x38] sm:$0xff]
    %v2557 = vld [vmem:[#allocation6 + $0x40] sm:$0xff]
    %v2558 = vld [vmem:[#allocation6 + $0x48] sm:$0xff]
    %v2559 = vld [vmem:[#allocation6 + $0x50] sm:$0x3]
    %v2560 = vld [vmem:[#allocation6 + $0x58] sm:$0x3]
    %v2561 = vld [vmem:[#allocation6 + $0x60] sm:$0x3]
    %v2562 = vld [vmem:[#allocation6 + $0x68] sm:$0x3]
    %v2563 = vld [vmem:[#allocation6 + $0x70] sm:$0x3]
    %v2564 = vpack.c.bf16 %v2554, %v2549
    %v2565 = vpack.c.bf16 %v2555, %v2550
    %v2566 = vpack.c.bf16 %v2556, %v2551
    %v2567 = vpack.c.bf16 %v2557, %v2552
    %v2568 = vpack.c.bf16 %v2558, %v2553
    %v2569 = vpack.c.bf16 %v2559, %v2559
    %v2570 = vpack.c.bf16 %v2560, %v2560
    %v2571 = vpack.c.bf16 %v2561, %v2561
    %v2572 = vpack.c.bf16 %v2562, %v2562
    %v2573 = vpack.c.bf16 %v2563, %v2563
    %v2574 = vld [vmem:[#allocation8 + $0x380] sm:$0xf]
    %v2575 = vld [vmem:[#allocation8 + $0x384] sm:$0xf]
    %v2576 = vld [vmem:[#allocation8 + $0x388] sm:$0xf]
    %v2577 = vld [vmem:[#allocation8 + $0x38c] sm:$0xf]
    %v2578 = vld [vmem:[#allocation8 + $0x390] sm:$0xf]
    %v2579 = vld [vmem:[#allocation8 + $0x394] sm:$0xf]
    %v2580 = vld [vmem:[#allocation8 + $0x398] sm:$0xf]
    %v2581 = vld [vmem:[#allocation8 + $0x39c] sm:$0xf]
    %v2582 = vld [vmem:[#allocation8 + $0x3a0] sm:$0xf]
    %v2583 = vld [vmem:[#allocation8 + $0x3a4] sm:$0xf]
    %v2584 = vld [vmem:[#allocation8 + $0x3a8] sm:$0xf]
    %v2585 = vld [vmem:[#allocation8 + $0x3ac] sm:$0xf]
    %v2586 = vld [vmem:[#allocation8 + $0x3b0] sm:$0xf]
    %v2587 = vld [vmem:[#allocation8 + $0x3b4] sm:$0xf]
    %v2588 = vld [vmem:[#allocation8 + $0x3b8] sm:$0xf]
    %v2589 = vld [vmem:[#allocation8 + $0x3bc] sm:$0xf]
    %v2590 = vld [vmem:[#allocation8 + $0x3c0] sm:$0xf]
    %v2591 = vld [vmem:[#allocation8 + $0x3c4] sm:$0xf]
    %v2592 = vld [vmem:[#allocation8 + $0x3c8] sm:$0xf]
    %v2593 = vld [vmem:[#allocation8 + $0x3cc] sm:$0xf]
    %v2594 = vld [vmem:[#allocation8 + $0x3d0] sm:$0xf]
    %v2595 = vld [vmem:[#allocation8 + $0x3d4] sm:$0xf]
    %v2596 = vld [vmem:[#allocation8 + $0x3d8] sm:$0xf]
    %v2597 = vld [vmem:[#allocation8 + $0x3dc] sm:$0xf]
    %v2598 = vld [vmem:[#allocation8 + $0x3e0] sm:$0xf]
    %v2599 = vld [vmem:[#allocation8 + $0x3e4] sm:$0xf]
    %v2600 = vld [vmem:[#allocation8 + $0x3e8] sm:$0xf]
    %v2601 = vld [vmem:[#allocation8 + $0x3ec] sm:$0xf]
    %v2602 = vld [vmem:[#allocation8 + $0x3f0] sm:$0xf]
    %v2603 = vld [vmem:[#allocation8 + $0x3f4] sm:$0xf]
    %v2604 = vld [vmem:[#allocation8 + $0x3f8] sm:$0xf]
    %v2605 = vld [vmem:[#allocation8 + $0x3fc] sm:$0xf]
    %v2606 = vld [vmem:[#allocation8 + $0x400] sm:$0xf]
    %v2607 = vld [vmem:[#allocation8 + $0x404] sm:$0xf]
    %v2608 = vld [vmem:[#allocation8 + $0x408] sm:$0xf]
    %v2609 = vld [vmem:[#allocation8 + $0x40c] sm:$0xf]
    %v2610 = vld [vmem:[#allocation8 + $0x410] sm:$0xf]
    %v2611 = vld [vmem:[#allocation8 + $0x414] sm:$0xf]
    %v2612 = vld [vmem:[#allocation8 + $0x418] sm:$0xf]
    %v2613 = vld [vmem:[#allocation8 + $0x41c] sm:$0xf]
    %v2614 = vld [vmem:[#allocation8 + $0x420] sm:$0xf]
    %v2615 = vld [vmem:[#allocation8 + $0x424] sm:$0xf]
    %v2616 = vld [vmem:[#allocation8 + $0x428] sm:$0xf]
    %v2617 = vld [vmem:[#allocation8 + $0x42c] sm:$0xf]
    %v2618 = vld [vmem:[#allocation8 + $0x430] sm:$0xf]
    %v2619 = vld [vmem:[#allocation8 + $0x434] sm:$0xf]
    %v2620 = vld [vmem:[#allocation8 + $0x438] sm:$0xf]
    %v2621 = vld [vmem:[#allocation8 + $0x43c] sm:$0xf]
    %v2622 = vld [vmem:[#allocation8 + $0x440] sm:$0xf]
    %v2623 = vld [vmem:[#allocation8 + $0x444] sm:$0xf]
    %v2624 = vld [vmem:[#allocation8 + $0x448] sm:$0xf]
    %v2625 = vld [vmem:[#allocation8 + $0x44c] sm:$0xf]
    %v2626 = vld [vmem:[#allocation8 + $0x450] sm:$0xf]
    %v2627 = vld [vmem:[#allocation8 + $0x454] sm:$0xf]
    %v2628 = vld [vmem:[#allocation8 + $0x458] sm:$0xf]
    %v2629 = vld [vmem:[#allocation8 + $0x45c] sm:$0xf]
    %v2630 = vld [vmem:[#allocation8 + $0x460] sm:$0xf]
    %v2631 = vld [vmem:[#allocation8 + $0x464] sm:$0xf]
    %v2632 = vld [vmem:[#allocation8 + $0x468] sm:$0xf]
    %v2633 = vld [vmem:[#allocation8 + $0x46c] sm:$0xf]
    %v2634 = vld [vmem:[#allocation8 + $0x470] sm:$0xf]
    %v2635 = vld [vmem:[#allocation8 + $0x474] sm:$0xf]
    %v2636 = vld [vmem:[#allocation8 + $0x478] sm:$0xf]
    %v2637 = vld [vmem:[#allocation8 + $0x47c] sm:$0xf]
    %v2638 = vld [vmem:[#allocation8 + $0x480] sm:$0xf]
    %v2639 = vld [vmem:[#allocation8 + $0x484] sm:$0xf]
    %v2640 = vld [vmem:[#allocation8 + $0x488] sm:$0xf]
    %v2641 = vld [vmem:[#allocation8 + $0x48c] sm:$0xf]
    %v2642 = vld [vmem:[#allocation8 + $0x490] sm:$0xf]
    %v2643 = vld [vmem:[#allocation8 + $0x494] sm:$0xf]
    %v2644 = vld [vmem:[#allocation8 + $0x498] sm:$0xf]
    %v2645 = vld [vmem:[#allocation8 + $0x49c] sm:$0xf]
    %v2646 = vld [vmem:[#allocation8 + $0x4a0] sm:$0xf]
    %v2647 = vld [vmem:[#allocation8 + $0x4a4] sm:$0xf]
    %v2648 = vld [vmem:[#allocation8 + $0x4a8] sm:$0xf]
    %v2649 = vld [vmem:[#allocation8 + $0x4ac] sm:$0xf]
    %v2650 = vld [vmem:[#allocation8 + $0x4b0] sm:$0xf]
    %v2651 = vld [vmem:[#allocation8 + $0x4b4] sm:$0xf]
    %v2652 = vld [vmem:[#allocation8 + $0x4b8] sm:$0xf]
    %v2653 = vld [vmem:[#allocation8 + $0x4bc] sm:$0xf]
    %v2654 = vld [vmem:[%s3 + $0x6] sm:$0x1]
    %v2655 = vlaneseq
    %v2656 = vshrl.u32 %v2655, 7
    %v2657 = vsub.s32 0, %v2656
    %v2658 = vrot.slane %v2654, %v2657
    %v2739 = vunpack.c.l.b16 %v2574
    %v2740 = vunpack.c.l.b16 %v2575
    %v2741 = vunpack.c.l.b16 %v2576
    %v2742 = vunpack.c.l.b16 %v2577
    %v2743 = vunpack.c.l.b16 %v2578
    %v2744 = vunpack.c.l.b16 %v2579
    %v2745 = vunpack.c.l.b16 %v2580
    %v2746 = vunpack.c.l.b16 %v2581
    %v2747 = vunpack.c.l.b16 %v2582
    %v2748 = vunpack.c.l.b16 %v2583
    %v2749 = vunpack.c.l.b16 %v2584
    %v2750 = vunpack.c.l.b16 %v2585
    %v2751 = vunpack.c.l.b16 %v2586
    %v2752 = vunpack.c.l.b16 %v2587
    %v2753 = vunpack.c.l.b16 %v2588
    %v2754 = vunpack.c.l.b16 %v2589
    %v2755 = vunpack.c.l.b16 %v2590
    %v2756 = vunpack.c.l.b16 %v2591
    %v2757 = vunpack.c.l.b16 %v2592
    %v2758 = vunpack.c.l.b16 %v2593
    %v2759 = vunpack.c.l.b16 %v2594
    %v2760 = vunpack.c.l.b16 %v2595
    %v2761 = vunpack.c.l.b16 %v2596
    %v2762 = vunpack.c.l.b16 %v2597
    %v2763 = vunpack.c.l.b16 %v2598
    %v2764 = vunpack.c.l.b16 %v2599
    %v2765 = vunpack.c.l.b16 %v2600
    %v2766 = vunpack.c.l.b16 %v2601
    %v2767 = vunpack.c.l.b16 %v2602
    %v2768 = vunpack.c.l.b16 %v2603
    %v2769 = vunpack.c.l.b16 %v2604
    %v2770 = vunpack.c.l.b16 %v2605
    %v2771 = vunpack.c.l.b16 %v2606
    %v2772 = vunpack.c.l.b16 %v2607
    %v2773 = vunpack.c.l.b16 %v2608
    %v2774 = vunpack.c.l.b16 %v2609
    %v2775 = vunpack.c.l.b16 %v2610
    %v2776 = vunpack.c.l.b16 %v2611
    %v2777 = vunpack.c.l.b16 %v2612
    %v2778 = vunpack.c.l.b16 %v2613
    %v2779 = vunpack.c.l.b16 %v2614
    %v2780 = vunpack.c.l.b16 %v2615
    %v2781 = vunpack.c.l.b16 %v2616
    %v2782 = vunpack.c.l.b16 %v2617
    %v2783 = vunpack.c.l.b16 %v2618
    %v2784 = vunpack.c.l.b16 %v2619
    %v2785 = vunpack.c.l.b16 %v2620
    %v2786 = vunpack.c.l.b16 %v2621
    %v2787 = vunpack.c.l.b16 %v2622
    %v2788 = vunpack.c.l.b16 %v2623
    %v2789 = vunpack.c.l.b16 %v2624
    %v2790 = vunpack.c.l.b16 %v2625
    %v2791 = vunpack.c.l.b16 %v2626
    %v2792 = vunpack.c.l.b16 %v2627
    %v2793 = vunpack.c.l.b16 %v2628
    %v2794 = vunpack.c.l.b16 %v2629
    %v2795 = vunpack.c.l.b16 %v2630
    %v2796 = vunpack.c.l.b16 %v2631
    %v2797 = vunpack.c.l.b16 %v2632
    %v2798 = vunpack.c.l.b16 %v2633
    %v2799 = vunpack.c.l.b16 %v2634
    %v2800 = vunpack.c.l.b16 %v2635
    %v2801 = vunpack.c.l.b16 %v2636
    %v2802 = vunpack.c.l.b16 %v2637
    %v2803 = vunpack.c.l.b16 %v2638
    %v2804 = vunpack.c.l.b16 %v2639
    %v2805 = vunpack.c.l.b16 %v2640
    %v2806 = vunpack.c.l.b16 %v2641
    %v2807 = vunpack.c.l.b16 %v2642
    %v2808 = vunpack.c.l.b16 %v2643
    %v2809 = vunpack.c.l.b16 %v2644
    %v2810 = vunpack.c.l.b16 %v2645
    %v2811 = vunpack.c.l.b16 %v2646
    %v2812 = vunpack.c.l.b16 %v2647
    %v2813 = vunpack.c.l.b16 %v2648
    %v2814 = vunpack.c.l.b16 %v2649
    %v2815 = vunpack.c.l.b16 %v2650
    %v2816 = vunpack.c.l.b16 %v2651
    %v2817 = vunpack.c.l.b16 %v2652
    %v2818 = vunpack.c.l.b16 %v2653
    %v2819 = vpack.c.b16 %v2740, %v2739
    %v2820 = vpack.c.b16 %v2742, %v2741
    %v2821 = vpack.c.b16 %v2744, %v2743
    %v2822 = vpack.c.b16 %v2746, %v2745
    %v2823 = vpack.c.b16 %v2748, %v2747
    %v2824 = vpack.c.b16 %v2750, %v2749
    %v2825 = vpack.c.b16 %v2752, %v2751
    %v2826 = vpack.c.b16 %v2754, %v2753
    %v2827 = vpack.c.b16 %v2756, %v2755
    %v2828 = vpack.c.b16 %v2758, %v2757
    %v2829 = vpack.c.b16 %v2760, %v2759
    %v2830 = vpack.c.b16 %v2762, %v2761
    %v2831 = vpack.c.b16 %v2764, %v2763
    %v2832 = vpack.c.b16 %v2766, %v2765
    %v2833 = vpack.c.b16 %v2768, %v2767
    %v2834 = vpack.c.b16 %v2770, %v2769
    %v2835 = vpack.c.b16 %v2772, %v2771
    %v2836 = vpack.c.b16 %v2774, %v2773
    %v2837 = vpack.c.b16 %v2776, %v2775
    %v2838 = vpack.c.b16 %v2778, %v2777
    %v2839 = vpack.c.b16 %v2780, %v2779
    %v2840 = vpack.c.b16 %v2782, %v2781
    %v2841 = vpack.c.b16 %v2784, %v2783
    %v2842 = vpack.c.b16 %v2786, %v2785
    %v2843 = vpack.c.b16 %v2788, %v2787
    %v2844 = vpack.c.b16 %v2790, %v2789
    %v2845 = vpack.c.b16 %v2792, %v2791
    %v2846 = vpack.c.b16 %v2794, %v2793
    %v2847 = vpack.c.b16 %v2796, %v2795
    %v2848 = vpack.c.b16 %v2798, %v2797
    %v2849 = vpack.c.b16 %v2800, %v2799
    %v2850 = vpack.c.b16 %v2802, %v2801
    %v2851 = vpack.c.b16 %v2804, %v2803
    %v2852 = vpack.c.b16 %v2806, %v2805
    %v2853 = vpack.c.b16 %v2808, %v2807
    %v2854 = vpack.c.b16 %v2810, %v2809
    %v2855 = vpack.c.b16 %v2812, %v2811
    %v2856 = vpack.c.b16 %v2814, %v2813
    %v2857 = vpack.c.b16 %v2816, %v2815
    %v2858 = vpack.c.b16 %v2818, %v2817
    %2899 = vmatprep.subr.bf16.mxu0 0
    %2900 = vmatpush1.bf16.msra.mxu0 %v2819
    %2901 = vmatprep.subr.bf16.mxu0 0
    %2902 = vmatpush1.bf16.msra.mxu0 %v2820
    %2903 = vmatprep.subr.bf16.mxu0 0
    %2904 = vmatpush1.bf16.msra.mxu0 %v2821
    %2905 = vmatprep.subr.bf16.mxu0 0
    %2906 = vmatpush1.bf16.msra.mxu0 %v2822
    %2907 = vmatprep.subr.bf16.mxu0 0
    %2908 = vmatpush1.bf16.msra.mxu0 %v2823
    %2909 = vmatprep.subr.bf16.mxu0 0
    %2910 = vmatpush1.bf16.msra.mxu0 %v2824
    %2911 = vmatprep.subr.bf16.mxu0 0
    %2912 = vmatpush1.bf16.msra.mxu0 %v2825
    %2913 = vmatprep.subr.bf16.mxu0 0
    %2914 = vmatpush1.bf16.msra.mxu0 %v2826
    %2915 = vmatprep.subr.bf16.mxu0 0
    %2916 = vmatpush1.bf16.msra.mxu0 %v2827
    %2917 = vmatprep.subr.bf16.mxu0 0
    %2918 = vmatpush1.bf16.msra.mxu0 %v2828
    %2919 = vmatprep.subr.bf16.mxu0 0
    %2920 = vmatpush1.bf16.msra.mxu0 %v2829
    %2921 = vmatprep.subr.bf16.mxu0 0
    %2922 = vmatpush1.bf16.msra.mxu0 %v2830
    %2923 = vmatprep.subr.bf16.mxu0 0
    %2924 = vmatpush1.bf16.msra.mxu0 %v2831
    %2925 = vmatprep.subr.bf16.mxu0 0
    %2926 = vmatpush1.bf16.msra.mxu0 %v2832
    %2927 = vmatprep.subr.bf16.mxu0 0
    %2928 = vmatpush1.bf16.msra.mxu0 %v2833
    %2929 = vmatprep.subr.bf16.mxu0 0
    %2930 = vmatpush1.bf16.msra.mxu0 %v2834
    %2931 = vmatprep.mubr.bf16.mxu0 %v2565
    %2932 = vmatmul.mubr.bf16.gmra.mrb[0].mxu0 %v2564
    %v2933 = vpop.f32.mrb[0].mxu0
    %v2934 = vadd.f32 %v2658, %v2933
    %v2935 = vpop.f32.mrb[0].mxu0
    %v2936 = vpop.f32.mrb[0].mxu0
    %v2937 = vadd.f32 %v2658, %v2936
    %v2938 = vpop.f32.mrb[0].mxu0
    %2939 = vmatprep.mubr.bf16.mxu0 %v2570
    %2940 = vmatmul.mubr.bf16.gmra.mrb[0].mxu0 %v2569
    %v2941 = vpop.f32.mrb[0].mxu0
    %v2942 = vadd.f32 %v2658, %v2941
    %v2943 = vpop.f32.mrb[0].mxu0
    %v2944 = vpop.f32.mrb[0].mxu0
    %v2945 = vpop.f32.mrb[0].mxu0
    %2946 = vdwg.mxu0
    %2947 = vmatprep.subr.bf16.mxu0 0
    %2948 = vmatpush1.bf16.msra.mxu0 %v2835
    %2949 = vmatprep.subr.bf16.mxu0 0
    %2950 = vmatpush1.bf16.msra.mxu0 %v2836
    %2951 = vmatprep.subr.bf16.mxu0 0
    %2952 = vmatpush1.bf16.msra.mxu0 %v2837
    %2953 = vmatprep.subr.bf16.mxu0 0
    %2954 = vmatpush1.bf16.msra.mxu0 %v2838
    %2955 = vmatprep.subr.bf16.mxu0 0
    %2956 = vmatpush1.bf16.msra.mxu0 %v2839
    %2957 = vmatprep.subr.bf16.mxu0 0
    %2958 = vmatpush1.bf16.msra.mxu0 %v2840
    %2959 = vmatprep.subr.bf16.mxu0 0
    %2960 = vmatpush1.bf16.msra.mxu0 %v2841
    %2961 = vmatprep.subr.bf16.mxu0 0
    %2962 = vmatpush1.bf16.msra.mxu0 %v2842
    %2963 = vmatprep.subr.bf16.mxu0 0
    %2964 = vmatpush1.bf16.msra.mxu0 %v2843
    %2965 = vmatprep.subr.bf16.mxu0 0
    %2966 = vmatpush1.bf16.msra.mxu0 %v2844
    %2967 = vmatprep.subr.bf16.mxu0 0
    %2968 = vmatpush1.bf16.msra.mxu0 %v2845
    %2969 = vmatprep.subr.bf16.mxu0 0
    %2970 = vmatpush1.bf16.msra.mxu0 %v2846
    %2971 = vmatprep.subr.bf16.mxu0 0
    %2972 = vmatpush1.bf16.msra.mxu0 %v2847
    %2973 = vmatprep.subr.bf16.mxu0 0
    %2974 = vmatpush1.bf16.msra.mxu0 %v2848
    %2975 = vmatprep.subr.bf16.mxu0 0
    %2976 = vmatpush1.bf16.msra.mxu0 %v2849
    %2977 = vmatprep.subr.bf16.mxu0 0
    %2978 = vmatpush1.bf16.msra.mxu0 %v2850
    %2979 = vmatprep.mubr.bf16.mxu0 %v2567
    %2980 = vmatmul.mubr.bf16.gmra.mrb[0].mxu0 %v2566
    %v2981 = vpop.f32.mrb[0].mxu0
    %v2982 = vadd.f32 %v2934, %v2981
    %v2983 = vpop.f32.mrb[0].mxu0
    %v2984 = vpop.f32.mrb[0].mxu0
    %v2985 = vadd.f32 %v2937, %v2984
    %v2986 = vpop.f32.mrb[0].mxu0
    %2987 = vmatprep.mubr.bf16.mxu0 %v2572
    %2988 = vmatmul.mubr.bf16.gmra.mrb[0].mxu0 %v2571
    %v2989 = vpop.f32.mrb[0].mxu0
    %v2990 = vadd.f32 %v2942, %v2989
    %v2991 = vpop.f32.mrb[0].mxu0
    %v2992 = vpop.f32.mrb[0].mxu0
    %v2993 = vpop.f32.mrb[0].mxu0
    %2994 = vdwg.mxu0
    %2995 = vmatprep.subr.bf16.mxu0 0
    %2996 = vmatpush1.bf16.msra.mxu0 %v2851
    %2997 = vmatprep.subr.bf16.mxu0 0
    %2998 = vmatpush1.bf16.msra.mxu0 %v2852
    %2999 = vmatprep.subr.bf16.mxu0 0
    %3000 = vmatpush1.bf16.msra.mxu0 %v2853
    %3001 = vmatprep.subr.bf16.mxu0 0
    %3002 = vmatpush1.bf16.msra.mxu0 %v2854
    %3003 = vmatprep.subr.bf16.mxu0 0
    %3004 = vmatpush1.bf16.msra.mxu0 %v2855
    %3005 = vmatprep.subr.bf16.mxu0 0
    %3006 = vmatpush1.bf16.msra.mxu0 %v2856
    %3007 = vmatprep.subr.bf16.mxu0 0
    %3008 = vmatpush1.bf16.msra.mxu0 %v2857
    %3009 = vmatprep.subr.bf16.mxu0 0
    %3010 = vmatpush1.bf16.msra.mxu0 %v2858
    %3011 = vmatprep.subr.bf16.mxu0 0
    %3012 = vmatpush1.bf16.msra.mxu0 0
    %3013 = vmatprep.subr.bf16.mxu0 0
    %3014 = vmatpush1.bf16.msra.mxu0 0
    %3015 = vmatprep.subr.bf16.mxu0 0
    %3016 = vmatpush1.bf16.msra.mxu0 0
    %3017 = vmatprep.subr.bf16.mxu0 0
    %3018 = vmatpush1.bf16.msra.mxu0 0
    %3019 = vmatprep.subr.bf16.mxu0 0
    %3020 = vmatpush1.bf16.msra.mxu0 0
    %3021 = vmatprep.subr.bf16.mxu0 0
    %3022 = vmatpush1.bf16.msra.mxu0 0
    %3023 = vmatprep.subr.bf16.mxu0 0
    %3024 = vmatpush1.bf16.msra.mxu0 0
    %3025 = vmatprep.subr.bf16.mxu0 0
    %3026 = vmatpush1.bf16.msra.mxu0 0
    %3027 = vmatprep.mubr.bf16.mxu0 0
    %3028 = vmatmul.mubr.bf16.gmra.mrb[0].mxu0 %v2568
    %v3029 = vpop.f32.mrb[0].mxu0
    %v3030 = vadd.f32 %v2982, %v3029
    %v3031 = vpop.f32.mrb[0].mxu0
    %v3032 = vpop.f32.mrb[0].mxu0
    %v3033 = vadd.f32 %v2985, %v3032
    %v3034 = vpop.f32.mrb[0].mxu0
    %3035 = vmatprep.mubr.bf16.mxu0 0
    %3036 = vmatmul.mubr.bf16.gmra.mrb[0].mxu0 %v2573
    %v3037 = vpop.f32.mrb[0].mxu0
    %v3038 = vadd.f32 %v2990, %v3037
    %v3039 = vpop.f32.mrb[0].mxu0
    %v3040 = vpop.f32.mrb[0].mxu0
    %v3041 = vpop.f32.mrb[0].mxu0
    %3042 = vdwg.mxu0
    %v3043 = vmax.f32 %v3030, 0.0
    %v3044 = vmax.f32 %v3033, 0.0
    %v3045 = vmax.f32 %v3038, 0.0
    %3046 = vst [vmem:[#allocation4 + $0x6] sm:$0x7] %v3043
    %3047 = vst [vmem:[#allocation4 + $0x8] sm:$0x38] %v3043
    %3048 = vst [vmem:[#allocation4 + $0xa] sm:$0xc0] %v3043
    %3049 = vst [vmem:[#allocation4 + $0x12] sm:$0x1] %v3044
    %3050 = vst [vmem:[#allocation4 + $0x1e] sm:$0xe] %v3044
    %3051 = vst [vmem:[#allocation4 + $0x20] sm:$0x70] %v3044
    %3052 = vst [vmem:[#allocation4 + $0x22] sm:$0x80] %v3044
    %3053 = vst [vmem:[#allocation4 + $0x2a] sm:$0x3] %v3045
    %vm3054 = vcmask 1047808
    %3055 = vst.msk [vmem:[#allocation7 + $0x10] sm:$0xff] %vm3054, 0.0
    %3056 = vst.msk [vmem:[#allocation7 + $0x28] sm:$0xff] %vm3054, 0.0
    %vm3057 = vcmask 1041664
    %3058 = vst.msk [vmem:[#allocation7 + $0x40] sm:$0x3] %vm3057, 0.0
    %v3059 = vld [vmem:[#allocation4] sm:$0x7]
    %vm3060 = vcmask 256000
    %3061 = vst.msk [vmem:[#allocation7] sm:$0x7] %vm3060, %v3059
    %v3062 = vld [vmem:[#allocation4 + $0x1] sm:$0x7]
    %3064 = vrot.lane.b32.xlu0 %v3062, 32
    %v3065 = vpop.permute.xlu0 %3064
    %vm3067 = vcmask 518400
    %3068 = vst.msk [vmem:[#allocation7] sm:$0x7] %vm3067, %v3065
    %v3069 = vld [vmem:[#allocation4 + $0x2] sm:$0x7]
    %3071 = vrot.lane.b32.xlu0 %v3069, 64
    %v3072 = vpop.permute.xlu0 %3071
    %vm3074 = vcmask 780800
    %3075 = vst.msk [vmem:[#allocation7] sm:$0x7] %vm3074, %v3072
    %v3076 = vld [vmem:[#allocation4 + $0x5] sm:$0x7]
    %3078 = vrot.lane.b32.xlu0 %v3076, 96
    %v3079 = vpop.permute.xlu0 %3078
    %vm3081 = vcmask 1043200
    %3082 = vst.msk [vmem:[#allocation7] sm:$0x7] %vm3081, %v3079
    %v3083 = vld [vmem:[#allocation4 + $0x6] sm:$0x7]
    %3084 = vst.msk [vmem:[#allocation7 + $0x8] sm:$0x7] %vm3060, %v3083
    %v3085 = vld [vmem:[#allocation4 + $0x7] sm:$0x7]
    %3087 = vrot.lane.b32.xlu0 %v3085, 32
    %v3088 = vpop.permute.xlu0 %3087
    %3090 = vst.msk [vmem:[#allocation7 + $0x8] sm:$0x7] %vm3067, %v3088
    %v3091 = vld [vmem:[#allocation4 + $0xa] sm:$0x7]
    %3093 = vrot.lane.b32.xlu0 %v3091, 64
    %v3094 = vpop.permute.xlu0 %3093
    %3096 = vst.msk [vmem:[#allocation7 + $0x8] sm:$0x7] %vm3074, %v3094
    %v3097 = vld [vmem:[#allocation4 + $0xb] sm:$0x7]
    %3099 = vrot.lane.b32.xlu0 %v3097, 96
    %v3100 = vpop.permute.xlu0 %3099
    %3102 = vst.msk [vmem:[#allocation7 + $0x8] sm:$0x7] %vm3081, %v3100
    %v3103 = vld [vmem:[#allocation4 + $0xc] sm:$0x7]
    %3104 = vst.msk [vmem:[#allocation7 + $0x10] sm:$0x7] %vm3060, %v3103
    %v3105 = vld [vmem:[#allocation4 + $0x5] sm:$0x7]
    %v3107 = vrot.slane %v3105, 5
    %vm3109 = vcmask 259075
    %3110 = vst.msk [vmem:[#allocation7] sm:$0x38] %vm3109, %v3107
    %v3111 = vld [vmem:[#allocation4 + $0x6] sm:$0x7]
    %v3113 = vrot.slane %v3111, 5
    %3114 = vrot.lane.b32.xlu0 %v3113, 32
    %v3115 = vpop.permute.xlu0 %3114
    %vm3117 = vcmask 521475
    %3118 = vst.msk [vmem:[#allocation7] sm:$0x38] %vm3117, %v3115
    %v3119 = vld [vmem:[#allocation4 + $0x7] sm:$0x7]
    %v3121 = vrot.slane %v3119, 5
    %3122 = vrot.lane.b32.xlu0 %v3121, 64
    %v3123 = vpop.permute.xlu0 %3122
    %vm3125 = vcmask 783875
    %3126 = vst.msk [vmem:[#allocation7] sm:$0x38] %vm3125, %v3123
    %v3127 = vld [vmem:[#allocation4 + $0xa] sm:$0x7]
    %v3129 = vrot.slane %v3127, 5
    %3130 = vrot.lane.b32.xlu0 %v3129, 96
    %v3131 = vpop.permute.xlu0 %3130
    %vm3133 = vcmask 1046275
    %3134 = vst.msk [vmem:[#allocation7] sm:$0x38] %vm3133, %v3131
    %v3135 = vld [vmem:[#allocation4 + $0xb] sm:$0x7]
    %v3137 = vrot.slane %v3135, 5
    %3139 = vst.msk [vmem:[#allocation7 + $0x8] sm:$0x38] %vm3109, %v3137
    %v3140 = vld [vmem:[#allocation4 + $0xc] sm:$0x7]
    %v3142 = vrot.slane %v3140, 5
    %3143 = vrot.lane.b32.xlu0 %v3142, 32
    %v3144 = vpop.permute.xlu0 %3143
    %3146 = vst.msk [vmem:[#allocation7 + $0x8] sm:$0x38] %vm3117, %v3144
    %v3147 = vld [vmem:[#allocation4 + $0xf] sm:$0x7]
    %v3149 = vrot.slane %v3147, 5
    %3150 = vrot.lane.b32.xlu0 %v3149, 64
    %v3151 = vpop.permute.xlu0 %3150
    %3153 = vst.msk [vmem:[#allocation7 + $0x8] sm:$0x38] %vm3125, %v3151
    %v3154 = vld [vmem:[#allocation4 + $0x10] sm:$0x7]
    %v3156 = vrot.slane %v3154, 5
    %3157 = vrot.lane.b32.xlu0 %v3156, 96
    %v3158 = vpop.permute.xlu0 %3157
    %3160 = vst.msk [vmem:[#allocation7 + $0x8] sm:$0x38] %vm3133, %v3158
    %v3161 = vld [vmem:[#allocation4 + $0x11] sm:$0x7]
    %v3163 = vrot.slane %v3161, 5
    %3165 = vst.msk [vmem:[#allocation7 + $0x10] sm:$0x38] %vm3109, %v3163
    %v3166 = vld [vmem:[#allocation4 + $0xa] sm:$0x7]
    %v3168 = vrot.slane %v3166, 2
    %vm3170 = vcmask 261126
    %3171 = vst.msk [vmem:[#allocation7] sm:$0xc0] %vm3170, %v3168
    %3172 = vst.msk [vmem:[#allocation7 + $0x18] sm:$0x1] %vm153, %v3168
    %v3173 = vld [vmem:[#allocation4 + $0xb] sm:$0x7]
    %v3175 = vrot.slane %v3173, 2
    %3176 = vrot.lane.b32.xlu0 %v3175, 32
    %v3177 = vpop.permute.xlu0 %3176
    %vm3179 = vcmask 523526
    %3180 = vst.msk [vmem:[#allocation7] sm:$0xc0] %vm3179, %v3177
    %3181 = vst.msk [vmem:[#allocation7 + $0x18] sm:$0x1] %vm167, %v3177
    %v3182 = vld [vmem:[#allocation4 + $0xc] sm:$0x7]
    %v3184 = vrot.slane %v3182, 2
    %3185 = vrot.lane.b32.xlu0 %v3184, 64
    %v3186 = vpop.permute.xlu0 %3185
    %vm3188 = vcmask 785926
    %3189 = vst.msk [vmem:[#allocation7] sm:$0xc0] %vm3188, %v3186
    %3190 = vst.msk [vmem:[#allocation7 + $0x18] sm:$0x1] %vm181, %v3186
    %v3191 = vld [vmem:[#allocation4 + $0xf] sm:$0x7]
    %v3193 = vrot.slane %v3191, 2
    %3194 = vrot.lane.b32.xlu0 %v3193, 96
    %v3195 = vpop.permute.xlu0 %3194
    %vm3197 = vcmask 1048326
    %3198 = vst.msk [vmem:[#allocation7] sm:$0xc0] %vm3197, %v3195
    %3199 = vst.msk [vmem:[#allocation7 + $0x18] sm:$0x1] %vm195, %v3195
    %v3200 = vld [vmem:[#allocation4 + $0x10] sm:$0x7]
    %v3202 = vrot.slane %v3200, 2
    %3204 = vst.msk [vmem:[#allocation7 + $0x8] sm:$0xc0] %vm3170, %v3202
    %3205 = vst.msk [vmem:[#allocation7 + $0x20] sm:$0x1] %vm153, %v3202
    %v3206 = vld [vmem:[#allocation4 + $0x11] sm:$0x7]
    %v3208 = vrot.slane %v3206, 2
    %3209 = vrot.lane.b32.xlu0 %v3208, 32
    %v3210 = vpop.permute.xlu0 %3209
    %3212 = vst.msk [vmem:[#allocation7 + $0x8] sm:$0xc0] %vm3179, %v3210
    %3213 = vst.msk [vmem:[#allocation7 + $0x20] sm:$0x1] %vm167, %v3210
    %v3214 = vld [vmem:[#allocation4 + $0x14] sm:$0x7]
    %v3216 = vrot.slane %v3214, 2
    %3217 = vrot.lane.b32.xlu0 %v3216, 64
    %v3218 = vpop.permute.xlu0 %3217
    %3220 = vst.msk [vmem:[#allocation7 + $0x8] sm:$0xc0] %vm3188, %v3218
    %3221 = vst.msk [vmem:[#allocation7 + $0x20] sm:$0x1] %vm181, %v3218
    %v3222 = vld [vmem:[#allocation4 + $0x15] sm:$0x7]
    %v3224 = vrot.slane %v3222, 2
    %3225 = vrot.lane.b32.xlu0 %v3224, 96
    %v3226 = vpop.permute.xlu0 %3225
    %3228 = vst.msk [vmem:[#allocation7 + $0x8] sm:$0xc0] %vm3197, %v3226
    %3229 = vst.msk [vmem:[#allocation7 + $0x20] sm:$0x1] %vm195, %v3226
    %v3230 = vld [vmem:[#allocation4 + $0x16] sm:$0x7]
    %v3232 = vrot.slane %v3230, 2
    %3234 = vst.msk [vmem:[#allocation7 + $0x10] sm:$0xc0] %vm3170, %v3232
    %3235 = vst.msk [vmem:[#allocation7 + $0x28] sm:$0x1] %vm153, %v3232
    %v3236 = vld [vmem:[#allocation4 + $0x19] sm:$0x7]
    %v3238 = vrot.slane %v3236, 7
    %vm3240 = vcmask 257025
    %3241 = vst.msk [vmem:[#allocation7 + $0x18] sm:$0xe] %vm3240, %v3238
    %v3242 = vld [vmem:[#allocation4 + $0x1a] sm:$0x7]
    %v3244 = vrot.slane %v3242, 7
    %3245 = vrot.lane.b32.xlu0 %v3244, 32
    %v3246 = vpop.permute.xlu0 %3245
    %vm3248 = vcmask 519425
    %3249 = vst.msk [vmem:[#allocation7 + $0x18] sm:$0xe] %vm3248, %v3246
    %v3250 = vld [vmem:[#allocation4 + $0x1b] sm:$0x7]
    %v3252 = vrot.slane %v3250, 7
    %3253 = vrot.lane.b32.xlu0 %v3252, 64
    %v3254 = vpop.permute.xlu0 %3253
    %vm3256 = vcmask 781825
    %3257 = vst.msk [vmem:[#allocation7 + $0x18] sm:$0xe] %vm3256, %v3254
    %v3258 = vld [vmem:[#allocation4 + $0x1e] sm:$0x7]
    %v3260 = vrot.slane %v3258, 7
    %3261 = vrot.lane.b32.xlu0 %v3260, 96
    %v3262 = vpop.permute.xlu0 %3261
    %vm3264 = vcmask 1044225
    %3265 = vst.msk [vmem:[#allocation7 + $0x18] sm:$0xe] %vm3264, %v3262
    %v3266 = vld [vmem:[#allocation4 + $0x1f] sm:$0x7]
    %v3268 = vrot.slane %v3266, 7
    %3270 = vst.msk [vmem:[#allocation7 + $0x20] sm:$0xe] %vm3240, %v3268
    %v3271 = vld [vmem:[#allocation4 + $0x20] sm:$0x7]
    %v3273 = vrot.slane %v3271, 7
    %3274 = vrot.lane.b32.xlu0 %v3273, 32
    %v3275 = vpop.permute.xlu0 %3274
    %3277 = vst.msk [vmem:[#allocation7 + $0x20] sm:$0xe] %vm3248, %v3275
    %v3278 = vld [vmem:[#allocation4 + $0x23] sm:$0x7]
    %v3280 = vrot.slane %v3278, 7
    %3281 = vrot.lane.b32.xlu0 %v3280, 64
    %v3282 = vpop.permute.xlu0 %3281
    %3284 = vst.msk [vmem:[#allocation7 + $0x20] sm:$0xe] %vm3256, %v3282
    %v3285 = vld [vmem:[#allocation4 + $0x24] sm:$0x7]
    %v3287 = vrot.slane %v3285, 7
    %3288 = vrot.lane.b32.xlu0 %v3287, 96
    %v3289 = vpop.permute.xlu0 %3288
    %3291 = vst.msk [vmem:[#allocation7 + $0x20] sm:$0xe] %vm3264, %v3289
    %v3292 = vld [vmem:[#allocation4 + $0x25] sm:$0x7]
    %v3294 = vrot.slane %v3292, 7
    %3296 = vst.msk [vmem:[#allocation7 + $0x28] sm:$0xe] %vm3240, %v3294
    %v3297 = vld [vmem:[#allocation4 + $0x1e] sm:$0x7]
    %v3299 = vrot.slane %v3297, 4
    %vm3301 = vcmask 260100
    %3302 = vst.msk [vmem:[#allocation7 + $0x18] sm:$0x70] %vm3301, %v3299
    %v3303 = vld [vmem:[#allocation4 + $0x1f] sm:$0x7]
    %v3305 = vrot.slane %v3303, 4
    %3306 = vrot.lane.b32.xlu0 %v3305, 32
    %v3307 = vpop.permute.xlu0 %3306
    %vm3309 = vcmask 522500
    %3310 = vst.msk [vmem:[#allocation7 + $0x18] sm:$0x70] %vm3309, %v3307
    %v3311 = vld [vmem:[#allocation4 + $0x20] sm:$0x7]
    %v3313 = vrot.slane %v3311, 4
    %3314 = vrot.lane.b32.xlu0 %v3313, 64
    %v3315 = vpop.permute.xlu0 %3314
    %vm3317 = vcmask 784900
    %3318 = vst.msk [vmem:[#allocation7 + $0x18] sm:$0x70] %vm3317, %v3315
    %v3319 = vld [vmem:[#allocation4 + $0x23] sm:$0x7]
    %v3321 = vrot.slane %v3319, 4
    %3322 = vrot.lane.b32.xlu0 %v3321, 96
    %v3323 = vpop.permute.xlu0 %3322
    %vm3325 = vcmask 1047300
    %3326 = vst.msk [vmem:[#allocation7 + $0x18] sm:$0x70] %vm3325, %v3323
    %v3327 = vld [vmem:[#allocation4 + $0x24] sm:$0x7]
    %v3329 = vrot.slane %v3327, 4
    %3331 = vst.msk [vmem:[#allocation7 + $0x20] sm:$0x70] %vm3301, %v3329
    %v3332 = vld [vmem:[#allocation4 + $0x25] sm:$0x7]
    %v3334 = vrot.slane %v3332, 4
    %3335 = vrot.lane.b32.xlu0 %v3334, 32
    %v3336 = vpop.permute.xlu0 %3335
    %3338 = vst.msk [vmem:[#allocation7 + $0x20] sm:$0x70] %vm3309, %v3336
    %v3339 = vld [vmem:[#allocation4 + $0x28] sm:$0x7]
    %v3341 = vrot.slane %v3339, 4
    %3342 = vrot.lane.b32.xlu0 %v3341, 64
    %v3343 = vpop.permute.xlu0 %3342
    %3345 = vst.msk [vmem:[#allocation7 + $0x20] sm:$0x70] %vm3317, %v3343
    %v3346 = vld [vmem:[#allocation4 + $0x29] sm:$0x7]
    %v3348 = vrot.slane %v3346, 4
    %3349 = vrot.lane.b32.xlu0 %v3348, 96
    %v3350 = vpop.permute.xlu0 %3349
    %3352 = vst.msk [vmem:[#allocation7 + $0x20] sm:$0x70] %vm3325, %v3350
    %v3353 = vld [vmem:[#allocation4 + $0x2a] sm:$0x7]
    %v3355 = vrot.slane %v3353, 4
    %3357 = vst.msk [vmem:[#allocation7 + $0x28] sm:$0x70] %vm3301, %v3355
    %v3358 = vld [vmem:[#allocation4 + $0x23] sm:$0x7]
    %v3360 = vrot.slane %v3358, 1
    %vm3362 = vcmask 261127
    %3363 = vst.msk [vmem:[#allocation7 + $0x18] sm:$0x80] %vm3362, %v3360
    %vm3364 = vcmask 254976
    %3365 = vst.msk [vmem:[#allocation7 + $0x30] sm:$0x3] %vm3364, %v3360
    %v3366 = vld [vmem:[#allocation4 + $0x24] sm:$0x7]
    %v3368 = vrot.slane %v3366, 1
    %3369 = vrot.lane.b32.xlu0 %v3368, 32
    %v3370 = vpop.permute.xlu0 %3369
    %vm3372 = vcmask 523527
    %3373 = vst.msk [vmem:[#allocation7 + $0x18] sm:$0x80] %vm3372, %v3370
    %vm3374 = vcmask 517376
    %3375 = vst.msk [vmem:[#allocation7 + $0x30] sm:$0x3] %vm3374, %v3370
    %v3376 = vld [vmem:[#allocation4 + $0x25] sm:$0x7]
    %v3378 = vrot.slane %v3376, 1
    %3379 = vrot.lane.b32.xlu0 %v3378, 64
    %v3380 = vpop.permute.xlu0 %3379
    %vm3382 = vcmask 785927
    %3383 = vst.msk [vmem:[#allocation7 + $0x18] sm:$0x80] %vm3382, %v3380
    %vm3384 = vcmask 779776
    %3385 = vst.msk [vmem:[#allocation7 + $0x30] sm:$0x3] %vm3384, %v3380
    %v3386 = vld [vmem:[#allocation4 + $0x28] sm:$0x7]
    %v3388 = vrot.slane %v3386, 1
    %3389 = vrot.lane.b32.xlu0 %v3388, 96
    %v3390 = vpop.permute.xlu0 %3389
    %vm3392 = vcmask 1048327
    %3393 = vst.msk [vmem:[#allocation7 + $0x18] sm:$0x80] %vm3392, %v3390
    %vm3394 = vcmask 1042176
    %3395 = vst.msk [vmem:[#allocation7 + $0x30] sm:$0x3] %vm3394, %v3390
    %v3396 = vld [vmem:[#allocation4 + $0x29] sm:$0x7]
    %v3398 = vrot.slane %v3396, 1
    %3400 = vst.msk [vmem:[#allocation7 + $0x20] sm:$0x80] %vm3362, %v3398
    %3401 = vst.msk [vmem:[#allocation7 + $0x38] sm:$0x3] %vm3364, %v3398
    %v3402 = vld [vmem:[#allocation4 + $0x2a] sm:$0x7]
    %v3404 = vrot.slane %v3402, 1
    %3405 = vrot.lane.b32.xlu0 %v3404, 32
    %v3406 = vpop.permute.xlu0 %3405
    %3408 = vst.msk [vmem:[#allocation7 + $0x20] sm:$0x80] %vm3372, %v3406
    %3409 = vst.msk [vmem:[#allocation7 + $0x38] sm:$0x3] %vm3374, %v3406
    %v3410 = vld [vmem:[#allocation4 + $0x2d] sm:$0x7]
    %v3412 = vrot.slane %v3410, 1
    %3413 = vrot.lane.b32.xlu0 %v3412, 64
    %v3414 = vpop.permute.xlu0 %3413
    %3416 = vst.msk [vmem:[#allocation7 + $0x20] sm:$0x80] %vm3382, %v3414
    %3417 = vst.msk [vmem:[#allocation7 + $0x38] sm:$0x3] %vm3384, %v3414
    %v3418 = vld [vmem:[#allocation4 + $0x2e] sm:$0x7]
    %v3420 = vrot.slane %v3418, 1
    %3421 = vrot.lane.b32.xlu0 %v3420, 96
    %v3422 = vpop.permute.xlu0 %3421
    %3424 = vst.msk [vmem:[#allocation7 + $0x20] sm:$0x80] %vm3392, %v3422
    %3425 = vst.msk [vmem:[#allocation7 + $0x38] sm:$0x3] %vm3394, %v3422
    %v3426 = vld [vmem:[#allocation4 + $0x2f] sm:$0x7]
    %v3428 = vrot.slane %v3426, 1
    %3430 = vst.msk [vmem:[#allocation7 + $0x28] sm:$0x80] %vm3362, %v3428
    %3431 = vst.msk [vmem:[#allocation7 + $0x40] sm:$0x3] %vm3364, %v3428
    %v3432 = vld [vmem:[#allocation7] sm:$0xff]
    %v3433 = vld [vmem:[#allocation7 + $0x8] sm:$0xff]
    %v3434 = vld [vmem:[#allocation7 + $0x10] sm:$0xff]
    %v3435 = vld [vmem:[#allocation7 + $0x18] sm:$0xff]
    %v3436 = vld [vmem:[#allocation7 + $0x20] sm:$0xff]
    %v3437 = vld [vmem:[#allocation7 + $0x28] sm:$0xff]
    %v3438 = vld [vmem:[#allocation7 + $0x30] sm:$0x3]
    %v3439 = vld [vmem:[#allocation7 + $0x38] sm:$0x3]
    %v3440 = vld [vmem:[#allocation7 + $0x40] sm:$0x3]
    %v3441 = vpack.c.bf16 %v3435, %v3432
    %v3442 = vpack.c.bf16 %v3436, %v3433
    %v3443 = vpack.c.bf16 %v3437, %v3434
    %v3444 = vpack.c.bf16 %v3438, %v3438
    %v3445 = vpack.c.bf16 %v3439, %v3439
    %v3446 = vpack.c.bf16 %v3440, %v3440
    %v3447 = vld [vmem:[#allocation8 + $0x4c0] sm:$0xf]
    %v3448 = vld [vmem:[#allocation8 + $0x4c4] sm:$0xf]
    %v3449 = vld [vmem:[#allocation8 + $0x4c8] sm:$0xf]
    %v3450 = vld [vmem:[#allocation8 + $0x4cc] sm:$0xf]
    %v3451 = vld [vmem:[#allocation8 + $0x4d0] sm:$0xf]
    %v3452 = vld [vmem:[#allocation8 + $0x4d4] sm:$0xf]
    %v3453 = vld [vmem:[#allocation8 + $0x4d8] sm:$0xf]
    %v3454 = vld [vmem:[#allocation8 + $0x4dc] sm:$0xf]
    %v3455 = vld [vmem:[#allocation8 + $0x4e0] sm:$0xf]
    %v3456 = vld [vmem:[#allocation8 + $0x4e4] sm:$0xf]
    %v3457 = vld [vmem:[#allocation8 + $0x4e8] sm:$0xf]
    %v3458 = vld [vmem:[#allocation8 + $0x4ec] sm:$0xf]
    %v3459 = vld [vmem:[#allocation8 + $0x4f0] sm:$0xf]
    %v3460 = vld [vmem:[#allocation8 + $0x4f4] sm:$0xf]
    %v3461 = vld [vmem:[#allocation8 + $0x4f8] sm:$0xf]
    %v3462 = vld [vmem:[#allocation8 + $0x4fc] sm:$0xf]
    %v3463 = vld [vmem:[#allocation8 + $0x500] sm:$0xf]
    %v3464 = vld [vmem:[#allocation8 + $0x504] sm:$0xf]
    %v3465 = vld [vmem:[#allocation8 + $0x508] sm:$0xf]
    %v3466 = vld [vmem:[#allocation8 + $0x50c] sm:$0xf]
    %v3467 = vld [vmem:[#allocation8 + $0x510] sm:$0xf]
    %v3468 = vld [vmem:[#allocation8 + $0x514] sm:$0xf]
    %v3469 = vld [vmem:[#allocation8 + $0x518] sm:$0xf]
    %v3470 = vld [vmem:[#allocation8 + $0x51c] sm:$0xf]
    %v3471 = vld [vmem:[#allocation8 + $0x520] sm:$0xf]
    %v3472 = vld [vmem:[#allocation8 + $0x524] sm:$0xf]
    %v3473 = vld [vmem:[#allocation8 + $0x528] sm:$0xf]
    %v3474 = vld [vmem:[#allocation8 + $0x52c] sm:$0xf]
    %v3475 = vld [vmem:[#allocation8 + $0x530] sm:$0xf]
    %v3476 = vld [vmem:[#allocation8 + $0x534] sm:$0xf]
    %v3477 = vld [vmem:[#allocation8 + $0x538] sm:$0xf]
    %v3478 = vld [vmem:[#allocation8 + $0x53c] sm:$0xf]
    %v3479 = vld [vmem:[#allocation8 + $0x540] sm:$0xf]
    %v3480 = vld [vmem:[#allocation8 + $0x544] sm:$0xf]
    %v3481 = vld [vmem:[#allocation8 + $0x548] sm:$0xf]
    %v3482 = vld [vmem:[#allocation8 + $0x54c] sm:$0xf]
    %v3483 = vld [vmem:[#allocation8 + $0x550] sm:$0xf]
    %v3484 = vld [vmem:[#allocation8 + $0x554] sm:$0xf]
    %v3485 = vld [vmem:[#allocation8 + $0x558] sm:$0xf]
    %v3486 = vld [vmem:[#allocation8 + $0x55c] sm:$0xf]
    %v3487 = vld [vmem:[#allocation8 + $0x560] sm:$0xf]
    %v3488 = vld [vmem:[#allocation8 + $0x564] sm:$0xf]
    %v3489 = vld [vmem:[#allocation8 + $0x568] sm:$0xf]
    %v3490 = vld [vmem:[#allocation8 + $0x56c] sm:$0xf]
    %v3491 = vld [vmem:[#allocation8 + $0x570] sm:$0xf]
    %v3492 = vld [vmem:[#allocation8 + $0x574] sm:$0xf]
    %v3493 = vld [vmem:[#allocation8 + $0x578] sm:$0xf]
    %v3494 = vld [vmem:[#allocation8 + $0x57c] sm:$0xf]
    %v3495 = vld [vmem:[%s3 + $0x7] sm:$0x1]
    %v3496 = vlaneseq
    %v3497 = vshrl.u32 %v3496, 7
    %v3498 = vsub.s32 0, %v3497
    %v3499 = vrot.slane %v3495, %v3498
    %v3548 = vunpack.c.l.b16 %v3447
    %v3549 = vunpack.c.l.b16 %v3448
    %v3550 = vunpack.c.l.b16 %v3449
    %v3551 = vunpack.c.l.b16 %v3450
    %v3552 = vunpack.c.l.b16 %v3451
    %v3553 = vunpack.c.l.b16 %v3452
    %v3554 = vunpack.c.l.b16 %v3453
    %v3555 = vunpack.c.l.b16 %v3454
    %v3556 = vunpack.c.l.b16 %v3455
    %v3557 = vunpack.c.l.b16 %v3456
    %v3558 = vunpack.c.l.b16 %v3457
    %v3559 = vunpack.c.l.b16 %v3458
    %v3560 = vunpack.c.l.b16 %v3459
    %v3561 = vunpack.c.l.b16 %v3460
    %v3562 = vunpack.c.l.b16 %v3461
    %v3563 = vunpack.c.l.b16 %v3462
    %v3564 = vunpack.c.l.b16 %v3463
    %v3565 = vunpack.c.l.b16 %v3464
    %v3566 = vunpack.c.l.b16 %v3465
    %v3567 = vunpack.c.l.b16 %v3466
    %v3568 = vunpack.c.l.b16 %v3467
    %v3569 = vunpack.c.l.b16 %v3468
    %v3570 = vunpack.c.l.b16 %v3469
    %v3571 = vunpack.c.l.b16 %v3470
    %v3572 = vunpack.c.l.b16 %v3471
    %v3573 = vunpack.c.l.b16 %v3472
    %v3574 = vunpack.c.l.b16 %v3473
    %v3575 = vunpack.c.l.b16 %v3474
    %v3576 = vunpack.c.l.b16 %v3475
    %v3577 = vunpack.c.l.b16 %v3476
    %v3578 = vunpack.c.l.b16 %v3477
    %v3579 = vunpack.c.l.b16 %v3478
    %v3580 = vunpack.c.l.b16 %v3479
    %v3581 = vunpack.c.l.b16 %v3480
    %v3582 = vunpack.c.l.b16 %v3481
    %v3583 = vunpack.c.l.b16 %v3482
    %v3584 = vunpack.c.l.b16 %v3483
    %v3585 = vunpack.c.l.b16 %v3484
    %v3586 = vunpack.c.l.b16 %v3485
    %v3587 = vunpack.c.l.b16 %v3486
    %v3588 = vunpack.c.l.b16 %v3487
    %v3589 = vunpack.c.l.b16 %v3488
    %v3590 = vunpack.c.l.b16 %v3489
    %v3591 = vunpack.c.l.b16 %v3490
    %v3592 = vunpack.c.l.b16 %v3491
    %v3593 = vunpack.c.l.b16 %v3492
    %v3594 = vunpack.c.l.b16 %v3493
    %v3595 = vunpack.c.l.b16 %v3494
    %v3596 = vpack.c.b16 %v3549, %v3548
    %v3597 = vpack.c.b16 %v3551, %v3550
    %v3598 = vpack.c.b16 %v3553, %v3552
    %v3599 = vpack.c.b16 %v3555, %v3554
    %v3600 = vpack.c.b16 %v3557, %v3556
    %v3601 = vpack.c.b16 %v3559, %v3558
    %v3602 = vpack.c.b16 %v3561, %v3560
    %v3603 = vpack.c.b16 %v3563, %v3562
    %v3604 = vpack.c.b16 %v3565, %v3564
    %v3605 = vpack.c.b16 %v3567, %v3566
    %v3606 = vpack.c.b16 %v3569, %v3568
    %v3607 = vpack.c.b16 %v3571, %v3570
    %v3608 = vpack.c.b16 %v3573, %v3572
    %v3609 = vpack.c.b16 %v3575, %v3574
    %v3610 = vpack.c.b16 %v3577, %v3576
    %v3611 = vpack.c.b16 %v3579, %v3578
    %v3612 = vpack.c.b16 %v3581, %v3580
    %v3613 = vpack.c.b16 %v3583, %v3582
    %v3614 = vpack.c.b16 %v3585, %v3584
    %v3615 = vpack.c.b16 %v3587, %v3586
    %v3616 = vpack.c.b16 %v3589, %v3588
    %v3617 = vpack.c.b16 %v3591, %v3590
    %v3618 = vpack.c.b16 %v3593, %v3592
    %v3619 = vpack.c.b16 %v3595, %v3594
    %3644 = vmatprep.subr.bf16.mxu0 0
    %3645 = vmatpush1.bf16.msra.mxu0 %v3596
    %3646 = vmatprep.subr.bf16.mxu0 0
    %3647 = vmatpush1.bf16.msra.mxu0 %v3597
    %3648 = vmatprep.subr.bf16.mxu0 0
    %3649 = vmatpush1.bf16.msra.mxu0 %v3598
    %3650 = vmatprep.subr.bf16.mxu0 0
    %3651 = vmatpush1.bf16.msra.mxu0 %v3599
    %3652 = vmatprep.subr.bf16.mxu0 0
    %3653 = vmatpush1.bf16.msra.mxu0 %v3600
    %3654 = vmatprep.subr.bf16.mxu0 0
    %3655 = vmatpush1.bf16.msra.mxu0 %v3601
    %3656 = vmatprep.subr.bf16.mxu0 0
    %3657 = vmatpush1.bf16.msra.mxu0 %v3602
    %3658 = vmatprep.subr.bf16.mxu0 0
    %3659 = vmatpush1.bf16.msra.mxu0 %v3603
    %3660 = vmatprep.subr.bf16.mxu0 0
    %3661 = vmatpush1.bf16.msra.mxu0 %v3604
    %3662 = vmatprep.subr.bf16.mxu0 0
    %3663 = vmatpush1.bf16.msra.mxu0 %v3605
    %3664 = vmatprep.subr.bf16.mxu0 0
    %3665 = vmatpush1.bf16.msra.mxu0 %v3606
    %3666 = vmatprep.subr.bf16.mxu0 0
    %3667 = vmatpush1.bf16.msra.mxu0 %v3607
    %3668 = vmatprep.subr.bf16.mxu0 0
    %3669 = vmatpush1.bf16.msra.mxu0 %v3608
    %3670 = vmatprep.subr.bf16.mxu0 0
    %3671 = vmatpush1.bf16.msra.mxu0 %v3609
    %3672 = vmatprep.subr.bf16.mxu0 0
    %3673 = vmatpush1.bf16.msra.mxu0 %v3610
    %3674 = vmatprep.subr.bf16.mxu0 0
    %3675 = vmatpush1.bf16.msra.mxu0 %v3611
    %3676 = vmatprep.mubr.bf16.mxu0 %v3442
    %3677 = vmatmul.mubr.bf16.gmra.mrb[0].mxu0 %v3441
    %v3678 = vpop.f32.mrb[0].mxu0
    %v3679 = vadd.f32 %v3499, %v3678
    %v3680 = vpop.f32.mrb[0].mxu0
    %v3681 = vpop.f32.mrb[0].mxu0
    %v3682 = vadd.f32 %v3499, %v3681
    %v3683 = vpop.f32.mrb[0].mxu0
    %3684 = vmatprep.mubr.bf16.mxu0 %v3445
    %3685 = vmatmul.mubr.bf16.gmra.mrb[0].mxu0 %v3444
    %v3686 = vpop.f32.mrb[0].mxu0
    %v3687 = vadd.f32 %v3499, %v3686
    %v3688 = vpop.f32.mrb[0].mxu0
    %v3689 = vpop.f32.mrb[0].mxu0
    %v3690 = vpop.f32.mrb[0].mxu0
    %3691 = vdwg.mxu0
    %3692 = vmatprep.subr.bf16.mxu0 0
    %3693 = vmatpush1.bf16.msra.mxu0 %v3612
    %3694 = vmatprep.subr.bf16.mxu0 0
    %3695 = vmatpush1.bf16.msra.mxu0 %v3613
    %3696 = vmatprep.subr.bf16.mxu0 0
    %3697 = vmatpush1.bf16.msra.mxu0 %v3614
    %3698 = vmatprep.subr.bf16.mxu0 0
    %3699 = vmatpush1.bf16.msra.mxu0 %v3615
    %3700 = vmatprep.subr.bf16.mxu0 0
    %3701 = vmatpush1.bf16.msra.mxu0 %v3616
    %3702 = vmatprep.subr.bf16.mxu0 0
    %3703 = vmatpush1.bf16.msra.mxu0 %v3617
    %3704 = vmatprep.subr.bf16.mxu0 0
    %3705 = vmatpush1.bf16.msra.mxu0 %v3618
    %3706 = vmatprep.subr.bf16.mxu0 0
    %3707 = vmatpush1.bf16.msra.mxu0 %v3619
    %3708 = vmatprep.subr.bf16.mxu0 0
    %3709 = vmatpush1.bf16.msra.mxu0 0
    %3710 = vmatprep.subr.bf16.mxu0 0
    %3711 = vmatpush1.bf16.msra.mxu0 0
    %3712 = vmatprep.subr.bf16.mxu0 0
    %3713 = vmatpush1.bf16.msra.mxu0 0
    %3714 = vmatprep.subr.bf16.mxu0 0
    %3715 = vmatpush1.bf16.msra.mxu0 0
    %3716 = vmatprep.subr.bf16.mxu0 0
    %3717 = vmatpush1.bf16.msra.mxu0 0
    %3718 = vmatprep.subr.bf16.mxu0 0
    %3719 = vmatpush1.bf16.msra.mxu0 0
    %3720 = vmatprep.subr.bf16.mxu0 0
    %3721 = vmatpush1.bf16.msra.mxu0 0
    %3722 = vmatprep.subr.bf16.mxu0 0
    %3723 = vmatpush1.bf16.msra.mxu0 0
    %3724 = vmatprep.mubr.bf16.mxu0 0
    %3725 = vmatmul.mubr.bf16.gmra.mrb[0].mxu0 %v3443
    %v3726 = vpop.f32.mrb[0].mxu0
    %v3727 = vadd.f32 %v3679, %v3726
    %v3728 = vpop.f32.mrb[0].mxu0
    %v3729 = vpop.f32.mrb[0].mxu0
    %v3730 = vadd.f32 %v3682, %v3729
    %v3731 = vpop.f32.mrb[0].mxu0
    %3732 = vmatprep.mubr.bf16.mxu0 0
    %3733 = vmatmul.mubr.bf16.gmra.mrb[0].mxu0 %v3446
    %v3734 = vpop.f32.mrb[0].mxu0
    %v3735 = vadd.f32 %v3687, %v3734
    %v3736 = vpop.f32.mrb[0].mxu0
    %v3737 = vpop.f32.mrb[0].mxu0
    %v3738 = vpop.f32.mrb[0].mxu0
    %3739 = vdwg.mxu0
    %3740 = vst [vmem:[%s4 + $0x4] sm:$0xff] %v3727
    %3741 = vst [vmem:[%s4 + $0xc] sm:$0xff] %v3730
    %3742 = vst [vmem:[%s4 + $0x14] sm:$0x3] %v3735
    // Predicated region
    $region22: #{vae_forward.1} parent=1 // pred_check
      _
    $region23: #{vae_forward.1} parent=1 // pred_check_branch
      %3744 = sbr.rel (0) target = $region25
    $region24: #{vae_forward.1} parent=1 // pred_region
      _
    $region25: #{vae_forward.1} parent=1 // pred_fallthru
      _
    // Predicated region
    $region26: #{vae_forward.1} parent=1 // pred_check
      _
    $region27: #{vae_forward.1} parent=1 // pred_check_branch
      %3746 = sbr.rel (0) target = $region29
    $region28: #{vae_forward.1} parent=1 // pred_region
      _
    $region29: #{vae_forward.1} parent=1 // pred_fallthru
      _
    %3747 = vsyncpa [#allocation9], 1

</llo_original>
